<compile_context>
chip_gen: v6e
topology: v6e:2x2x1
jax: 0.10.0
libtpu: 0.0.40
codegen_flags: <defaults>
</compile_context>

<pallas_src>
import jax
import jax.numpy as jnp
from jax.experimental import pallas as pl
from jax.experimental.pallas import tpu as pltpu

# ----- value-dimension constants (from _initialize_value_dimensions) -----
DIM_NAMES = ("helpfulness", "honesty", "harmlessness", "creativity",
             "empathy", "wisdom", "authenticity")
DIM_WEIGHTS = (1.0, 1.2, 1.5, 0.8, 1.0, 1.1, 1.3)
DIM_TARGETS = (0.9, 0.95, 0.98, 0.7, 0.8, 0.75, 0.9)
N_DIMS = len(DIM_NAMES)        # 7
HEAD_HID = 128                 # value-head hidden size (nn.Linear(model_dim, 128))
PACK = 128                     # lane-dense packing width
OVERALL_LANE = N_DIMS          # lane 7 carries sigmoid(reward[:, 0])
REWARD_H1 = 512
REWARD_H2 = 256
FUSED_H1 = REWARD_H1 + N_DIMS * HEAD_HID   # 512 + 896 = 1408


def _cdiv(a, b):
    return -(-a // b)


def _round_up(x, m):
    return _cdiv(x, m) * m


# --------------------------------------------------------------------------
# Kernel
# --------------------------------------------------------------------------
def _alignment_kernel(pooled_ref,                 # (TB, D)        bf16 (or f32)
                      wfirst_ref, bfirst_ref,     # (D, 1408) bf16, (1, 1408) f32
                      w2_ref, b2_ref,             # (512, 256) f32, (1, 256) f32
                      w3c_ref,                    # (256, 128) f32  (col 7 = w3[:, 0])
                      vh2bd_ref,                  # (896, 128) f32  block-diagonal heads
                      bcomb_ref,                  # (1, 128)   f32  (lanes 0..6 = head bias, lane 7 = b3[0])
                      out_ref):                   # (TB, 128)  f32  lanes 0..6 scores, lane 7 overall
    pooled = pooled_ref[...]

    # Fused first layers of the reward MLP and all 7 value heads (bf16 MXU, f32 acc).
    h_all = jnp.dot(pooled, wfirst_ref[...], preferred_element_type=jnp.float32)
    h_all = jnp.maximum(h_all + bfirst_ref[...], 0.0)          # f32 elementwise

    h1 = h_all[:, :REWARD_H1]        # reward-MLP hidden 1   (lane-aligned slice)
    hv = h_all[:, REWARD_H1:]        # 7 head hiddens, concatenated

    # Reward MLP hidden 2 (Dropout is identity in eval mode).
    h2 = jnp.maximum(
        jnp.dot(h1, w2_ref[...], preferred_element_type=jnp.float32) + b2_ref[...], 0.0)

    # Fused output stage: one 128-lane logit block, one bias add, one sigmoid.
    #   lanes 0..6 : value-head logits (block-diagonal second layer)
    #   lane  7    : reward output column 0
    logits = (jnp.dot(h2, w3c_ref[...], preferred_element_type=jnp.float32)
              + jnp.dot(hv, vh2bd_ref[...], preferred_element_type=jnp.float32)
              + bcomb_ref[...])
    out_ref[...] = jax.nn.sigmoid(logits)          # single lane-dense full-width store


# --------------------------------------------------------------------------
# One-time parameter preparation (hoisted out of the per-call path)
# --------------------------------------------------------------------------
def prepare_alignment_params(params, first_layer_dtype=jnp.bfloat16):
    """Fuse / pad the module parameters into the kernel's weight set (run once)."""
    w1, b1, w2, b2, w3, b3, vh1, vb1, vh2, vb2 = params

    # Fused first layer: [reward layer-0 | 7 head layer-0], D-wide matrix in bf16.
    wfirst = jnp.concatenate([w1, vh1], axis=1).astype(first_layer_dtype)   # (D, 1408)
    bfirst = jnp.concatenate([b1, vb1], axis=1).astype(jnp.float32)         # (1, 1408)

    # Reward output column 0 routed to lane 7 of the fused output block.
    w3c = jnp.zeros((w3.shape[0], PACK), jnp.float32).at[:, OVERALL_LANE].set(w3[:, 0])

    # Block-diagonal second layer of the 7 value heads (lanes 0..6).
    vh2bd = jnp.zeros((N_DIMS * HEAD_HID, PACK), jnp.float32)
    for i in range(N_DIMS):
        vh2bd = vh2bd.at[i * HEAD_HID:(i + 1) * HEAD_HID, i].set(vh2[i])

    bcomb = (jnp.zeros((1, PACK), jnp.float32)
             .at[0, :N_DIMS].set(vb2[0])
             .at[0, OVERALL_LANE].set(b3[0, 0]))

    return (wfirst, bfirst,
            w2.astype(jnp.float32), b2.astype(jnp.float32),
            w3c, vh2bd, bcomb)


# --------------------------------------------------------------------------
# Wrapper
# --------------------------------------------------------------------------
def predict_reward_pallas(embeddings, prepared):
    """embeddings: (B, S, D) or (B, D).  Returns dict mirroring predict_reward."""
    wfirst, bfirst, w2, b2, w3c, vh2bd, bcomb = prepared
    weights = (wfirst, bfirst, w2, b2, w3c, vh2bd, bcomb)
    compute_dtype = wfirst.dtype

    # Pooling in plain JAX (f32) -> kernel never sees the (B, S, D) tensor.
    if embeddings.ndim > 2:
        pooled = jnp.mean(embeddings.astype(jnp.float32), axis=1)
    else:
        pooled = embeddings.astype(jnp.float32)
    B, D = pooled.shape
    # Cast only the MXU input; all elementwise math inside the kernel stays f32.
    pooled = pooled.astype(compute_dtype)

    # ---- batch tiling: tiles up to 512 rows; keep >=2 grid steps once Bp >= 256
    #      so the "parallel" axis can shard across v7x's two TensorCores. ----
    Bp = _round_up(B, 8)
    n_steps = max(1, _cdiv(Bp, 512))
    if Bp >= 256:
        n_steps = max(n_steps, 2)
    TB = _round_up(_cdiv(Bp, n_steps), 8)
    Bp = TB * n_steps
    if Bp != B:
        pooled = jnp.pad(pooled, ((0, Bp - B), (0, 0)))

    out_specs = pl.BlockSpec((TB, PACK), lambda i: (i, 0))
    out_shape = jax.ShapeDtypeStruct((Bp, PACK), jnp.float32)

    # ---- cost estimate ----
    n_head = N_DIMS * HEAD_HID
    flops = 2 * Bp * (D * FUSED_H1 + REWARD_H1 * REWARD_H2
                      + REWARD_H2 * PACK + n_head * PACK)
    weight_bytes = sum(int(w.size) * w.dtype.itemsize for w in weights)
    bytes_accessed = (Bp * D * pooled.dtype.itemsize + Bp * PACK * 4 + weight_bytes)

    # ---- explicit VMEM budget: single-buffered weights + 2x I/O tiles + activations.
    # (Budget 2x weights so the non-Buffered fallback path still fits.)
    io_bytes = TB * D * pooled.dtype.itemsize + TB * PACK * 4
    act_bytes = TB * (FUSED_H1 + REWARD_H2 + PACK) * 4
    vmem_budget = int(2 * weight_bytes + 2 * io_bytes + 2 * act_bytes + (4 << 20))
    vmem_budget = max(vmem_budget, 32 << 20)
    # TODO(synk): for v7x at large D (>~2048), stream wfirst over an inner "arbitrary"
    # K-grid axis with a VMEM accumulator instead of raising this budget past 64 MiB.

    def _in_specs(single_buffer_weights):
        specs = [pl.BlockSpec((TB, D), lambda i: (i, 0))]
        for w in weights:
            if single_buffer_weights:
                # Constant block index -> double buffering wastes VMEM; request 1 buffer.
                specs.append(pl.BlockSpec(w.shape, lambda i: (0, 0),
                                          pipeline_mode=pl.Buffered(buffer_count=1)))
            else:
                specs.append(pl.BlockSpec(w.shape, lambda i: (0, 0)))
        return specs

    def _call(single_buffer_weights):
        return pl.pallas_call(
            _alignment_kernel,
            grid=(Bp // TB,),
            in_specs=_in_specs(single_buffer_weights),
            out_specs=out_specs,
            out_shape=out_shape,
            compiler_params=pltpu.CompilerParams(
                dimension_semantics=("parallel",),
                vmem_limit_bytes=vmem_budget),
            cost_estimate=pl.CostEstimate(flops=flops,
                                          transcendentals=Bp * PACK,
                                          bytes_accessed=bytes_accessed),
        )(pooled, *weights)

    try:
        packed = _call(True)
    except Exception:
        # Compatibility fallback if pipeline_mode=pl.Buffered(1) is rejected by this build.
        packed = _call(False)

    scores = packed[:B, :N_DIMS].astype(jnp.float32)              # (B, 7)
    overall = packed[:B, OVERALL_LANE].astype(jnp.float32)        # (B,)

    coeff = jnp.asarray(DIM_WEIGHTS, jnp.float32) * (0.7 / N_DIMS)
    weighted = overall * 0.3 + jnp.sum(scores * coeff[None, :], axis=-1)
    targets = jnp.asarray(DIM_TARGETS, jnp.float32)
    meets = (scores >= targets[None, :]).astype(jnp.float32)

    return {
        "overall_score": overall,
        "weighted_score": weighted,
        "dimension_scores": {name: scores[:, i] for i, name in enumerate(DIM_NAMES)},
        "meets_targets": {name: meets[:, i] for i, name in enumerate(DIM_NAMES)},
    }


def init_params(key, d_model):
    """Deterministic parameter init matching the module's layer shapes."""
    ks = jax.random.split(key, 12)

    def lin(k, fan_in, fan_out):
        kw, kb = jax.random.split(k)
        bound = 1.0 / jnp.sqrt(fan_in)
        w = jax.random.uniform(kw, (fan_in, fan_out), jnp.float32, -bound, bound)
        b = jax.random.uniform(kb, (1, fan_out), jnp.float32, -bound, bound)
        return w, b

    w1, b1 = lin(ks[0], d_model, REWARD_H1)        # reward_model[0]
    w2, b2 = lin(ks[1], REWARD_H1, REWARD_H2)      # reward_model[3]
    w3, b3 = lin(ks[2], REWARD_H2, N_DIMS + 1)     # reward_model[5] -> 8 outputs

    vh1_list, vb1_list, vh2_list, vb2_list = [], [], [], []
    for i in range(N_DIMS):
        wa, ba = lin(ks[3 + i], d_model, HEAD_HID)     # value head Linear(d_model, 128)
        kb2 = jax.random.fold_in(ks[3 + i], 7)
        bound2 = 1.0 / jnp.sqrt(HEAD_HID)
        wb = jax.random.uniform(kb2, (HEAD_HID,), jnp.float32, -bound2, bound2)
        bb = jax.random.uniform(jax.random.fold_in(kb2, 1), (), jnp.float32,
                                -bound2, bound2)
        vh1_list.append(wa)
        vb1_list.append(ba)
        vh2_list.append(wb)
        vb2_list.append(bb)
    vh1 = jnp.concatenate(vh1_list, axis=1)            # (D, 7*128)
    vb1 = jnp.concatenate(vb1_list, axis=1)            # (1, 7*128)
    vh2 = jnp.stack(vh2_list, axis=0)                  # (7, 128)
    vb2 = jnp.stack(vb2_list, axis=0)[None, :]         # (1, 7)

    return (w1, b1, w2, b2, w3, b3, vh1, vb1, vh2, vb2)


def value_alignment_forward(input_ids, emb_table, prepared_params):
    """Mirrors ValueAlignmentEngine.forward(..., use_alignment=True)."""
    # base_model stub: embedding lookup -> hidden_states[-1]  (glue, plain JAX)
    embeddings = emb_table[input_ids]                  # (B, S, D) float32
    reward_result = predict_reward_pallas(embeddings, prepared_params)
    meets = jnp.stack([reward_result["meets_targets"][n] for n in DIM_NAMES], axis=0)
    # TODO(synk): PyTorch's `all(tensor for ...)` is ill-defined for batch>1;
    # we reduce over batch and dimensions explicitly here.
    aligned = jnp.all(meets >= 1.0)
    return {
        "outputs": embeddings,
        "alignment_score": reward_result["weighted_score"],
        "value_scores": reward_result["dimension_scores"],
        "aligned": aligned,
    }


if __name__ == "__main__":
    B, S, D, VOCAB = 2, 8, 128, 64
    key = jax.random.PRNGKey(0)
    k_ids, k_emb, k_par = jax.random.split(key, 3)

    input_ids = jax.random.randint(k_ids, (B, S), 0, VOCAB)
    emb_table = jax.random.normal(k_emb, (VOCAB, D), jnp.float32) * 0.02
    params = init_params(k_par, D)

    # One-time parameter preparation (hoisted out of the forward path).
    prepared_bf16 = prepare_alignment_params(params, jnp.bfloat16)   # production path
    prepared_f32 = prepare_alignment_params(params, jnp.float32)     # exact-parity path

    result = value_alignment_forward(input_ids, emb_table, prepared_bf16)
    jax.block_until_ready(result["alignment_score"])
    jax.block_until_ready(result["aligned"])

    # ---- pure-JAX f32 reference of predict_reward ----
    emb = emb_table[input_ids]
    pooled = emb.mean(axis=1)
    w1, b1, w2, b2, w3, b3, vh1, vb1, vh2, vb2 = params
    h = jnp.maximum(pooled @ w1 + b1, 0.0)
    h = jnp.maximum(h @ w2 + b2, 0.0)
    r = h @ w3 + b3
    ref_overall = jax.nn.sigmoid(r[:, 0])
    ref_weighted = ref_overall * 0.3
    ref_scores = []
    for i in range(N_DIMS):
        hh = jnp.maximum(pooled @ vh1[:, i * 128:(i + 1) * 128]
                         + vb1[:, i * 128:(i + 1) * 128], 0.0)
        s = jax.nn.sigmoid(hh @ vh2[i] + vb2[0, i])
        ref_scores.append(s)
        ref_weighted = ref_weighted + s * (DIM_WEIGHTS[i] * 0.7 / N_DIMS)

    # Exact parity with f32 first-layer weights.
    result_f32 = value_alignment_forward(input_ids, emb_table, prepared_f32)
    jax.block_until_ready(result_f32["alignment_score"])
    assert jnp.allclose(result_f32["alignment_score"], ref_weighted, atol=1e-5)
    for i, name in enumerate(DIM_NAMES):
        assert jnp.allclose(result_f32["value_scores"][name], ref_scores[i], atol=1e-5)

    # bf16 first-layer (production) path: tolerance-gated, not exact parity.
    assert jnp.allclose(result["alignment_score"], ref_weighted, atol=2e-3)
    for i, name in enumerate(DIM_NAMES):
        assert jnp.allclose(result["value_scores"][name], ref_scores[i], atol=2e-3)

    print("KERNEL_OK")
</pallas_src>

<mosaic_0001>
module attributes {stable_mosaic.version = 11 : i64} {
  func.func @_alignment_kernel(%arg0: i32, %arg1: memref<8x128xbf16, #tpu.memory_space<vmem>>, %arg2: memref<128x1408xbf16, #tpu.memory_space<vmem>>, %arg3: memref<1x1408xf32, #tpu.memory_space<vmem>>, %arg4: memref<512x256xf32, #tpu.memory_space<vmem>>, %arg5: memref<1x256xf32, #tpu.memory_space<vmem>>, %arg6: memref<256x128xf32, #tpu.memory_space<vmem>>, %arg7: memref<896x128xf32, #tpu.memory_space<vmem>>, %arg8: memref<1x128xf32, #tpu.memory_space<vmem>>, %arg9: memref<8x128xf32, #tpu.memory_space<vmem>>) attributes {dimension_semantics = [#tpu.dimension_semantics<parallel>], iteration_bounds = array<i64: 1>, scalar_prefetch = 0 : i64, scratch_operands = 0 : i64, tpu.core_type = #tpu.core_type<tc>, window_params = [{transform_indices = @transform_0, window_bounds = array<i64: 8, 128>}, {pipeline_mode = #tpu.pipeline_mode<synchronous>, transform_indices = @transform_1, window_bounds = array<i64: 128, 1408>}, {pipeline_mode = #tpu.pipeline_mode<synchronous>, transform_indices = @transform_2, window_bounds = array<i64: 1, 1408>}, {pipeline_mode = #tpu.pipeline_mode<synchronous>, transform_indices = @transform_3, window_bounds = array<i64: 512, 256>}, {pipeline_mode = #tpu.pipeline_mode<synchronous>, transform_indices = @transform_4, window_bounds = array<i64: 1, 256>}, {pipeline_mode = #tpu.pipeline_mode<synchronous>, transform_indices = @transform_5, window_bounds = array<i64: 256, 128>}, {pipeline_mode = #tpu.pipeline_mode<synchronous>, transform_indices = @transform_6, window_bounds = array<i64: 896, 128>}, {pipeline_mode = #tpu.pipeline_mode<synchronous>, transform_indices = @transform_7, window_bounds = array<i64: 1, 128>}, {transform_indices = @transform_8, window_bounds = array<i64: 8, 128>}]} {
    %c0 = arith.constant 0 : index
    %c0_0 = arith.constant 0 : index
    %0 = vector.load %arg1[%c0, %c0_0] : memref<8x128xbf16, #tpu.memory_space<vmem>>, vector<8x128xbf16>
    %c0_1 = arith.constant 0 : index
    %c0_2 = arith.constant 0 : index
    %1 = vector.load %arg2[%c0_1, %c0_2] : memref<128x1408xbf16, #tpu.memory_space<vmem>>, vector<128x1408xbf16>
    %cst = arith.constant dense<0.000000e+00> : vector<8x1408xf32>
    %2 = tpu.matmul %0, %1, %cst {dimension_numbers = #tpu.dot_dimension_numbers<[1], [0], [0], [1], [0, 0, 1, 1], [], []>} : vector<8x128xbf16>, vector<128x1408xbf16>, vector<8x1408xf32> -> vector<8x1408xf32>
    %c0_3 = arith.constant 0 : index
    %c0_4 = arith.constant 0 : index
    %3 = vector.load %arg3[%c0_3, %c0_4] : memref<1x1408xf32, #tpu.memory_space<vmem>>, vector<1x1408xf32>
    %4 = vector.broadcast %3 : vector<1x1408xf32> to vector<8x1408xf32>
    %5 = arith.addf %2, %4 : vector<8x1408xf32>
    %cst_5 = arith.constant 0.000000e+00 : f32
    %6 = vector.broadcast %cst_5 : f32 to vector<8x1408xf32>
    %7 = arith.maximumf %5, %6 : vector<8x1408xf32>
    %8 = vector.extract_strided_slice %7 {offsets = [0, 0], sizes = [8, 512], strides = [1, 1]} : vector<8x1408xf32> to vector<8x512xf32>
    %9 = vector.extract_strided_slice %7 {offsets = [0, 512], sizes = [8, 896], strides = [1, 1]} : vector<8x1408xf32> to vector<8x896xf32>
    %c0_6 = arith.constant 0 : index
    %c0_7 = arith.constant 0 : index
    %10 = vector.load %arg4[%c0_6, %c0_7] : memref<512x256xf32, #tpu.memory_space<vmem>>, vector<512x256xf32>
    %cst_8 = arith.constant dense<0.000000e+00> : vector<8x256xf32>
    %11 = tpu.matmul %8, %10, %cst_8 {dimension_numbers = #tpu.dot_dimension_numbers<[1], [0], [0], [1], [0, 0, 1, 1], [], []>} : vector<8x512xf32>, vector<512x256xf32>, vector<8x256xf32> -> vector<8x256xf32>
    %c0_9 = arith.constant 0 : index
    %c0_10 = arith.constant 0 : index
    %12 = vector.load %arg5[%c0_9, %c0_10] : memref<1x256xf32, #tpu.memory_space<vmem>>, vector<1x256xf32>
    %13 = vector.broadcast %12 : vector<1x256xf32> to vector<8x256xf32>
    %14 = arith.addf %11, %13 : vector<8x256xf32>
    %cst_11 = arith.constant 0.000000e+00 : f32
    %15 = vector.broadcast %cst_11 : f32 to vector<8x256xf32>
    %16 = arith.maximumf %14, %15 : vector<8x256xf32>
    %c0_12 = arith.constant 0 : index
    %c0_13 = arith.constant 0 : index
    %17 = vector.load %arg6[%c0_12, %c0_13] : memref<256x128xf32, #tpu.memory_space<vmem>>, vector<256x128xf32>
    %cst_14 = arith.constant dense<0.000000e+00> : vector<8x128xf32>
    %18 = tpu.matmul %16, %17, %cst_14 {dimension_numbers = #tpu.dot_dimension_numbers<[1], [0], [0], [1], [0, 0, 1, 1], [], []>} : vector<8x256xf32>, vector<256x128xf32>, vector<8x128xf32> -> vector<8x128xf32>
    %c0_15 = arith.constant 0 : index
    %c0_16 = arith.constant 0 : index
    %19 = vector.load %arg7[%c0_15, %c0_16] : memref<896x128xf32, #tpu.memory_space<vmem>>, vector<896x128xf32>
    %cst_17 = arith.constant dense<0.000000e+00> : vector<8x128xf32>
    %20 = tpu.matmul %9, %19, %cst_17 {dimension_numbers = #tpu.dot_dimension_numbers<[1], [0], [0], [1], [0, 0, 1, 1], [], []>} : vector<8x896xf32>, vector<896x128xf32>, vector<8x128xf32> -> vector<8x128xf32>
    %21 = arith.addf %18, %20 : vector<8x128xf32>
    %c0_18 = arith.constant 0 : index
    %c0_19 = arith.constant 0 : index
    %22 = vector.load %arg8[%c0_18, %c0_19] : memref<1x128xf32, #tpu.memory_space<vmem>>, vector<1x128xf32>
    %23 = vector.broadcast %22 : vector<1x128xf32> to vector<8x128xf32>
    %24 = arith.addf %21, %23 : vector<8x128xf32>
    %25 = arith.negf %24 : vector<8x128xf32>
    %26 = math.exp %25 : vector<8x128xf32>
    %cst_20 = arith.constant 1.000000e+00 : f32
    %27 = vector.broadcast %cst_20 : f32 to vector<8x128xf32>
    %28 = arith.addf %27, %26 : vector<8x128xf32>
    %29 = arith.divf %27, %28 : vector<8x128xf32>
    %c0_21 = arith.constant 0 : index
    %c0_22 = arith.constant 0 : index
    %30 = vector.load %arg9[%c0_21, %c0_22] : memref<8x128xf32, #tpu.memory_space<vmem>>, vector<8x128xf32>
    tpu.vector_store %arg9[%c0_21, %c0_22], %29 {strides = array<i32>} : memref<8x128xf32, #tpu.memory_space<vmem>>, vector<8x128xf32>,
    return
  }
  func.func @transform_0(%arg0: i32) -> (i32, i32) {
    %c0_i32 = arith.constant 0 : i32
    %c0_i32_0 = arith.constant 0 : i32
    return %arg0, %c0_i32 : i32, i32
  }
  func.func @transform_1(%arg0: i32) -> (i32, i32) {
    %c0_i32 = arith.constant 0 : i32
    %c0_i32_0 = arith.constant 0 : i32
    %c0_i32_1 = arith.constant 0 : i32
    return %c0_i32, %c0_i32_0 : i32, i32
  }
  func.func @transform_2(%arg0: i32) -> (i32, i32) {
    %c0_i32 = arith.constant 0 : i32
    %c0_i32_0 = arith.constant 0 : i32
    %c0_i32_1 = arith.constant 0 : i32
    return %c0_i32, %c0_i32_0 : i32, i32
  }
  func.func @transform_3(%arg0: i32) -> (i32, i32) {
    %c0_i32 = arith.constant 0 : i32
    %c0_i32_0 = arith.constant 0 : i32
    %c0_i32_1 = arith.constant 0 : i32
    return %c0_i32, %c0_i32_0 : i32, i32
  }
  func.func @transform_4(%arg0: i32) -> (i32, i32) {
    %c0_i32 = arith.constant 0 : i32
    %c0_i32_0 = arith.constant 0 : i32
    %c0_i32_1 = arith.constant 0 : i32
    return %c0_i32, %c0_i32_0 : i32, i32
  }
  func.func @transform_5(%arg0: i32) -> (i32, i32) {
    %c0_i32 = arith.constant 0 : i32
    %c0_i32_0 = arith.constant 0 : i32
    %c0_i32_1 = arith.constant 0 : i32
    return %c0_i32, %c0_i32_0 : i32, i32
  }
  func.func @transform_6(%arg0: i32) -> (i32, i32) {
    %c0_i32 = arith.constant 0 : i32
    %c0_i32_0 = arith.constant 0 : i32
    %c0_i32_1 = arith.constant 0 : i32
    return %c0_i32, %c0_i32_0 : i32, i32
  }
  func.func @transform_7(%arg0: i32) -> (i32, i32) {
    %c0_i32 = arith.constant 0 : i32
    %c0_i32_0 = arith.constant 0 : i32
    %c0_i32_1 = arith.constant 0 : i32
    return %c0_i32, %c0_i32_0 : i32, i32
  }
  func.func @transform_8(%arg0: i32) -> (i32, i32) {
    %c0_i32 = arith.constant 0 : i32
    %c0_i32_0 = arith.constant 0 : i32
    return %arg0, %c0_i32 : i32, i32
  }
}

module attributes {stable_mosaic.version = 11 : i64} {
  func.func @_alignment_kernel(%arg0: i32, %arg1: memref<8x128xbf16, #tpu.memory_space<vmem>>, %arg2: memref<128x1408xbf16, #tpu.memory_space<vmem>>, %arg3: memref<1x1408xf32, #tpu.memory_space<vmem>>, %arg4: memref<512x256xf32, #tpu.memory_space<vmem>>, %arg5: memref<1x256xf32, #tpu.memory_space<vmem>>, %arg6: memref<256x128xf32, #tpu.memory_space<vmem>>, %arg7: memref<896x128xf32, #tpu.memory_space<vmem>>, %arg8: memref<1x128xf32, #tpu.memory_space<vmem>>, %arg9: memref<8x128xf32, #tpu.memory_space<vmem>>) attributes {dimension_semantics = [#tpu.dimension_semantics<parallel>], iteration_bounds = array<i64: 1>, scalar_prefetch = 0 : i64, scratch_operands = 0 : i64, tpu.core_type = #tpu.core_type<tc>, window_params = [{transform_indices = @transform_0, window_bounds = array<i64: 8, 128>}, {pipeline_mode = #tpu.pipeline_mode<synchronous>, transform_indices = @transform_1, window_bounds = array<i64: 128, 1408>}, {pipeline_mode = #tpu.pipeline_mode<synchronous>, transform_indices = @transform_2, window_bounds = array<i64: 1, 1408>}, {pipeline_mode = #tpu.pipeline_mode<synchronous>, transform_indices = @transform_3, window_bounds = array<i64: 512, 256>}, {pipeline_mode = #tpu.pipeline_mode<synchronous>, transform_indices = @transform_4, window_bounds = array<i64: 1, 256>}, {pipeline_mode = #tpu.pipeline_mode<synchronous>, transform_indices = @transform_5, window_bounds = array<i64: 256, 128>}, {pipeline_mode = #tpu.pipeline_mode<synchronous>, transform_indices = @transform_6, window_bounds = array<i64: 896, 128>}, {pipeline_mode = #tpu.pipeline_mode<synchronous>, transform_indices = @transform_7, window_bounds = array<i64: 1, 128>}, {transform_indices = @transform_8, window_bounds = array<i64: 8, 128>}]} {
    %c0 = arith.constant 0 : index
    %c0_0 = arith.constant 0 : index
    %0 = vector.load %arg1[%c0, %c0_0] : memref<8x128xbf16, #tpu.memory_space<vmem>>, vector<8x128xbf16>
    %c0_1 = arith.constant 0 : index
    %c0_2 = arith.constant 0 : index
    %1 = vector.load %arg2[%c0_1, %c0_2] : memref<128x1408xbf16, #tpu.memory_space<vmem>>, vector<128x1408xbf16>
    %cst = arith.constant dense<0.000000e+00> : vector<8x1408xf32>
    %2 = tpu.matmul %0, %1, %cst {dimension_numbers = #tpu.dot_dimension_numbers<[1], [0], [0], [1], [0, 0, 1, 1], [], []>} : vector<8x128xbf16>, vector<128x1408xbf16>, vector<8x1408xf32> -> vector<8x1408xf32>
    %c0_3 = arith.constant 0 : index
    %c0_4 = arith.constant 0 : index
    %3 = vector.load %arg3[%c0_3, %c0_4] : memref<1x1408xf32, #tpu.memory_space<vmem>>, vector<1x1408xf32>
    %4 = vector.broadcast %3 : vector<1x1408xf32> to vector<8x1408xf32>
    %5 = arith.addf %2, %4 : vector<8x1408xf32>
    %cst_5 = arith.constant 0.000000e+00 : f32
    %6 = vector.broadcast %cst_5 : f32 to vector<8x1408xf32>
    %7 = arith.maximumf %5, %6 : vector<8x1408xf32>
    %8 = vector.extract_strided_slice %7 {offsets = [0, 0], sizes = [8, 512], strides = [1, 1]} : vector<8x1408xf32> to vector<8x512xf32>
    %9 = vector.extract_strided_slice %7 {offsets = [0, 512], sizes = [8, 896], strides = [1, 1]} : vector<8x1408xf32> to vector<8x896xf32>
    %c0_6 = arith.constant 0 : index
    %c0_7 = arith.constant 0 : index
    %10 = vector.load %arg4[%c0_6, %c0_7] : memref<512x256xf32, #tpu.memory_space<vmem>>, vector<512x256xf32>
    %cst_8 = arith.constant dense<0.000000e+00> : vector<8x256xf32>
    %11 = tpu.matmul %8, %10, %cst_8 {dimension_numbers = #tpu.dot_dimension_numbers<[1], [0], [0], [1], [0, 0, 1, 1], [], []>} : vector<8x512xf32>, vector<512x256xf32>, vector<8x256xf32> -> vector<8x256xf32>
    %c0_9 = arith.constant 0 : index
    %c0_10 = arith.constant 0 : index
    %12 = vector.load %arg5[%c0_9, %c0_10] : memref<1x256xf32, #tpu.memory_space<vmem>>, vector<1x256xf32>
    %13 = vector.broadcast %12 : vector<1x256xf32> to vector<8x256xf32>
    %14 = arith.addf %11, %13 : vector<8x256xf32>
    %cst_11 = arith.constant 0.000000e+00 : f32
    %15 = vector.broadcast %cst_11 : f32 to vector<8x256xf32>
    %16 = arith.maximumf %14, %15 : vector<8x256xf32>
    %c0_12 = arith.constant 0 : index
    %c0_13 = arith.constant 0 : index
    %17 = vector.load %arg6[%c0_12, %c0_13] : memref<256x128xf32, #tpu.memory_space<vmem>>, vector<256x128xf32>
    %cst_14 = arith.constant dense<0.000000e+00> : vector<8x128xf32>
    %18 = tpu.matmul %16, %17, %cst_14 {dimension_numbers = #tpu.dot_dimension_numbers<[1], [0], [0], [1], [0, 0, 1, 1], [], []>} : vector<8x256xf32>, vector<256x128xf32>, vector<8x128xf32> -> vector<8x128xf32>
    %c0_15 = arith.constant 0 : index
    %c0_16 = arith.constant 0 : index
    %19 = vector.load %arg7[%c0_15, %c0_16] : memref<896x128xf32, #tpu.memory_space<vmem>>, vector<896x128xf32>
    %cst_17 = arith.constant dense<0.000000e+00> : vector<8x128xf32>
    %20 = tpu.matmul %9, %19, %cst_17 {dimension_numbers = #tpu.dot_dimension_numbers<[1], [0], [0], [1], [0, 0, 1, 1], [], []>} : vector<8x896xf32>, vector<896x128xf32>, vector<8x128xf32> -> vector<8x128xf32>
    %21 = arith.addf %18, %20 : vector<8x128xf32>
    %c0_18 = arith.constant 0 : index
    %c0_19 = arith.constant 0 : index
    %22 = vector.load %arg8[%c0_18, %c0_19] : memref<1x128xf32, #tpu.memory_space<vmem>>, vector<1x128xf32>
    %23 = vector.broadcast %22 : vector<1x128xf32> to vector<8x128xf32>
    %24 = arith.addf %21, %23 : vector<8x128xf32>
    %25 = arith.negf %24 : vector<8x128xf32>
    %26 = math.exp %25 : vector<8x128xf32>
    %cst_20 = arith.constant 1.000000e+00 : f32
    %27 = vector.broadcast %cst_20 : f32 to vector<8x128xf32>
    %28 = arith.addf %27, %26 : vector<8x128xf32>
    %29 = arith.divf %27, %28 : vector<8x128xf32>
    %c0_21 = arith.constant 0 : index
    %c0_22 = arith.constant 0 : index
    %30 = vector.load %arg9[%c0_21, %c0_22] : memref<8x128xf32, #tpu.memory_space<vmem>>, vector<8x128xf32>
    tpu.vector_store %arg9[%c0_21, %c0_22], %29 {strides = array<i32>} : memref<8x128xf32, #tpu.memory_space<vmem>>, vector<8x128xf32>,
    return
  }
  func.func @transform_0(%arg0: i32) -> (i32, i32) {
    %c0_i32 = arith.constant 0 : i32
    %c0_i32_0 = arith.constant 0 : i32
    return %arg0, %c0_i32 : i32, i32
  }
  func.func @transform_1(%arg0: i32) -> (i32, i32) {
    %c0_i32 = arith.constant 0 : i32
    %c0_i32_0 = arith.constant 0 : i32
    %c0_i32_1 = arith.constant 0 : i32
    return %c0_i32, %c0_i32_0 : i32, i32
  }
  func.func @transform_2(%arg0: i32) -> (i32, i32) {
    %c0_i32 = arith.constant 0 : i32
    %c0_i32_0 = arith.constant 0 : i32
    %c0_i32_1 = arith.constant 0 : i32
    return %c0_i32, %c0_i32_0 : i32, i32
  }
  func.func @transform_3(%arg0: i32) -> (i32, i32) {
    %c0_i32 = arith.constant 0 : i32
    %c0_i32_0 = arith.constant 0 : i32
    %c0_i32_1 = arith.constant 0 : i32
    return %c0_i32, %c0_i32_0 : i32, i32
  }
  func.func @transform_4(%arg0: i32) -> (i32, i32) {
    %c0_i32 = arith.constant 0 : i32
    %c0_i32_0 = arith.constant 0 : i32
    %c0_i32_1 = arith.constant 0 : i32
    return %c0_i32, %c0_i32_0 : i32, i32
  }
  func.func @transform_5(%arg0: i32) -> (i32, i32) {
    %c0_i32 = arith.constant 0 : i32
    %c0_i32_0 = arith.constant 0 : i32
    %c0_i32_1 = arith.constant 0 : i32
    return %c0_i32, %c0_i32_0 : i32, i32
  }
  func.func @transform_6(%arg0: i32) -> (i32, i32) {
    %c0_i32 = arith.constant 0 : i32
    %c0_i32_0 = arith.constant 0 : i32
    %c0_i32_1 = arith.constant 0 : i32
    return %c0_i32, %c0_i32_0 : i32, i32
  }
  func.func @transform_7(%arg0: i32) -> (i32, i32) {
    %c0_i32 = arith.constant 0 : i32
    %c0_i32_0 = arith.constant 0 : i32
    %c0_i32_1 = arith.constant 0 : i32
    return %c0_i32, %c0_i32_0 : i32, i32
  }
  func.func @transform_8(%arg0: i32) -> (i32, i32) {
    %c0_i32 = arith.constant 0 : i32
    %c0_i32_0 = arith.constant 0 : i32
    return %arg0, %c0_i32 : i32, i32
  }
}

</mosaic_0001>

<llo_original>
// kernel: tpu_custom_call.1
$region0: #{tpu_custom_call.1}
  #allocation0 [shape = 'u32[]', space=smem, size = 0x4, offset = 0x4, fixed_abs, tag = 'smem constant byte address 0x4 - core index']
  #allocation1 [shape = 'u32[144,128]{1,0:T(1,128)}', space=vmem, size = 0x12000, scoped, tag = 'internal scratch']
  %s0 = inlined_call_operand.hbm [shape: bf16[8,128], index: 0, kind: input, shape index: {}]
  %s1 = inlined_call_operand.hbm [shape: bf16[128,1408], index: 1, kind: input, shape index: {}]
  %s2 = inlined_call_operand.hbm [shape: f32[1,1408], index: 2, kind: input, shape index: {}]
  %s3 = inlined_call_operand.hbm [shape: f32[512,256], index: 3, kind: input, shape index: {}]
  %s4 = inlined_call_operand.vmem [shape: f32[1,256], index: 4, kind: input, shape index: {}]
  %s5 = inlined_call_operand.hbm [shape: f32[256,128], index: 5, kind: input, shape index: {}]
  %s6 = inlined_call_operand.hbm [shape: f32[896,128], index: 6, kind: input, shape index: {}]
  %s7 = inlined_call_operand.vmem [shape: f32[1,128], index: 7, kind: input, shape index: {}]
  %s8 = inlined_call_operand.hbm [shape: f32[8,128], index: 8, kind: output, shape index: {}]
  %s9 = sld [smem:[#allocation0]]
  $region66: #{tpu_custom_call.1} parent=0
    _
  %s11 = ssub.s32 1, %s9
  %s12 = scalar_select 0, %s11, %s9
  $region1: #{tpu_custom_call.1} parent=0
    #allocation2 [shape = 'u8[2048]{0}', space=vmem, size = 0x800, scoped, tag = 'input window, operand 0, single buffered']
    #allocation3 [shape = 's32[1]{0}', space=sflag, size = 0x4, scoped, tag = 'scoped memory for tpu_custom_call.1']
    #allocation4 [shape = 's32[1]{0}', space=sflag, size = 0x4, scoped, tag = 'scoped memory for tpu_custom_call.1']
    #allocation5 [shape = 'u8[360448]{0}', space=vmem, size = 0x58000, scoped, tag = 'input window, operand 1, single buffered']
    #allocation6 [shape = 's32[1]{0}', space=sflag, size = 0x4, scoped, tag = 'scoped memory for tpu_custom_call.1']
    #allocation7 [shape = 'u8[5632]{0}', space=vmem, size = 0x1800, scoped, tag = 'input window, operand 2, single buffered']
    #allocation8 [shape = 'u8[524288]{0}', space=vmem, size = 0x80000, scoped, tag = 'input window, operand 3, single buffered']
    #allocation9 [shape = 's32[1]{0}', space=sflag, size = 0x4, scoped, tag = 'scoped memory for tpu_custom_call.1']
    #allocation10 [shape = 'u8[131072]{0}', space=vmem, size = 0x20000, scoped, tag = 'input window, operand 5, single buffered']
    #allocation11 [shape = 'u8[458752]{0}', space=vmem, size = 0x70000, scoped, tag = 'input window, operand 6, single buffered']
    #allocation12 [shape = 's32[1]{0}', space=sflag, size = 0x4, scoped, tag = 'scoped memory for tpu_custom_call.1']
    #allocation13 [shape = 'u8[4096]{0}', space=vmem, size = 0x1000, scoped, tag = 'output window, operand 0, single buffered']
    %13 = vsyncpa [#allocation3], 0
    %14 = vsyncpa [#allocation6], 0
    %15 = vsyncpa [#allocation9], 0
    %16 = vsyncpa [#allocation12], 0
    %17 = vsyncpa [#allocation4], 0
    // Predicated region
    $region2: #{tpu_custom_call.1} parent=1 // pred_check
      _
    $region3: #{tpu_custom_call.1} parent=1 // pred_check_branch
      %19 = sbr.rel (0) target = $region5
    $region4: #{tpu_custom_call.1} parent=1 // pred_region
      %s21 = ssub.s32 64, 64
      %22 = vsyncadd [#allocation3], %s21
      %s24 = sshll.u32 [#allocation2], 4
      %s25 = int_to_ptr.vmem [resolvable:$true] %s24
      %27 = dma.hbm_to_vmem [thread:$0]  %s0, 64, %s25, [#allocation3]
    $region5: #{tpu_custom_call.1} parent=1 // pred_fallthru
      _
    // Predicated region
    $region6: #{tpu_custom_call.1} parent=1 // pred_check
      _
    $region7: #{tpu_custom_call.1} parent=1 // pred_check_branch
      %29 = sbr.rel (0) target = $region9
    $region8: #{tpu_custom_call.1} parent=1 // pred_region
      %s31 = ssub.s32 11264, 11264
      %32 = vsyncadd [#allocation6], %s31
      %s33 = sshll.u32 [#allocation5], 4
      %s34 = int_to_ptr.vmem [resolvable:$true] %s33
      %39 = dma.hbm_to_vmem [thread:$0]  %s1, 11264, %s34, [#allocation6], 704, 704, 44
    $region9: #{tpu_custom_call.1} parent=1 // pred_fallthru
      _
    // Predicated region
    $region10: #{tpu_custom_call.1} parent=1 // pred_check
      _
    $region11: #{tpu_custom_call.1} parent=1 // pred_check_branch
      %41 = sbr.rel (0) target = $region13
    $region12: #{tpu_custom_call.1} parent=1 // pred_region
      %s43 = ssub.s32 176, 176
      %44 = vsyncadd [#allocation6], %s43
      %s46 = sshll.u32 [#allocation7], 4
      %s47 = int_to_ptr.vmem [resolvable:$true] %s46
      %49 = dma.hbm_to_vmem [thread:$0]  %s2, 176, %s47, [#allocation6]
    $region13: #{tpu_custom_call.1} parent=1 // pred_fallthru
      _
    // Predicated region
    $region14: #{tpu_custom_call.1} parent=1 // pred_check
      _
    $region15: #{tpu_custom_call.1} parent=1 // pred_check_branch
      %51 = sbr.rel (0) target = $region17
    $region16: #{tpu_custom_call.1} parent=1 // pred_region
      %s53 = ssub.s32 16384, 16384
      %54 = vsyncadd [#allocation9], %s53
      %s55 = sshll.u32 [#allocation8], 4
      %s56 = int_to_ptr.vmem [resolvable:$true] %s55
      %61 = dma.hbm_to_vmem [thread:$0]  %s3, 16384, %s56, [#allocation9], 256, 256, 16
    $region17: #{tpu_custom_call.1} parent=1 // pred_fallthru
      _
    // Predicated region
    $region18: #{tpu_custom_call.1} parent=1 // pred_check
      _
    $region19: #{tpu_custom_call.1} parent=1 // pred_check_branch
      %63 = sbr.rel (0) target = $region21
    $region20: #{tpu_custom_call.1} parent=1 // pred_region
      _
    $region21: #{tpu_custom_call.1} parent=1 // pred_fallthru
      _
    // Predicated region
    $region22: #{tpu_custom_call.1} parent=1 // pred_check
      _
    $region23: #{tpu_custom_call.1} parent=1 // pred_check_branch
      %65 = sbr.rel (0) target = $region25
    $region24: #{tpu_custom_call.1} parent=1 // pred_region
      %s67 = ssub.s32 4096, 4096
      %68 = vsyncadd [#allocation9], %s67
      %s69 = sshll.u32 [#allocation10], 4
      %s70 = int_to_ptr.vmem [resolvable:$true] %s69
      %75 = dma.hbm_to_vmem [thread:$0]  %s5, 4096, %s70, [#allocation9], 128, 128, 8
    $region25: #{tpu_custom_call.1} parent=1 // pred_fallthru
      _
    // Predicated region
    $region26: #{tpu_custom_call.1} parent=1 // pred_check
      _
    $region27: #{tpu_custom_call.1} parent=1 // pred_check_branch
      %77 = sbr.rel (0) target = $region29
    $region28: #{tpu_custom_call.1} parent=1 // pred_region
      %s79 = ssub.s32 14336, 14336
      %80 = vsyncadd [#allocation12], %s79
      %s81 = sshll.u32 [#allocation11], 4
      %s82 = int_to_ptr.vmem [resolvable:$true] %s81
      %87 = dma.hbm_to_vmem [thread:$0]  %s6, 14336, %s82, [#allocation12], 128, 128, 8
    $region29: #{tpu_custom_call.1} parent=1 // pred_fallthru
      _
    // Predicated region
    $region30: #{tpu_custom_call.1} parent=1 // pred_check
      _
    $region31: #{tpu_custom_call.1} parent=1 // pred_check_branch
      %89 = sbr.rel (0) target = $region33
    $region32: #{tpu_custom_call.1} parent=1 // pred_region
      _
    $region33: #{tpu_custom_call.1} parent=1 // pred_fallthru
      _
    // Predicated region
    $region34: #{tpu_custom_call.1} parent=1 // pred_check
      _
    $region35: #{tpu_custom_call.1} parent=1 // pred_check_branch
      %91 = sbr.rel (0) target = $region37
    $region36: #{tpu_custom_call.1} parent=1 // pred_region
      %92 = dma.done [#allocation3], 64
    $region37: #{tpu_custom_call.1} parent=1 // pred_fallthru
      _
    // Predicated region
    $region38: #{tpu_custom_call.1} parent=1 // pred_check
      _
    $region39: #{tpu_custom_call.1} parent=1 // pred_check_branch
      %94 = sbr.rel (0) target = $region41
    $region40: #{tpu_custom_call.1} parent=1 // pred_region
      %95 = dma.done [#allocation6], 11264
    $region41: #{tpu_custom_call.1} parent=1 // pred_fallthru
      _
    // Predicated region
    $region42: #{tpu_custom_call.1} parent=1 // pred_check
      _
    $region43: #{tpu_custom_call.1} parent=1 // pred_check_branch
      %97 = sbr.rel (0) target = $region45
    $region44: #{tpu_custom_call.1} parent=1 // pred_region
      %98 = dma.done [#allocation6], 176
    $region45: #{tpu_custom_call.1} parent=1 // pred_fallthru
      _
    // Predicated region
    $region46: #{tpu_custom_call.1} parent=1 // pred_check
      _
    $region47: #{tpu_custom_call.1} parent=1 // pred_check_branch
      %100 = sbr.rel (0) target = $region49
    $region48: #{tpu_custom_call.1} parent=1 // pred_region
      %101 = dma.done [#allocation9], 16384
    $region49: #{tpu_custom_call.1} parent=1 // pred_fallthru
      _
    // Predicated region
    $region50: #{tpu_custom_call.1} parent=1 // pred_check
      _
    $region51: #{tpu_custom_call.1} parent=1 // pred_check_branch
      %103 = sbr.rel (0) target = $region53
    $region52: #{tpu_custom_call.1} parent=1 // pred_region
      %104 = dma.done [#allocation9], 4096
    $region53: #{tpu_custom_call.1} parent=1 // pred_fallthru
      _
    // Predicated region
    $region54: #{tpu_custom_call.1} parent=1 // pred_check
      _
    $region55: #{tpu_custom_call.1} parent=1 // pred_check_branch
      %106 = sbr.rel (0) target = $region57
    $region56: #{tpu_custom_call.1} parent=1 // pred_region
      %107 = dma.done [#allocation12], 14336
    $region57: #{tpu_custom_call.1} parent=1 // pred_fallthru
      _
    %v109 = vld [vmem:[#allocation2] sm:$0xf]
    %v110 = vld [vmem:[#allocation5] sm:$0xff]
    %v111 = vld [vmem:[#allocation5 + $0x8] sm:$0xff]
    %v112 = vld [vmem:[#allocation5 + $0x10] sm:$0xff]
    %v113 = vld [vmem:[#allocation5 + $0x18] sm:$0xff]
    %v114 = vld [vmem:[#allocation5 + $0x20] sm:$0xff]
    %v115 = vld [vmem:[#allocation5 + $0x28] sm:$0xf]
    %v116 = vld [vmem:[#allocation5 + $0x2c] sm:$0xff]
    %v117 = vld [vmem:[#allocation5 + $0x34] sm:$0xff]
    %v118 = vld [vmem:[#allocation5 + $0x3c] sm:$0xff]
    %v119 = vld [vmem:[#allocation5 + $0x44] sm:$0xff]
    %v120 = vld [vmem:[#allocation5 + $0x4c] sm:$0xff]
    %v121 = vld [vmem:[#allocation5 + $0x54] sm:$0xf]
    %v122 = vld [vmem:[#allocation5 + $0x58] sm:$0xff]
    %v123 = vld [vmem:[#allocation5 + $0x60] sm:$0xff]
    %v124 = vld [vmem:[#allocation5 + $0x68] sm:$0xff]
    %v125 = vld [vmem:[#allocation5 + $0x70] sm:$0xff]
    %v126 = vld [vmem:[#allocation5 + $0x78] sm:$0xff]
    %v127 = vld [vmem:[#allocation5 + $0x80] sm:$0xf]
    %v128 = vld [vmem:[#allocation5 + $0x84] sm:$0xff]
    %v129 = vld [vmem:[#allocation5 + $0x8c] sm:$0xff]
    %v130 = vld [vmem:[#allocation5 + $0x94] sm:$0xff]
    %v131 = vld [vmem:[#allocation5 + $0x9c] sm:$0xff]
    %v132 = vld [vmem:[#allocation5 + $0xa4] sm:$0xff]
    %v133 = vld [vmem:[#allocation5 + $0xac] sm:$0xf]
    %v134 = vld [vmem:[#allocation5 + $0xb0] sm:$0xff]
    %v135 = vld [vmem:[#allocation5 + $0xb8] sm:$0xff]
    %v136 = vld [vmem:[#allocation5 + $0xc0] sm:$0xff]
    %v137 = vld [vmem:[#allocation5 + $0xc8] sm:$0xff]
    %v138 = vld [vmem:[#allocation5 + $0xd0] sm:$0xff]
    %v139 = vld [vmem:[#allocation5 + $0xd8] sm:$0xf]
    %v140 = vld [vmem:[#allocation5 + $0xdc] sm:$0xff]
    %v141 = vld [vmem:[#allocation5 + $0xe4] sm:$0xff]
    %v142 = vld [vmem:[#allocation5 + $0xec] sm:$0xff]
    %v143 = vld [vmem:[#allocation5 + $0xf4] sm:$0xff]
    %v144 = vld [vmem:[#allocation5 + $0xfc] sm:$0xff]
    %v145 = vld [vmem:[#allocation5 + $0x104] sm:$0xf]
    %v146 = vld [vmem:[#allocation5 + $0x108] sm:$0xff]
    %v147 = vld [vmem:[#allocation5 + $0x110] sm:$0xff]
    %v148 = vld [vmem:[#allocation5 + $0x118] sm:$0xff]
    %v149 = vld [vmem:[#allocation5 + $0x120] sm:$0xff]
    %v150 = vld [vmem:[#allocation5 + $0x128] sm:$0xff]
    %v151 = vld [vmem:[#allocation5 + $0x130] sm:$0xf]
    %v152 = vld [vmem:[#allocation5 + $0x134] sm:$0xff]
    %v153 = vld [vmem:[#allocation5 + $0x13c] sm:$0xff]
    %v154 = vld [vmem:[#allocation5 + $0x144] sm:$0xff]
    %v155 = vld [vmem:[#allocation5 + $0x14c] sm:$0xff]
    %v156 = vld [vmem:[#allocation5 + $0x154] sm:$0xff]
    %v157 = vld [vmem:[#allocation5 + $0x15c] sm:$0xf]
    %v158 = vld [vmem:[#allocation5 + $0x160] sm:$0xff]
    %v159 = vld [vmem:[#allocation5 + $0x168] sm:$0xff]
    %v160 = vld [vmem:[#allocation5 + $0x170] sm:$0xff]
    %v161 = vld [vmem:[#allocation5 + $0x178] sm:$0xff]
    %v162 = vld [vmem:[#allocation5 + $0x180] sm:$0xff]
    %v163 = vld [vmem:[#allocation5 + $0x188] sm:$0xf]
    %v164 = vld [vmem:[#allocation5 + $0x18c] sm:$0xff]
    %v165 = vld [vmem:[#allocation5 + $0x194] sm:$0xff]
    %v166 = vld [vmem:[#allocation5 + $0x19c] sm:$0xff]
    %v167 = vld [vmem:[#allocation5 + $0x1a4] sm:$0xff]
    %v168 = vld [vmem:[#allocation5 + $0x1ac] sm:$0xff]
    %v169 = vld [vmem:[#allocation5 + $0x1b4] sm:$0xf]
    %v170 = vld [vmem:[#allocation5 + $0x1b8] sm:$0xff]
    %v171 = vld [vmem:[#allocation5 + $0x1c0] sm:$0xff]
    %v172 = vld [vmem:[#allocation5 + $0x1c8] sm:$0xff]
    %v173 = vld [vmem:[#allocation5 + $0x1d0] sm:$0xff]
    %v174 = vld [vmem:[#allocation5 + $0x1d8] sm:$0xff]
    %v175 = vld [vmem:[#allocation5 + $0x1e0] sm:$0xf]
    %v176 = vld [vmem:[#allocation5 + $0x1e4] sm:$0xff]
    %v177 = vld [vmem:[#allocation5 + $0x1ec] sm:$0xff]
    %v178 = vld [vmem:[#allocation5 + $0x1f4] sm:$0xff]
    %v179 = vld [vmem:[#allocation5 + $0x1fc] sm:$0xff]
    %v180 = vld [vmem:[#allocation5 + $0x204] sm:$0xff]
    %v181 = vld [vmem:[#allocation5 + $0x20c] sm:$0xf]
    %v182 = vld [vmem:[#allocation5 + $0x210] sm:$0xff]
    %v183 = vld [vmem:[#allocation5 + $0x218] sm:$0xff]
    %v184 = vld [vmem:[#allocation5 + $0x220] sm:$0xff]
    %v185 = vld [vmem:[#allocation5 + $0x228] sm:$0xff]
    %v186 = vld [vmem:[#allocation5 + $0x230] sm:$0xff]
    %v187 = vld [vmem:[#allocation5 + $0x238] sm:$0xf]
    %v188 = vld [vmem:[#allocation5 + $0x23c] sm:$0xff]
    %v189 = vld [vmem:[#allocation5 + $0x244] sm:$0xff]
    %v190 = vld [vmem:[#allocation5 + $0x24c] sm:$0xff]
    %v191 = vld [vmem:[#allocation5 + $0x254] sm:$0xff]
    %v192 = vld [vmem:[#allocation5 + $0x25c] sm:$0xff]
    %v193 = vld [vmem:[#allocation5 + $0x264] sm:$0xf]
    %v194 = vld [vmem:[#allocation5 + $0x268] sm:$0xff]
    %v195 = vld [vmem:[#allocation5 + $0x270] sm:$0xff]
    %v196 = vld [vmem:[#allocation5 + $0x278] sm:$0xff]
    %v197 = vld [vmem:[#allocation5 + $0x280] sm:$0xff]
    %v198 = vld [vmem:[#allocation5 + $0x288] sm:$0xff]
    %v199 = vld [vmem:[#allocation5 + $0x290] sm:$0xf]
    %v200 = vld [vmem:[#allocation5 + $0x294] sm:$0xff]
    %v201 = vld [vmem:[#allocation5 + $0x29c] sm:$0xff]
    %v202 = vld [vmem:[#allocation5 + $0x2a4] sm:$0xff]
    %v203 = vld [vmem:[#allocation5 + $0x2ac] sm:$0xff]
    %v204 = vld [vmem:[#allocation5 + $0x2b4] sm:$0xff]
    %v205 = vld [vmem:[#allocation5 + $0x2bc] sm:$0xf]
    %v206 = vld [vmem:[#allocation7] sm:$0xff]
    %v207 = vld [vmem:[#allocation7 + $0x8] sm:$0x7]
    %v210 = vlaneseq
    %v211 = vshrl.u32 %v210, 7
    %v212 = vsub.s32 0, %v211
    %v213 = vrot.slane %v206, %v212
    %v214 = vlaneseq
    %v215 = vshrl.u32 %v214, 7
    %v216 = vsub.s32 1, %v215
    %v217 = vrot.slane %v206, %v216
    %v218 = vlaneseq
    %v219 = vshrl.u32 %v218, 7
    %v220 = vsub.s32 2, %v219
    %v221 = vrot.slane %v206, %v220
    %v222 = vlaneseq
    %v223 = vshrl.u32 %v222, 7
    %v224 = vsub.s32 3, %v223
    %v225 = vrot.slane %v206, %v224
    %v226 = vlaneseq
    %v227 = vshrl.u32 %v226, 7
    %v228 = vsub.s32 4, %v227
    %v229 = vrot.slane %v206, %v228
    %v230 = vlaneseq
    %v231 = vshrl.u32 %v230, 7
    %v232 = vsub.s32 5, %v231
    %v233 = vrot.slane %v206, %v232
    %v234 = vlaneseq
    %v235 = vshrl.u32 %v234, 7
    %v236 = vsub.s32 6, %v235
    %v237 = vrot.slane %v206, %v236
    %v238 = vlaneseq
    %v239 = vshrl.u32 %v238, 7
    %v240 = vsub.s32 7, %v239
    %v241 = vrot.slane %v206, %v240
    %v242 = vlaneseq
    %v243 = vshrl.u32 %v242, 7
    %v244 = vsub.s32 0, %v243
    %v245 = vrot.slane %v207, %v244
    %v246 = vlaneseq
    %v247 = vshrl.u32 %v246, 7
    %v248 = vsub.s32 1, %v247
    %v249 = vrot.slane %v207, %v248
    %v250 = vlaneseq
    %v251 = vshrl.u32 %v250, 7
    %v252 = vsub.s32 2, %v251
    %v253 = vrot.slane %v207, %v252
    %v361 = vunpack.c.l.b16 %v110
    %v362 = vunpack.c.h.b16 %v110
    %v363 = vunpack.c.l.b16 %v111
    %v364 = vunpack.c.h.b16 %v111
    %v365 = vunpack.c.l.b16 %v112
    %v366 = vunpack.c.h.b16 %v112
    %v367 = vunpack.c.l.b16 %v113
    %v368 = vunpack.c.h.b16 %v113
    %v369 = vunpack.c.l.b16 %v114
    %v370 = vunpack.c.h.b16 %v114
    %v371 = vunpack.c.l.b16 %v115
    %v372 = vunpack.c.l.b16 %v116
    %v373 = vunpack.c.h.b16 %v116
    %v374 = vunpack.c.l.b16 %v117
    %v375 = vunpack.c.h.b16 %v117
    %v376 = vunpack.c.l.b16 %v118
    %v377 = vunpack.c.h.b16 %v118
    %v378 = vunpack.c.l.b16 %v119
    %v379 = vunpack.c.h.b16 %v119
    %v380 = vunpack.c.l.b16 %v120
    %v381 = vunpack.c.h.b16 %v120
    %v382 = vunpack.c.l.b16 %v121
    %v383 = vunpack.c.l.b16 %v122
    %v384 = vunpack.c.h.b16 %v122
    %v385 = vunpack.c.l.b16 %v123
    %v386 = vunpack.c.h.b16 %v123
    %v387 = vunpack.c.l.b16 %v124
    %v388 = vunpack.c.h.b16 %v124
    %v389 = vunpack.c.l.b16 %v125
    %v390 = vunpack.c.h.b16 %v125
    %v391 = vunpack.c.l.b16 %v126
    %v392 = vunpack.c.h.b16 %v126
    %v393 = vunpack.c.l.b16 %v127
    %v394 = vunpack.c.l.b16 %v128
    %v395 = vunpack.c.h.b16 %v128
    %v396 = vunpack.c.l.b16 %v129
    %v397 = vunpack.c.h.b16 %v129
    %v398 = vunpack.c.l.b16 %v130
    %v399 = vunpack.c.h.b16 %v130
    %v400 = vunpack.c.l.b16 %v131
    %v401 = vunpack.c.h.b16 %v131
    %v402 = vunpack.c.l.b16 %v132
    %v403 = vunpack.c.h.b16 %v132
    %v404 = vunpack.c.l.b16 %v133
    %v405 = vunpack.c.l.b16 %v134
    %v406 = vunpack.c.h.b16 %v134
    %v407 = vunpack.c.l.b16 %v135
    %v408 = vunpack.c.h.b16 %v135
    %v409 = vunpack.c.l.b16 %v136
    %v410 = vunpack.c.h.b16 %v136
    %v411 = vunpack.c.l.b16 %v137
    %v412 = vunpack.c.h.b16 %v137
    %v413 = vunpack.c.l.b16 %v138
    %v414 = vunpack.c.h.b16 %v138
    %v415 = vunpack.c.l.b16 %v139
    %v416 = vunpack.c.l.b16 %v140
    %v417 = vunpack.c.h.b16 %v140
    %v418 = vunpack.c.l.b16 %v141
    %v419 = vunpack.c.h.b16 %v141
    %v420 = vunpack.c.l.b16 %v142
    %v421 = vunpack.c.h.b16 %v142
    %v422 = vunpack.c.l.b16 %v143
    %v423 = vunpack.c.h.b16 %v143
    %v424 = vunpack.c.l.b16 %v144
    %v425 = vunpack.c.h.b16 %v144
    %v426 = vunpack.c.l.b16 %v145
    %v427 = vunpack.c.l.b16 %v146
    %v428 = vunpack.c.h.b16 %v146
    %v429 = vunpack.c.l.b16 %v147
    %v430 = vunpack.c.h.b16 %v147
    %v431 = vunpack.c.l.b16 %v148
    %v432 = vunpack.c.h.b16 %v148
    %v433 = vunpack.c.l.b16 %v149
    %v434 = vunpack.c.h.b16 %v149
    %v435 = vunpack.c.l.b16 %v150
    %v436 = vunpack.c.h.b16 %v150
    %v437 = vunpack.c.l.b16 %v151
    %v438 = vunpack.c.l.b16 %v152
    %v439 = vunpack.c.h.b16 %v152
    %v440 = vunpack.c.l.b16 %v153
    %v441 = vunpack.c.h.b16 %v153
    %v442 = vunpack.c.l.b16 %v154
    %v443 = vunpack.c.h.b16 %v154
    %v444 = vunpack.c.l.b16 %v155
    %v445 = vunpack.c.h.b16 %v155
    %v446 = vunpack.c.l.b16 %v156
    %v447 = vunpack.c.h.b16 %v156
    %v448 = vunpack.c.l.b16 %v157
    %v449 = vunpack.c.l.b16 %v158
    %v450 = vunpack.c.h.b16 %v158
    %v451 = vunpack.c.l.b16 %v159
    %v452 = vunpack.c.h.b16 %v159
    %v453 = vunpack.c.l.b16 %v160
    %v454 = vunpack.c.h.b16 %v160
    %v455 = vunpack.c.l.b16 %v161
    %v456 = vunpack.c.h.b16 %v161
    %v457 = vunpack.c.l.b16 %v162
    %v458 = vunpack.c.h.b16 %v162
    %v459 = vunpack.c.l.b16 %v163
    %v460 = vunpack.c.l.b16 %v164
    %v461 = vunpack.c.h.b16 %v164
    %v462 = vunpack.c.l.b16 %v165
    %v463 = vunpack.c.h.b16 %v165
    %v464 = vunpack.c.l.b16 %v166
    %v465 = vunpack.c.h.b16 %v166
    %v466 = vunpack.c.l.b16 %v167
    %v467 = vunpack.c.h.b16 %v167
    %v468 = vunpack.c.l.b16 %v168
    %v469 = vunpack.c.h.b16 %v168
    %v470 = vunpack.c.l.b16 %v169
    %v471 = vunpack.c.l.b16 %v170
    %v472 = vunpack.c.h.b16 %v170
    %v473 = vunpack.c.l.b16 %v171
    %v474 = vunpack.c.h.b16 %v171
    %v475 = vunpack.c.l.b16 %v172
    %v476 = vunpack.c.h.b16 %v172
    %v477 = vunpack.c.l.b16 %v173
    %v478 = vunpack.c.h.b16 %v173
    %v479 = vunpack.c.l.b16 %v174
    %v480 = vunpack.c.h.b16 %v174
    %v481 = vunpack.c.l.b16 %v175
    %v482 = vunpack.c.l.b16 %v176
    %v483 = vunpack.c.h.b16 %v176
    %v484 = vunpack.c.l.b16 %v177
    %v485 = vunpack.c.h.b16 %v177
    %v486 = vunpack.c.l.b16 %v178
    %v487 = vunpack.c.h.b16 %v178
    %v488 = vunpack.c.l.b16 %v179
    %v489 = vunpack.c.h.b16 %v179
    %v490 = vunpack.c.l.b16 %v180
    %v491 = vunpack.c.h.b16 %v180
    %v492 = vunpack.c.l.b16 %v181
    %v493 = vunpack.c.l.b16 %v182
    %v494 = vunpack.c.h.b16 %v182
    %v495 = vunpack.c.l.b16 %v183
    %v496 = vunpack.c.h.b16 %v183
    %v497 = vunpack.c.l.b16 %v184
    %v498 = vunpack.c.h.b16 %v184
    %v499 = vunpack.c.l.b16 %v185
    %v500 = vunpack.c.h.b16 %v185
    %v501 = vunpack.c.l.b16 %v186
    %v502 = vunpack.c.h.b16 %v186
    %v503 = vunpack.c.l.b16 %v187
    %v504 = vunpack.c.l.b16 %v188
    %v505 = vunpack.c.h.b16 %v188
    %v506 = vunpack.c.l.b16 %v189
    %v507 = vunpack.c.h.b16 %v189
    %v508 = vunpack.c.l.b16 %v190
    %v509 = vunpack.c.h.b16 %v190
    %v510 = vunpack.c.l.b16 %v191
    %v511 = vunpack.c.h.b16 %v191
    %v512 = vunpack.c.l.b16 %v192
    %v513 = vunpack.c.h.b16 %v192
    %v514 = vunpack.c.l.b16 %v193
    %v515 = vunpack.c.l.b16 %v194
    %v516 = vunpack.c.h.b16 %v194
    %v517 = vunpack.c.l.b16 %v195
    %v518 = vunpack.c.h.b16 %v195
    %v519 = vunpack.c.l.b16 %v196
    %v520 = vunpack.c.h.b16 %v196
    %v521 = vunpack.c.l.b16 %v197
    %v522 = vunpack.c.h.b16 %v197
    %v523 = vunpack.c.l.b16 %v198
    %v524 = vunpack.c.h.b16 %v198
    %v525 = vunpack.c.l.b16 %v199
    %v526 = vunpack.c.l.b16 %v200
    %v527 = vunpack.c.h.b16 %v200
    %v528 = vunpack.c.l.b16 %v201
    %v529 = vunpack.c.h.b16 %v201
    %v530 = vunpack.c.l.b16 %v202
    %v531 = vunpack.c.h.b16 %v202
    %v532 = vunpack.c.l.b16 %v203
    %v533 = vunpack.c.h.b16 %v203
    %v534 = vunpack.c.l.b16 %v204
    %v535 = vunpack.c.h.b16 %v204
    %v536 = vunpack.c.l.b16 %v205
    %v537 = vpack.c.b16 %v372, %v361
    %v538 = vpack.c.b16 %v373, %v362
    %v539 = vpack.c.b16 %v374, %v363
    %v540 = vpack.c.b16 %v375, %v364
    %v541 = vpack.c.b16 %v376, %v365
    %v542 = vpack.c.b16 %v377, %v366
    %v543 = vpack.c.b16 %v378, %v367
    %v544 = vpack.c.b16 %v379, %v368
    %v545 = vpack.c.b16 %v380, %v369
    %v546 = vpack.c.b16 %v381, %v370
    %v547 = vpack.c.b16 %v382, %v371
    %v548 = vpack.c.b16 %v394, %v383
    %v549 = vpack.c.b16 %v395, %v384
    %v550 = vpack.c.b16 %v396, %v385
    %v551 = vpack.c.b16 %v397, %v386
    %v552 = vpack.c.b16 %v398, %v387
    %v553 = vpack.c.b16 %v399, %v388
    %v554 = vpack.c.b16 %v400, %v389
    %v555 = vpack.c.b16 %v401, %v390
    %v556 = vpack.c.b16 %v402, %v391
    %v557 = vpack.c.b16 %v403, %v392
    %v558 = vpack.c.b16 %v404, %v393
    %v559 = vpack.c.b16 %v416, %v405
    %v560 = vpack.c.b16 %v417, %v406
    %v561 = vpack.c.b16 %v418, %v407
    %v562 = vpack.c.b16 %v419, %v408
    %v563 = vpack.c.b16 %v420, %v409
    %v564 = vpack.c.b16 %v421, %v410
    %v565 = vpack.c.b16 %v422, %v411
    %v566 = vpack.c.b16 %v423, %v412
    %v567 = vpack.c.b16 %v424, %v413
    %v568 = vpack.c.b16 %v425, %v414
    %v569 = vpack.c.b16 %v426, %v415
    %v570 = vpack.c.b16 %v438, %v427
    %v571 = vpack.c.b16 %v439, %v428
    %v572 = vpack.c.b16 %v440, %v429
    %v573 = vpack.c.b16 %v441, %v430
    %v574 = vpack.c.b16 %v442, %v431
    %v575 = vpack.c.b16 %v443, %v432
    %v576 = vpack.c.b16 %v444, %v433
    %v577 = vpack.c.b16 %v445, %v434
    %v578 = vpack.c.b16 %v446, %v435
    %v579 = vpack.c.b16 %v447, %v436
    %v580 = vpack.c.b16 %v448, %v437
    %v581 = vpack.c.b16 %v460, %v449
    %v582 = vpack.c.b16 %v461, %v450
    %v583 = vpack.c.b16 %v462, %v451
    %v584 = vpack.c.b16 %v463, %v452
    %v585 = vpack.c.b16 %v464, %v453
    %v586 = vpack.c.b16 %v465, %v454
    %v587 = vpack.c.b16 %v466, %v455
    %v588 = vpack.c.b16 %v467, %v456
    %v589 = vpack.c.b16 %v468, %v457
    %v590 = vpack.c.b16 %v469, %v458
    %v591 = vpack.c.b16 %v470, %v459
    %v592 = vpack.c.b16 %v482, %v471
    %v593 = vpack.c.b16 %v483, %v472
    %v594 = vpack.c.b16 %v484, %v473
    %v595 = vpack.c.b16 %v485, %v474
    %v596 = vpack.c.b16 %v486, %v475
    %v597 = vpack.c.b16 %v487, %v476
    %v598 = vpack.c.b16 %v488, %v477
    %v599 = vpack.c.b16 %v489, %v478
    %v600 = vpack.c.b16 %v490, %v479
    %v601 = vpack.c.b16 %v491, %v480
    %v602 = vpack.c.b16 %v492, %v481
    %v603 = vpack.c.b16 %v504, %v493
    %v604 = vpack.c.b16 %v505, %v494
    %v605 = vpack.c.b16 %v506, %v495
    %v606 = vpack.c.b16 %v507, %v496
    %v607 = vpack.c.b16 %v508, %v497
    %v608 = vpack.c.b16 %v509, %v498
    %v609 = vpack.c.b16 %v510, %v499
    %v610 = vpack.c.b16 %v511, %v500
    %v611 = vpack.c.b16 %v512, %v501
    %v612 = vpack.c.b16 %v513, %v502
    %v613 = vpack.c.b16 %v514, %v503
    %v614 = vpack.c.b16 %v526, %v515
    %v615 = vpack.c.b16 %v527, %v516
    %v616 = vpack.c.b16 %v528, %v517
    %v617 = vpack.c.b16 %v529, %v518
    %v618 = vpack.c.b16 %v530, %v519
    %v619 = vpack.c.b16 %v531, %v520
    %v620 = vpack.c.b16 %v532, %v521
    %v621 = vpack.c.b16 %v533, %v522
    %v622 = vpack.c.b16 %v534, %v523
    %v623 = vpack.c.b16 %v535, %v524
    %v624 = vpack.c.b16 %v536, %v525
    %713 = vmatprep.subr.bf16.mxu0 %v615
    %714 = vmatpush1.bf16.msra.mxu0 %v614
    %715 = vmatprep.subr.bf16.mxu0 %v604
    %716 = vmatpush1.bf16.msra.mxu0 %v603
    %717 = vmatprep.subr.bf16.mxu0 %v593
    %718 = vmatpush1.bf16.msra.mxu0 %v592
    %719 = vmatprep.subr.bf16.mxu0 %v582
    %720 = vmatpush1.bf16.msra.mxu0 %v581
    %721 = vmatprep.subr.bf16.mxu0 %v571
    %722 = vmatpush1.bf16.msra.mxu0 %v570
    %723 = vmatprep.subr.bf16.mxu0 %v560
    %724 = vmatpush1.bf16.msra.mxu0 %v559
    %725 = vmatprep.subr.bf16.mxu0 %v549
    %726 = vmatpush1.bf16.msra.mxu0 %v548
    %727 = vmatprep.subr.bf16.mxu0 %v538
    %728 = vmatpush1.bf16.msra.mxu0 %v537
    %729 = vmatprep.subr.bf16.mxu0 0
    %730 = vmatpush2.bf16.msra.mxu0 0
    %731 = vmatprep.subr.bf16.mxu0 0
    %732 = vmatpush2.bf16.msra.mxu0 0
    %733 = vmatprep.subr.bf16.mxu0 0
    %734 = vmatpush2.bf16.msra.mxu0 0
    %735 = vmatprep.subr.bf16.mxu0 0
    %736 = vmatpush2.bf16.msra.mxu0 0
    %737 = vmatprep.subr.bf16.mxu0 0
    %738 = vmatpush2.bf16.msra.mxu0 0
    %739 = vmatprep.subr.bf16.mxu0 0
    %740 = vmatpush2.bf16.msra.mxu0 0
    %741 = vmatprep.subr.bf16.mxu0 0
    %742 = vmatpush2.bf16.msra.mxu0 0
    %743 = vmatprep.subr.bf16.mxu0 0
    %744 = vmatpush2.bf16.msra.mxu0 0
    %745 = vmatprep.mubr.bf16.mxu0 0
    %746 = vmatmul.mubr.bf16.gmra.mxu0 %v109
    %v747 = vpop.f32.mrf.mxu0
    %v748 = vadd.f32 %v213, %v747
    %v749 = vpop.f32.mrf.mxu0
    %v750 = vadd.f32 %v217, %v749
    %v751 = vpop.f32.mrf.mxu0
    %v752 = vpop.f32.mrf.mxu0
    %753 = vdwg.mxu0
    %754 = vmatprep.subr.bf16.mxu0 %v617
    %755 = vmatpush1.bf16.msra.mxu0 %v616
    %756 = vmatprep.subr.bf16.mxu0 %v606
    %757 = vmatpush1.bf16.msra.mxu0 %v605
    %758 = vmatprep.subr.bf16.mxu0 %v595
    %759 = vmatpush1.bf16.msra.mxu0 %v594
    %760 = vmatprep.subr.bf16.mxu0 %v584
    %761 = vmatpush1.bf16.msra.mxu0 %v583
    %762 = vmatprep.subr.bf16.mxu0 %v573
    %763 = vmatpush1.bf16.msra.mxu0 %v572
    %764 = vmatprep.subr.bf16.mxu0 %v562
    %765 = vmatpush1.bf16.msra.mxu0 %v561
    %766 = vmatprep.subr.bf16.mxu0 %v551
    %767 = vmatpush1.bf16.msra.mxu0 %v550
    %768 = vmatprep.subr.bf16.mxu0 %v540
    %769 = vmatpush1.bf16.msra.mxu0 %v539
    %770 = vmatprep.subr.bf16.mxu0 0
    %771 = vmatpush2.bf16.msra.mxu0 0
    %772 = vmatprep.subr.bf16.mxu0 0
    %773 = vmatpush2.bf16.msra.mxu0 0
    %774 = vmatprep.subr.bf16.mxu0 0
    %775 = vmatpush2.bf16.msra.mxu0 0
    %776 = vmatprep.subr.bf16.mxu0 0
    %777 = vmatpush2.bf16.msra.mxu0 0
    %778 = vmatprep.subr.bf16.mxu0 0
    %779 = vmatpush2.bf16.msra.mxu0 0
    %780 = vmatprep.subr.bf16.mxu0 0
    %781 = vmatpush2.bf16.msra.mxu0 0
    %782 = vmatprep.subr.bf16.mxu0 0
    %783 = vmatpush2.bf16.msra.mxu0 0
    %784 = vmatprep.subr.bf16.mxu0 0
    %785 = vmatpush2.bf16.msra.mxu0 0
    %786 = vmatprep.mubr.bf16.mxu0 0
    %787 = vmatmul.mubr.bf16.gmra.mxu0 %v109
    %v788 = vpop.f32.mrf.mxu0
    %v789 = vadd.f32 %v221, %v788
    %v790 = vpop.f32.mrf.mxu0
    %v791 = vadd.f32 %v225, %v790
    %v792 = vpop.f32.mrf.mxu0
    %v793 = vpop.f32.mrf.mxu0
    %794 = vdwg.mxu0
    %795 = vmatprep.subr.bf16.mxu0 %v619
    %796 = vmatpush1.bf16.msra.mxu0 %v618
    %797 = vmatprep.subr.bf16.mxu0 %v608
    %798 = vmatpush1.bf16.msra.mxu0 %v607
    %799 = vmatprep.subr.bf16.mxu0 %v597
    %800 = vmatpush1.bf16.msra.mxu0 %v596
    %801 = vmatprep.subr.bf16.mxu0 %v586
    %802 = vmatpush1.bf16.msra.mxu0 %v585
    %803 = vmatprep.subr.bf16.mxu0 %v575
    %804 = vmatpush1.bf16.msra.mxu0 %v574
    %805 = vmatprep.subr.bf16.mxu0 %v564
    %806 = vmatpush1.bf16.msra.mxu0 %v563
    %807 = vmatprep.subr.bf16.mxu0 %v553
    %808 = vmatpush1.bf16.msra.mxu0 %v552
    %809 = vmatprep.subr.bf16.mxu0 %v542
    %810 = vmatpush1.bf16.msra.mxu0 %v541
    %811 = vmatprep.subr.bf16.mxu0 0
    %812 = vmatpush2.bf16.msra.mxu0 0
    %813 = vmatprep.subr.bf16.mxu0 0
    %814 = vmatpush2.bf16.msra.mxu0 0
    %815 = vmatprep.subr.bf16.mxu0 0
    %816 = vmatpush2.bf16.msra.mxu0 0
    %817 = vmatprep.subr.bf16.mxu0 0
    %818 = vmatpush2.bf16.msra.mxu0 0
    %819 = vmatprep.subr.bf16.mxu0 0
    %820 = vmatpush2.bf16.msra.mxu0 0
    %821 = vmatprep.subr.bf16.mxu0 0
    %822 = vmatpush2.bf16.msra.mxu0 0
    %823 = vmatprep.subr.bf16.mxu0 0
    %824 = vmatpush2.bf16.msra.mxu0 0
    %825 = vmatprep.subr.bf16.mxu0 0
    %826 = vmatpush2.bf16.msra.mxu0 0
    %827 = vmatprep.mubr.bf16.mxu0 0
    %828 = vmatmul.mubr.bf16.gmra.mxu0 %v109
    %v829 = vpop.f32.mrf.mxu0
    %v830 = vadd.f32 %v229, %v829
    %v831 = vpop.f32.mrf.mxu0
    %v832 = vadd.f32 %v233, %v831
    %v833 = vpop.f32.mrf.mxu0
    %v834 = vpop.f32.mrf.mxu0
    %835 = vdwg.mxu0
    %836 = vmatprep.subr.bf16.mxu0 %v621
    %837 = vmatpush1.bf16.msra.mxu0 %v620
    %838 = vmatprep.subr.bf16.mxu0 %v610
    %839 = vmatpush1.bf16.msra.mxu0 %v609
    %840 = vmatprep.subr.bf16.mxu0 %v599
    %841 = vmatpush1.bf16.msra.mxu0 %v598
    %842 = vmatprep.subr.bf16.mxu0 %v588
    %843 = vmatpush1.bf16.msra.mxu0 %v587
    %844 = vmatprep.subr.bf16.mxu0 %v577
    %845 = vmatpush1.bf16.msra.mxu0 %v576
    %846 = vmatprep.subr.bf16.mxu0 %v566
    %847 = vmatpush1.bf16.msra.mxu0 %v565
    %848 = vmatprep.subr.bf16.mxu0 %v555
    %849 = vmatpush1.bf16.msra.mxu0 %v554
    %850 = vmatprep.subr.bf16.mxu0 %v544
    %851 = vmatpush1.bf16.msra.mxu0 %v543
    %852 = vmatprep.subr.bf16.mxu0 0
    %853 = vmatpush2.bf16.msra.mxu0 0
    %854 = vmatprep.subr.bf16.mxu0 0
    %855 = vmatpush2.bf16.msra.mxu0 0
    %856 = vmatprep.subr.bf16.mxu0 0
    %857 = vmatpush2.bf16.msra.mxu0 0
    %858 = vmatprep.subr.bf16.mxu0 0
    %859 = vmatpush2.bf16.msra.mxu0 0
    %860 = vmatprep.subr.bf16.mxu0 0
    %861 = vmatpush2.bf16.msra.mxu0 0
    %862 = vmatprep.subr.bf16.mxu0 0
    %863 = vmatpush2.bf16.msra.mxu0 0
    %864 = vmatprep.subr.bf16.mxu0 0
    %865 = vmatpush2.bf16.msra.mxu0 0
    %866 = vmatprep.subr.bf16.mxu0 0
    %867 = vmatpush2.bf16.msra.mxu0 0
    %868 = vmatprep.mubr.bf16.mxu0 0
    %869 = vmatmul.mubr.bf16.gmra.mxu0 %v109
    %v870 = vpop.f32.mrf.mxu0
    %v871 = vadd.f32 %v237, %v870
    %v872 = vpop.f32.mrf.mxu0
    %v873 = vadd.f32 %v241, %v872
    %v874 = vpop.f32.mrf.mxu0
    %v875 = vpop.f32.mrf.mxu0
    %876 = vdwg.mxu0
    %877 = vmatprep.subr.bf16.mxu0 %v623
    %878 = vmatpush1.bf16.msra.mxu0 %v622
    %879 = vmatprep.subr.bf16.mxu0 %v612
    %880 = vmatpush1.bf16.msra.mxu0 %v611
    %881 = vmatprep.subr.bf16.mxu0 %v601
    %882 = vmatpush1.bf16.msra.mxu0 %v600
    %883 = vmatprep.subr.bf16.mxu0 %v590
    %884 = vmatpush1.bf16.msra.mxu0 %v589
    %885 = vmatprep.subr.bf16.mxu0 %v579
    %886 = vmatpush1.bf16.msra.mxu0 %v578
    %887 = vmatprep.subr.bf16.mxu0 %v568
    %888 = vmatpush1.bf16.msra.mxu0 %v567
    %889 = vmatprep.subr.bf16.mxu0 %v557
    %890 = vmatpush1.bf16.msra.mxu0 %v556
    %891 = vmatprep.subr.bf16.mxu0 %v546
    %892 = vmatpush1.bf16.msra.mxu0 %v545
    %893 = vmatprep.subr.bf16.mxu0 0
    %894 = vmatpush2.bf16.msra.mxu0 0
    %895 = vmatprep.subr.bf16.mxu0 0
    %896 = vmatpush2.bf16.msra.mxu0 0
    %897 = vmatprep.subr.bf16.mxu0 0
    %898 = vmatpush2.bf16.msra.mxu0 0
    %899 = vmatprep.subr.bf16.mxu0 0
    %900 = vmatpush2.bf16.msra.mxu0 0
    %901 = vmatprep.subr.bf16.mxu0 0
    %902 = vmatpush2.bf16.msra.mxu0 0
    %903 = vmatprep.subr.bf16.mxu0 0
    %904 = vmatpush2.bf16.msra.mxu0 0
    %905 = vmatprep.subr.bf16.mxu0 0
    %906 = vmatpush2.bf16.msra.mxu0 0
    %907 = vmatprep.subr.bf16.mxu0 0
    %908 = vmatpush2.bf16.msra.mxu0 0
    %909 = vmatprep.mubr.bf16.mxu0 0
    %910 = vmatmul.mubr.bf16.gmra.mxu0 %v109
    %v911 = vpop.f32.mrf.mxu0
    %v912 = vadd.f32 %v245, %v911
    %v913 = vpop.f32.mrf.mxu0
    %v914 = vadd.f32 %v249, %v913
    %v915 = vpop.f32.mrf.mxu0
    %v916 = vpop.f32.mrf.mxu0
    %917 = vdwg.mxu0
    %918 = vmatprep.subr.bf16.mxu0 0
    %919 = vmatpush1.bf16.msra.mxu0 %v624
    %920 = vmatprep.subr.bf16.mxu0 0
    %921 = vmatpush1.bf16.msra.mxu0 %v613
    %922 = vmatprep.subr.bf16.mxu0 0
    %923 = vmatpush1.bf16.msra.mxu0 %v602
    %924 = vmatprep.subr.bf16.mxu0 0
    %925 = vmatpush1.bf16.msra.mxu0 %v591
    %926 = vmatprep.subr.bf16.mxu0 0
    %927 = vmatpush1.bf16.msra.mxu0 %v580
    %928 = vmatprep.subr.bf16.mxu0 0
    %929 = vmatpush1.bf16.msra.mxu0 %v569
    %930 = vmatprep.subr.bf16.mxu0 0
    %931 = vmatpush1.bf16.msra.mxu0 %v558
    %932 = vmatprep.subr.bf16.mxu0 0
    %933 = vmatpush1.bf16.msra.mxu0 %v547
    %934 = vmatprep.subr.bf16.mxu0 0
    %935 = vmatpush2.bf16.msra.mxu0 0
    %936 = vmatprep.subr.bf16.mxu0 0
    %937 = vmatpush2.bf16.msra.mxu0 0
    %938 = vmatprep.subr.bf16.mxu0 0
    %939 = vmatpush2.bf16.msra.mxu0 0
    %940 = vmatprep.subr.bf16.mxu0 0
    %941 = vmatpush2.bf16.msra.mxu0 0
    %942 = vmatprep.subr.bf16.mxu0 0
    %943 = vmatpush2.bf16.msra.mxu0 0
    %944 = vmatprep.subr.bf16.mxu0 0
    %945 = vmatpush2.bf16.msra.mxu0 0
    %946 = vmatprep.subr.bf16.mxu0 0
    %947 = vmatpush2.bf16.msra.mxu0 0
    %948 = vmatprep.subr.bf16.mxu0 0
    %949 = vmatpush2.bf16.msra.mxu0 0
    %950 = vmatprep.mubr.bf16.mxu0 0
    %951 = vmatmul.mubr.bf16.gmra.mxu0 %v109
    %v952 = vpop.f32.mrf.mxu0
    %v953 = vadd.f32 %v253, %v952
    %v954 = vpop.f32.mrf.mxu0
    %v955 = vpop.f32.mrf.mxu0
    %v956 = vpop.f32.mrf.mxu0
    %957 = vdwg.mxu0
    %v958 = vmax.f32 %v748, 0.0
    %v959 = vmax.f32 %v750, 0.0
    %v960 = vmax.f32 %v789, 0.0
    %v961 = vmax.f32 %v791, 0.0
    %v962 = vmax.f32 %v830, 0.0
    %v963 = vmax.f32 %v832, 0.0
    %v964 = vmax.f32 %v871, 0.0
    %v965 = vmax.f32 %v873, 0.0
    %v966 = vmax.f32 %v912, 0.0
    %v967 = vmax.f32 %v914, 0.0
    %v968 = vmax.f32 %v953, 0.0
    %v969 = vld [vmem:[#allocation8] sm:$0xff]
    %v970 = vld [vmem:[#allocation8 + $0x8] sm:$0xff]
    %v971 = vld [vmem:[#allocation8 + $0x10] sm:$0xff]
    %v972 = vld [vmem:[#allocation8 + $0x18] sm:$0xff]
    %v973 = vld [vmem:[#allocation8 + $0x20] sm:$0xff]
    %v974 = vld [vmem:[#allocation8 + $0x28] sm:$0xff]
    %v975 = vld [vmem:[#allocation8 + $0x30] sm:$0xff]
    %v976 = vld [vmem:[#allocation8 + $0x38] sm:$0xff]
    %v977 = vld [vmem:[#allocation8 + $0x40] sm:$0xff]
    %v978 = vld [vmem:[#allocation8 + $0x48] sm:$0xff]
    %v979 = vld [vmem:[#allocation8 + $0x50] sm:$0xff]
    %v980 = vld [vmem:[#allocation8 + $0x58] sm:$0xff]
    %v981 = vld [vmem:[#allocation8 + $0x60] sm:$0xff]
    %v982 = vld [vmem:[#allocation8 + $0x68] sm:$0xff]
    %v983 = vld [vmem:[#allocation8 + $0x70] sm:$0xff]
    %v984 = vld [vmem:[#allocation8 + $0x78] sm:$0xff]
    %v985 = vld [vmem:[#allocation8 + $0x80] sm:$0xff]
    %v986 = vld [vmem:[#allocation8 + $0x88] sm:$0xff]
    %v987 = vld [vmem:[#allocation8 + $0x90] sm:$0xff]
    %v988 = vld [vmem:[#allocation8 + $0x98] sm:$0xff]
    %v989 = vld [vmem:[#allocation8 + $0xa0] sm:$0xff]
    %v990 = vld [vmem:[#allocation8 + $0xa8] sm:$0xff]
    %v991 = vld [vmem:[#allocation8 + $0xb0] sm:$0xff]
    %v992 = vld [vmem:[#allocation8 + $0xb8] sm:$0xff]
    %v993 = vld [vmem:[#allocation8 + $0xc0] sm:$0xff]
    %v994 = vld [vmem:[#allocation8 + $0xc8] sm:$0xff]
    %v995 = vld [vmem:[#allocation8 + $0xd0] sm:$0xff]
    %v996 = vld [vmem:[#allocation8 + $0xd8] sm:$0xff]
    %v997 = vld [vmem:[#allocation8 + $0xe0] sm:$0xff]
    %v998 = vld [vmem:[#allocation8 + $0xe8] sm:$0xff]
    %v999 = vld [vmem:[#allocation8 + $0xf0] sm:$0xff]
    %v1000 = vld [vmem:[#allocation8 + $0xf8] sm:$0xff]
    %v1001 = vld [vmem:[#allocation8 + $0x100] sm:$0xff]
    %v1002 = vld [vmem:[#allocation8 + $0x108] sm:$0xff]
    %v1003 = vld [vmem:[#allocation8 + $0x110] sm:$0xff]
    %v1004 = vld [vmem:[#allocation8 + $0x118] sm:$0xff]
    %v1005 = vld [vmem:[#allocation8 + $0x120] sm:$0xff]
    %v1006 = vld [vmem:[#allocation8 + $0x128] sm:$0xff]
    %v1007 = vld [vmem:[#allocation8 + $0x130] sm:$0xff]
    %v1008 = vld [vmem:[#allocation8 + $0x138] sm:$0xff]
    %v1009 = vld [vmem:[#allocation8 + $0x140] sm:$0xff]
    %v1010 = vld [vmem:[#allocation8 + $0x148] sm:$0xff]
    %v1011 = vld [vmem:[#allocation8 + $0x150] sm:$0xff]
    %v1012 = vld [vmem:[#allocation8 + $0x158] sm:$0xff]
    %v1013 = vld [vmem:[#allocation8 + $0x160] sm:$0xff]
    %v1014 = vld [vmem:[#allocation8 + $0x168] sm:$0xff]
    %v1015 = vld [vmem:[#allocation8 + $0x170] sm:$0xff]
    %v1016 = vld [vmem:[#allocation8 + $0x178] sm:$0xff]
    %v1017 = vld [vmem:[#allocation8 + $0x180] sm:$0xff]
    %v1018 = vld [vmem:[#allocation8 + $0x188] sm:$0xff]
    %v1019 = vld [vmem:[#allocation8 + $0x190] sm:$0xff]
    %v1020 = vld [vmem:[#allocation8 + $0x198] sm:$0xff]
    %v1021 = vld [vmem:[#allocation8 + $0x1a0] sm:$0xff]
    %v1022 = vld [vmem:[#allocation8 + $0x1a8] sm:$0xff]
    %v1023 = vld [vmem:[#allocation8 + $0x1b0] sm:$0xff]
    %v1024 = vld [vmem:[#allocation8 + $0x1b8] sm:$0xff]
    %v1025 = vld [vmem:[#allocation8 + $0x1c0] sm:$0xff]
    %v1026 = vld [vmem:[#allocation8 + $0x1c8] sm:$0xff]
    %v1027 = vld [vmem:[#allocation8 + $0x1d0] sm:$0xff]
    %v1028 = vld [vmem:[#allocation8 + $0x1d8] sm:$0xff]
    %v1029 = vld [vmem:[#allocation8 + $0x1e0] sm:$0xff]
    %v1030 = vld [vmem:[#allocation8 + $0x1e8] sm:$0xff]
    %v1031 = vld [vmem:[#allocation8 + $0x1f0] sm:$0xff]
    %v1032 = vld [vmem:[#allocation8 + $0x1f8] sm:$0xff]
    %v1033 = vld [vmem:[#allocation8 + $0x200] sm:$0xff]
    %v1034 = vld [vmem:[#allocation8 + $0x208] sm:$0xff]
    %v1035 = vld [vmem:[#allocation8 + $0x210] sm:$0xff]
    %v1036 = vld [vmem:[#allocation8 + $0x218] sm:$0xff]
    %v1037 = vld [vmem:[#allocation8 + $0x220] sm:$0xff]
    %v1038 = vld [vmem:[#allocation8 + $0x228] sm:$0xff]
    %v1039 = vld [vmem:[#allocation8 + $0x230] sm:$0xff]
    %v1040 = vld [vmem:[#allocation8 + $0x238] sm:$0xff]
    %v1041 = vld [vmem:[#allocation8 + $0x240] sm:$0xff]
    %v1042 = vld [vmem:[#allocation8 + $0x248] sm:$0xff]
    %v1043 = vld [vmem:[#allocation8 + $0x250] sm:$0xff]
    %v1044 = vld [vmem:[#allocation8 + $0x258] sm:$0xff]
    %v1045 = vld [vmem:[#allocation8 + $0x260] sm:$0xff]
    %v1046 = vld [vmem:[#allocation8 + $0x268] sm:$0xff]
    %v1047 = vld [vmem:[#allocation8 + $0x270] sm:$0xff]
    %v1048 = vld [vmem:[#allocation8 + $0x278] sm:$0xff]
    %v1049 = vld [vmem:[#allocation8 + $0x280] sm:$0xff]
    %v1050 = vld [vmem:[#allocation8 + $0x288] sm:$0xff]
    %v1051 = vld [vmem:[#allocation8 + $0x290] sm:$0xff]
    %v1052 = vld [vmem:[#allocation8 + $0x298] sm:$0xff]
    %v1053 = vld [vmem:[#allocation8 + $0x2a0] sm:$0xff]
    %v1054 = vld [vmem:[#allocation8 + $0x2a8] sm:$0xff]
    %v1055 = vld [vmem:[#allocation8 + $0x2b0] sm:$0xff]
    %v1056 = vld [vmem:[#allocation8 + $0x2b8] sm:$0xff]
    %v1057 = vld [vmem:[#allocation8 + $0x2c0] sm:$0xff]
    %v1058 = vld [vmem:[#allocation8 + $0x2c8] sm:$0xff]
    %v1059 = vld [vmem:[#allocation8 + $0x2d0] sm:$0xff]
    %v1060 = vld [vmem:[#allocation8 + $0x2d8] sm:$0xff]
    %v1061 = vld [vmem:[#allocation8 + $0x2e0] sm:$0xff]
    %v1062 = vld [vmem:[#allocation8 + $0x2e8] sm:$0xff]
    %v1063 = vld [vmem:[#allocation8 + $0x2f0] sm:$0xff]
    %v1064 = vld [vmem:[#allocation8 + $0x2f8] sm:$0xff]
    %v1065 = vld [vmem:[#allocation8 + $0x300] sm:$0xff]
    %v1066 = vld [vmem:[#allocation8 + $0x308] sm:$0xff]
    %v1067 = vld [vmem:[#allocation8 + $0x310] sm:$0xff]
    %v1068 = vld [vmem:[#allocation8 + $0x318] sm:$0xff]
    %v1069 = vld [vmem:[#allocation8 + $0x320] sm:$0xff]
    %v1070 = vld [vmem:[#allocation8 + $0x328] sm:$0xff]
    %v1071 = vld [vmem:[#allocation8 + $0x330] sm:$0xff]
    %v1072 = vld [vmem:[#allocation8 + $0x338] sm:$0xff]
    %v1073 = vld [vmem:[#allocation8 + $0x340] sm:$0xff]
    %v1074 = vld [vmem:[#allocation8 + $0x348] sm:$0xff]
    %v1075 = vld [vmem:[#allocation8 + $0x350] sm:$0xff]
    %v1076 = vld [vmem:[#allocation8 + $0x358] sm:$0xff]
    %v1077 = vld [vmem:[#allocation8 + $0x360] sm:$0xff]
    %v1078 = vld [vmem:[#allocation8 + $0x368] sm:$0xff]
    %v1079 = vld [vmem:[#allocation8 + $0x370] sm:$0xff]
    %v1080 = vld [vmem:[#allocation8 + $0x378] sm:$0xff]
    %v1081 = vld [vmem:[#allocation8 + $0x380] sm:$0xff]
    %v1082 = vld [vmem:[#allocation8 + $0x388] sm:$0xff]
    %v1083 = vld [vmem:[#allocation8 + $0x390] sm:$0xff]
    %v1084 = vld [vmem:[#allocation8 + $0x398] sm:$0xff]
    %v1085 = vld [vmem:[#allocation8 + $0x3a0] sm:$0xff]
    %v1086 = vld [vmem:[#allocation8 + $0x3a8] sm:$0xff]
    %v1087 = vld [vmem:[#allocation8 + $0x3b0] sm:$0xff]
    %v1088 = vld [vmem:[#allocation8 + $0x3b8] sm:$0xff]
    %v1089 = vld [vmem:[#allocation8 + $0x3c0] sm:$0xff]
    %v1090 = vld [vmem:[#allocation8 + $0x3c8] sm:$0xff]
    %v1091 = vld [vmem:[#allocation8 + $0x3d0] sm:$0xff]
    %v1092 = vld [vmem:[#allocation8 + $0x3d8] sm:$0xff]
    %v1093 = vld [vmem:[#allocation8 + $0x3e0] sm:$0xff]
    %v1094 = vld [vmem:[#allocation8 + $0x3e8] sm:$0xff]
    %v1095 = vld [vmem:[#allocation8 + $0x3f0] sm:$0xff]
    %v1096 = vld [vmem:[#allocation8 + $0x3f8] sm:$0xff]
    %v1097 = vld [vmem:[%s4] sm:$0x3]
    %v1099 = vlaneseq
    %v1100 = vshrl.u32 %v1099, 7
    %v1101 = vsub.s32 0, %v1100
    %v1102 = vrot.slane %v1097, %v1101
    %v1103 = vlaneseq
    %v1104 = vshrl.u32 %v1103, 7
    %v1105 = vsub.s32 1, %v1104
    %v1106 = vrot.slane %v1097, %v1105
    %1109 = vmatprep.subr.mxu0 %v1000
    %1110 = vmatpush1.msra.mxu0 %v999
    %1111 = vmatprep.subr.mxu0 %v998
    %1112 = vmatpush1.msra.mxu0 %v997
    %1113 = vmatprep.subr.mxu0 %v996
    %1114 = vmatpush1.msra.mxu0 %v995
    %1115 = vmatprep.subr.mxu0 %v994
    %1116 = vmatpush1.msra.mxu0 %v993
    %1117 = vmatprep.subr.mxu0 %v992
    %1118 = vmatpush1.msra.mxu0 %v991
    %1119 = vmatprep.subr.mxu0 %v990
    %1120 = vmatpush1.msra.mxu0 %v989
    %1121 = vmatprep.subr.mxu0 %v988
    %1122 = vmatpush1.msra.mxu0 %v987
    %1123 = vmatprep.subr.mxu0 %v986
    %1124 = vmatpush1.msra.mxu0 %v985
    %1125 = vmatprep.subr.mxu0 %v984
    %1126 = vmatpush1.msra.mxu0 %v983
    %1127 = vmatprep.subr.mxu0 %v982
    %1128 = vmatpush1.msra.mxu0 %v981
    %1129 = vmatprep.subr.mxu0 %v980
    %1130 = vmatpush1.msra.mxu0 %v979
    %1131 = vmatprep.subr.mxu0 %v978
    %1132 = vmatpush1.msra.mxu0 %v977
    %1133 = vmatprep.subr.mxu0 %v976
    %1134 = vmatpush1.msra.mxu0 %v975
    %1135 = vmatprep.subr.mxu0 %v974
    %1136 = vmatpush1.msra.mxu0 %v973
    %1137 = vmatprep.subr.mxu0 %v972
    %1138 = vmatpush1.msra.mxu0 %v971
    %1139 = vmatprep.subr.mxu0 %v970
    %1140 = vmatpush1.msra.mxu0 %v969
    %1141 = vmatprep.subr.mxu0 %v1032
    %1142 = vmatpush2.msra.mxu0 %v1031
    %1143 = vmatprep.subr.mxu0 %v1030
    %1144 = vmatpush2.msra.mxu0 %v1029
    %1145 = vmatprep.subr.mxu0 %v1028
    %1146 = vmatpush2.msra.mxu0 %v1027
    %1147 = vmatprep.subr.mxu0 %v1026
    %1148 = vmatpush2.msra.mxu0 %v1025
    %1149 = vmatprep.subr.mxu0 %v1024
    %1150 = vmatpush2.msra.mxu0 %v1023
    %1151 = vmatprep.subr.mxu0 %v1022
    %1152 = vmatpush2.msra.mxu0 %v1021
    %1153 = vmatprep.subr.mxu0 %v1020
    %1154 = vmatpush2.msra.mxu0 %v1019
    %1155 = vmatprep.subr.mxu0 %v1018
    %1156 = vmatpush2.msra.mxu0 %v1017
    %1157 = vmatprep.subr.mxu0 %v1016
    %1158 = vmatpush2.msra.mxu0 %v1015
    %1159 = vmatprep.subr.mxu0 %v1014
    %1160 = vmatpush2.msra.mxu0 %v1013
    %1161 = vmatprep.subr.mxu0 %v1012
    %1162 = vmatpush2.msra.mxu0 %v1011
    %1163 = vmatprep.subr.mxu0 %v1010
    %1164 = vmatpush2.msra.mxu0 %v1009
    %1165 = vmatprep.subr.mxu0 %v1008
    %1166 = vmatpush2.msra.mxu0 %v1007
    %1167 = vmatprep.subr.mxu0 %v1006
    %1168 = vmatpush2.msra.mxu0 %v1005
    %1169 = vmatprep.subr.mxu0 %v1004
    %1170 = vmatpush2.msra.mxu0 %v1003
    %1171 = vmatprep.subr.mxu0 %v1002
    %1172 = vmatpush2.msra.mxu0 %v1001
    %1173 = vmatprep.mubr.f32.mxu0 %v959
    %1174 = vmatmul.mubr.f32.gmra.mxu0 %v958
    %v1175 = vpop.f32.mrf.mxu0
    %v1176 = vadd.f32 %v1102, %v1175
    %v1177 = vpop.f32.mrf.mxu0
    %v1178 = vadd.f32 %v1106, %v1177
    %1179 = vdwg.mxu0
    %1180 = vmatprep.subr.mxu0 %v1064
    %1181 = vmatpush1.msra.mxu0 %v1063
    %1182 = vmatprep.subr.mxu0 %v1062
    %1183 = vmatpush1.msra.mxu0 %v1061
    %1184 = vmatprep.subr.mxu0 %v1060
    %1185 = vmatpush1.msra.mxu0 %v1059
    %1186 = vmatprep.subr.mxu0 %v1058
    %1187 = vmatpush1.msra.mxu0 %v1057
    %1188 = vmatprep.subr.mxu0 %v1056
    %1189 = vmatpush1.msra.mxu0 %v1055
    %1190 = vmatprep.subr.mxu0 %v1054
    %1191 = vmatpush1.msra.mxu0 %v1053
    %1192 = vmatprep.subr.mxu0 %v1052
    %1193 = vmatpush1.msra.mxu0 %v1051
    %1194 = vmatprep.subr.mxu0 %v1050
    %1195 = vmatpush1.msra.mxu0 %v1049
    %1196 = vmatprep.subr.mxu0 %v1048
    %1197 = vmatpush1.msra.mxu0 %v1047
    %1198 = vmatprep.subr.mxu0 %v1046
    %1199 = vmatpush1.msra.mxu0 %v1045
    %1200 = vmatprep.subr.mxu0 %v1044
    %1201 = vmatpush1.msra.mxu0 %v1043
    %1202 = vmatprep.subr.mxu0 %v1042
    %1203 = vmatpush1.msra.mxu0 %v1041
    %1204 = vmatprep.subr.mxu0 %v1040
    %1205 = vmatpush1.msra.mxu0 %v1039
    %1206 = vmatprep.subr.mxu0 %v1038
    %1207 = vmatpush1.msra.mxu0 %v1037
    %1208 = vmatprep.subr.mxu0 %v1036
    %1209 = vmatpush1.msra.mxu0 %v1035
    %1210 = vmatprep.subr.mxu0 %v1034
    %1211 = vmatpush1.msra.mxu0 %v1033
    %1212 = vmatprep.subr.mxu0 %v1096
    %1213 = vmatpush2.msra.mxu0 %v1095
    %1214 = vmatprep.subr.mxu0 %v1094
    %1215 = vmatpush2.msra.mxu0 %v1093
    %1216 = vmatprep.subr.mxu0 %v1092
    %1217 = vmatpush2.msra.mxu0 %v1091
    %1218 = vmatprep.subr.mxu0 %v1090
    %1219 = vmatpush2.msra.mxu0 %v1089
    %1220 = vmatprep.subr.mxu0 %v1088
    %1221 = vmatpush2.msra.mxu0 %v1087
    %1222 = vmatprep.subr.mxu0 %v1086
    %1223 = vmatpush2.msra.mxu0 %v1085
    %1224 = vmatprep.subr.mxu0 %v1084
    %1225 = vmatpush2.msra.mxu0 %v1083
    %1226 = vmatprep.subr.mxu0 %v1082
    %1227 = vmatpush2.msra.mxu0 %v1081
    %1228 = vmatprep.subr.mxu0 %v1080
    %1229 = vmatpush2.msra.mxu0 %v1079
    %1230 = vmatprep.subr.mxu0 %v1078
    %1231 = vmatpush2.msra.mxu0 %v1077
    %1232 = vmatprep.subr.mxu0 %v1076
    %1233 = vmatpush2.msra.mxu0 %v1075
    %1234 = vmatprep.subr.mxu0 %v1074
    %1235 = vmatpush2.msra.mxu0 %v1073
    %1236 = vmatprep.subr.mxu0 %v1072
    %1237 = vmatpush2.msra.mxu0 %v1071
    %1238 = vmatprep.subr.mxu0 %v1070
    %1239 = vmatpush2.msra.mxu0 %v1069
    %1240 = vmatprep.subr.mxu0 %v1068
    %1241 = vmatpush2.msra.mxu0 %v1067
    %1242 = vmatprep.subr.mxu0 %v1066
    %1243 = vmatpush2.msra.mxu0 %v1065
    %1244 = vmatprep.mubr.f32.mxu0 %v961
    %1245 = vmatmul.mubr.f32.gmra.mxu0 %v960
    %v1246 = vpop.f32.mrf.mxu0
    %v1247 = vadd.f32 %v1176, %v1246
    %v1248 = vpop.f32.mrf.mxu0
    %v1249 = vadd.f32 %v1178, %v1248
    %1250 = vdwg.mxu0
    %v1251 = vmax.f32 %v1247, 0.0
    %v1252 = vmax.f32 %v1249, 0.0
    %v1253 = vld [vmem:[#allocation10] sm:$0xff]
    %v1254 = vld [vmem:[#allocation10 + $0x8] sm:$0xff]
    %v1255 = vld [vmem:[#allocation10 + $0x10] sm:$0xff]
    %v1256 = vld [vmem:[#allocation10 + $0x18] sm:$0xff]
    %v1257 = vld [vmem:[#allocation10 + $0x20] sm:$0xff]
    %v1258 = vld [vmem:[#allocation10 + $0x28] sm:$0xff]
    %v1259 = vld [vmem:[#allocation10 + $0x30] sm:$0xff]
    %v1260 = vld [vmem:[#allocation10 + $0x38] sm:$0xff]
    %v1261 = vld [vmem:[#allocation10 + $0x40] sm:$0xff]
    %v1262 = vld [vmem:[#allocation10 + $0x48] sm:$0xff]
    %v1263 = vld [vmem:[#allocation10 + $0x50] sm:$0xff]
    %v1264 = vld [vmem:[#allocation10 + $0x58] sm:$0xff]
    %v1265 = vld [vmem:[#allocation10 + $0x60] sm:$0xff]
    %v1266 = vld [vmem:[#allocation10 + $0x68] sm:$0xff]
    %v1267 = vld [vmem:[#allocation10 + $0x70] sm:$0xff]
    %v1268 = vld [vmem:[#allocation10 + $0x78] sm:$0xff]
    %v1269 = vld [vmem:[#allocation10 + $0x80] sm:$0xff]
    %v1270 = vld [vmem:[#allocation10 + $0x88] sm:$0xff]
    %v1271 = vld [vmem:[#allocation10 + $0x90] sm:$0xff]
    %v1272 = vld [vmem:[#allocation10 + $0x98] sm:$0xff]
    %v1273 = vld [vmem:[#allocation10 + $0xa0] sm:$0xff]
    %v1274 = vld [vmem:[#allocation10 + $0xa8] sm:$0xff]
    %v1275 = vld [vmem:[#allocation10 + $0xb0] sm:$0xff]
    %v1276 = vld [vmem:[#allocation10 + $0xb8] sm:$0xff]
    %v1277 = vld [vmem:[#allocation10 + $0xc0] sm:$0xff]
    %v1278 = vld [vmem:[#allocation10 + $0xc8] sm:$0xff]
    %v1279 = vld [vmem:[#allocation10 + $0xd0] sm:$0xff]
    %v1280 = vld [vmem:[#allocation10 + $0xd8] sm:$0xff]
    %v1281 = vld [vmem:[#allocation10 + $0xe0] sm:$0xff]
    %v1282 = vld [vmem:[#allocation10 + $0xe8] sm:$0xff]
    %v1283 = vld [vmem:[#allocation10 + $0xf0] sm:$0xff]
    %v1284 = vld [vmem:[#allocation10 + $0xf8] sm:$0xff]
    %v1285 = vld [vmem:[#allocation11] sm:$0xff]
    %v1286 = vld [vmem:[#allocation11 + $0x8] sm:$0xff]
    %v1287 = vld [vmem:[#allocation11 + $0x10] sm:$0xff]
    %v1288 = vld [vmem:[#allocation11 + $0x18] sm:$0xff]
    %v1289 = vld [vmem:[#allocation11 + $0x20] sm:$0xff]
    %v1290 = vld [vmem:[#allocation11 + $0x28] sm:$0xff]
    %v1291 = vld [vmem:[#allocation11 + $0x30] sm:$0xff]
    %v1292 = vld [vmem:[#allocation11 + $0x38] sm:$0xff]
    %v1293 = vld [vmem:[#allocation11 + $0x40] sm:$0xff]
    %v1294 = vld [vmem:[#allocation11 + $0x48] sm:$0xff]
    %v1295 = vld [vmem:[#allocation11 + $0x50] sm:$0xff]
    %v1296 = vld [vmem:[#allocation11 + $0x58] sm:$0xff]
    %v1297 = vld [vmem:[#allocation11 + $0x60] sm:$0xff]
    %v1298 = vld [vmem:[#allocation11 + $0x68] sm:$0xff]
    %v1299 = vld [vmem:[#allocation11 + $0x70] sm:$0xff]
    %v1300 = vld [vmem:[#allocation11 + $0x78] sm:$0xff]
    %v1301 = vld [vmem:[#allocation11 + $0x80] sm:$0xff]
    %v1302 = vld [vmem:[#allocation11 + $0x88] sm:$0xff]
    %v1303 = vld [vmem:[#allocation11 + $0x90] sm:$0xff]
    %v1304 = vld [vmem:[#allocation11 + $0x98] sm:$0xff]
    %v1305 = vld [vmem:[#allocation11 + $0xa0] sm:$0xff]
    %v1306 = vld [vmem:[#allocation11 + $0xa8] sm:$0xff]
    %v1307 = vld [vmem:[#allocation11 + $0xb0] sm:$0xff]
    %v1308 = vld [vmem:[#allocation11 + $0xb8] sm:$0xff]
    %v1309 = vld [vmem:[#allocation11 + $0xc0] sm:$0xff]
    %v1310 = vld [vmem:[#allocation11 + $0xc8] sm:$0xff]
    %v1311 = vld [vmem:[#allocation11 + $0xd0] sm:$0xff]
    %v1312 = vld [vmem:[#allocation11 + $0xd8] sm:$0xff]
    %v1313 = vld [vmem:[#allocation11 + $0xe0] sm:$0xff]
    %v1314 = vld [vmem:[#allocation11 + $0xe8] sm:$0xff]
    %v1315 = vld [vmem:[#allocation11 + $0xf0] sm:$0xff]
    %v1316 = vld [vmem:[#allocation11 + $0xf8] sm:$0xff]
    %v1317 = vld [vmem:[#allocation11 + $0x100] sm:$0xff]
    %v1318 = vld [vmem:[#allocation11 + $0x108] sm:$0xff]
    %v1319 = vld [vmem:[#allocation11 + $0x110] sm:$0xff]
    %v1320 = vld [vmem:[#allocation11 + $0x118] sm:$0xff]
    %v1321 = vld [vmem:[#allocation11 + $0x120] sm:$0xff]
    %v1322 = vld [vmem:[#allocation11 + $0x128] sm:$0xff]
    %v1323 = vld [vmem:[#allocation11 + $0x130] sm:$0xff]
    %v1324 = vld [vmem:[#allocation11 + $0x138] sm:$0xff]
    %v1325 = vld [vmem:[#allocation11 + $0x140] sm:$0xff]
    %v1326 = vld [vmem:[#allocation11 + $0x148] sm:$0xff]
    %v1327 = vld [vmem:[#allocation11 + $0x150] sm:$0xff]
    %v1328 = vld [vmem:[#allocation11 + $0x158] sm:$0xff]
    %v1329 = vld [vmem:[#allocation11 + $0x160] sm:$0xff]
    %v1330 = vld [vmem:[#allocation11 + $0x168] sm:$0xff]
    %v1331 = vld [vmem:[#allocation11 + $0x170] sm:$0xff]
    %v1332 = vld [vmem:[#allocation11 + $0x178] sm:$0xff]
    %v1333 = vld [vmem:[#allocation11 + $0x180] sm:$0xff]
    %v1334 = vld [vmem:[#allocation11 + $0x188] sm:$0xff]
    %v1335 = vld [vmem:[#allocation11 + $0x190] sm:$0xff]
    %v1336 = vld [vmem:[#allocation11 + $0x198] sm:$0xff]
    %v1337 = vld [vmem:[#allocation11 + $0x1a0] sm:$0xff]
    %v1338 = vld [vmem:[#allocation11 + $0x1a8] sm:$0xff]
    %v1339 = vld [vmem:[#allocation11 + $0x1b0] sm:$0xff]
    %v1340 = vld [vmem:[#allocation11 + $0x1b8] sm:$0xff]
    %v1341 = vld [vmem:[#allocation11 + $0x1c0] sm:$0xff]
    %v1342 = vld [vmem:[#allocation11 + $0x1c8] sm:$0xff]
    %v1343 = vld [vmem:[#allocation11 + $0x1d0] sm:$0xff]
    %v1344 = vld [vmem:[#allocation11 + $0x1d8] sm:$0xff]
    %v1345 = vld [vmem:[#allocation11 + $0x1e0] sm:$0xff]
    %v1346 = vld [vmem:[#allocation11 + $0x1e8] sm:$0xff]
    %v1347 = vld [vmem:[#allocation11 + $0x1f0] sm:$0xff]
    %v1348 = vld [vmem:[#allocation11 + $0x1f8] sm:$0xff]
    %v1349 = vld [vmem:[#allocation11 + $0x200] sm:$0xff]
    %v1350 = vld [vmem:[#allocation11 + $0x208] sm:$0xff]
    %v1351 = vld [vmem:[#allocation11 + $0x210] sm:$0xff]
    %v1352 = vld [vmem:[#allocation11 + $0x218] sm:$0xff]
    %v1353 = vld [vmem:[#allocation11 + $0x220] sm:$0xff]
    %v1354 = vld [vmem:[#allocation11 + $0x228] sm:$0xff]
    %v1355 = vld [vmem:[#allocation11 + $0x230] sm:$0xff]
    %v1356 = vld [vmem:[#allocation11 + $0x238] sm:$0xff]
    %v1357 = vld [vmem:[#allocation11 + $0x240] sm:$0xff]
    %v1358 = vld [vmem:[#allocation11 + $0x248] sm:$0xff]
    %v1359 = vld [vmem:[#allocation11 + $0x250] sm:$0xff]
    %v1360 = vld [vmem:[#allocation11 + $0x258] sm:$0xff]
    %v1361 = vld [vmem:[#allocation11 + $0x260] sm:$0xff]
    %v1362 = vld [vmem:[#allocation11 + $0x268] sm:$0xff]
    %v1363 = vld [vmem:[#allocation11 + $0x270] sm:$0xff]
    %v1364 = vld [vmem:[#allocation11 + $0x278] sm:$0xff]
    %v1365 = vld [vmem:[#allocation11 + $0x280] sm:$0xff]
    %v1366 = vld [vmem:[#allocation11 + $0x288] sm:$0xff]
    %v1367 = vld [vmem:[#allocation11 + $0x290] sm:$0xff]
    %v1368 = vld [vmem:[#allocation11 + $0x298] sm:$0xff]
    %v1369 = vld [vmem:[#allocation11 + $0x2a0] sm:$0xff]
    %v1370 = vld [vmem:[#allocation11 + $0x2a8] sm:$0xff]
    %v1371 = vld [vmem:[#allocation11 + $0x2b0] sm:$0xff]
    %v1372 = vld [vmem:[#allocation11 + $0x2b8] sm:$0xff]
    %v1373 = vld [vmem:[#allocation11 + $0x2c0] sm:$0xff]
    %v1374 = vld [vmem:[#allocation11 + $0x2c8] sm:$0xff]
    %v1375 = vld [vmem:[#allocation11 + $0x2d0] sm:$0xff]
    %v1376 = vld [vmem:[#allocation11 + $0x2d8] sm:$0xff]
    %v1377 = vld [vmem:[#allocation11 + $0x2e0] sm:$0xff]
    %v1378 = vld [vmem:[#allocation11 + $0x2e8] sm:$0xff]
    %v1379 = vld [vmem:[#allocation11 + $0x2f0] sm:$0xff]
    %v1380 = vld [vmem:[#allocation11 + $0x2f8] sm:$0xff]
    %v1381 = vld [vmem:[#allocation11 + $0x300] sm:$0xff]
    %v1382 = vld [vmem:[#allocation11 + $0x308] sm:$0xff]
    %v1383 = vld [vmem:[#allocation11 + $0x310] sm:$0xff]
    %v1384 = vld [vmem:[#allocation11 + $0x318] sm:$0xff]
    %v1385 = vld [vmem:[#allocation11 + $0x320] sm:$0xff]
    %v1386 = vld [vmem:[#allocation11 + $0x328] sm:$0xff]
    %v1387 = vld [vmem:[#allocation11 + $0x330] sm:$0xff]
    %v1388 = vld [vmem:[#allocation11 + $0x338] sm:$0xff]
    %v1389 = vld [vmem:[#allocation11 + $0x340] sm:$0xff]
    %v1390 = vld [vmem:[#allocation11 + $0x348] sm:$0xff]
    %v1391 = vld [vmem:[#allocation11 + $0x350] sm:$0xff]
    %v1392 = vld [vmem:[#allocation11 + $0x358] sm:$0xff]
    %v1393 = vld [vmem:[#allocation11 + $0x360] sm:$0xff]
    %v1394 = vld [vmem:[#allocation11 + $0x368] sm:$0xff]
    %v1395 = vld [vmem:[#allocation11 + $0x370] sm:$0xff]
    %v1396 = vld [vmem:[#allocation11 + $0x378] sm:$0xff]
    %1397 = vmatprep.subr.mxu0 0.0
    %1398 = vmatpush1.msra.mxu0 %v1300
    %1399 = vmatprep.subr.mxu0 0.0
    %1400 = vmatpush1.msra.mxu0 %v1299
    %1401 = vmatprep.subr.mxu0 0.0
    %1402 = vmatpush1.msra.mxu0 %v1298
    %1403 = vmatprep.subr.mxu0 0.0
    %1404 = vmatpush1.msra.mxu0 %v1297
    %1405 = vmatprep.subr.mxu0 0.0
    %1406 = vmatpush1.msra.mxu0 %v1296
    %1407 = vmatprep.subr.mxu0 0.0
    %1408 = vmatpush1.msra.mxu0 %v1295
    %1409 = vmatprep.subr.mxu0 0.0
    %1410 = vmatpush1.msra.mxu0 %v1294
    %1411 = vmatprep.subr.mxu0 0.0
    %1412 = vmatpush1.msra.mxu0 %v1293
    %1413 = vmatprep.subr.mxu0 0.0
    %1414 = vmatpush1.msra.mxu0 %v1292
    %1415 = vmatprep.subr.mxu0 0.0
    %1416 = vmatpush1.msra.mxu0 %v1291
    %1417 = vmatprep.subr.mxu0 0.0
    %1418 = vmatpush1.msra.mxu0 %v1290
    %1419 = vmatprep.subr.mxu0 0.0
    %1420 = vmatpush1.msra.mxu0 %v1289
    %1421 = vmatprep.subr.mxu0 0.0
    %1422 = vmatpush1.msra.mxu0 %v1288
    %1423 = vmatprep.subr.mxu0 0.0
    %1424 = vmatpush1.msra.mxu0 %v1287
    %1425 = vmatprep.subr.mxu0 0.0
    %1426 = vmatpush1.msra.mxu0 %v1286
    %1427 = vmatprep.subr.mxu0 0.0
    %1428 = vmatpush1.msra.mxu0 %v1285
    %1429 = vmatprep.subr.mxu0 0.0
    %1430 = vmatpush2.msra.mxu0 %v1316
    %1431 = vmatprep.subr.mxu0 0.0
    %1432 = vmatpush2.msra.mxu0 %v1315
    %1433 = vmatprep.subr.mxu0 0.0
    %1434 = vmatpush2.msra.mxu0 %v1314
    %1435 = vmatprep.subr.mxu0 0.0
    %1436 = vmatpush2.msra.mxu0 %v1313
    %1437 = vmatprep.subr.mxu0 0.0
    %1438 = vmatpush2.msra.mxu0 %v1312
    %1439 = vmatprep.subr.mxu0 0.0
    %1440 = vmatpush2.msra.mxu0 %v1311
    %1441 = vmatprep.subr.mxu0 0.0
    %1442 = vmatpush2.msra.mxu0 %v1310
    %1443 = vmatprep.subr.mxu0 0.0
    %1444 = vmatpush2.msra.mxu0 %v1309
    %1445 = vmatprep.subr.mxu0 0.0
    %1446 = vmatpush2.msra.mxu0 %v1308
    %1447 = vmatprep.subr.mxu0 0.0
    %1448 = vmatpush2.msra.mxu0 %v1307
    %1449 = vmatprep.subr.mxu0 0.0
    %1450 = vmatpush2.msra.mxu0 %v1306
    %1451 = vmatprep.subr.mxu0 0.0
    %1452 = vmatpush2.msra.mxu0 %v1305
    %1453 = vmatprep.subr.mxu0 0.0
    %1454 = vmatpush2.msra.mxu0 %v1304
    %1455 = vmatprep.subr.mxu0 0.0
    %1456 = vmatpush2.msra.mxu0 %v1303
    %1457 = vmatprep.subr.mxu0 0.0
    %1458 = vmatpush2.msra.mxu0 %v1302
    %1459 = vmatprep.subr.mxu0 0.0
    %1460 = vmatpush2.msra.mxu0 %v1301
    %1461 = vmatprep.mubr.f32.mxu0 %v963
    %1462 = vmatmul.mubr.f32.gmra.mxu0 %v962
    %v1463 = vpop.f32.mrf.mxu0
    %v1464 = vadd.f32 0.0, %v1463
    %v1465 = vpop.f32.mrf.mxu0
    %1466 = vdwg.mxu0
    %1467 = vmatprep.subr.mxu0 0.0
    %1468 = vmatpush1.msra.mxu0 %v1332
    %1469 = vmatprep.subr.mxu0 0.0
    %1470 = vmatpush1.msra.mxu0 %v1331
    %1471 = vmatprep.subr.mxu0 0.0
    %1472 = vmatpush1.msra.mxu0 %v1330
    %1473 = vmatprep.subr.mxu0 0.0
    %1474 = vmatpush1.msra.mxu0 %v1329
    %1475 = vmatprep.subr.mxu0 0.0
    %1476 = vmatpush1.msra.mxu0 %v1328
    %1477 = vmatprep.subr.mxu0 0.0
    %1478 = vmatpush1.msra.mxu0 %v1327
    %1479 = vmatprep.subr.mxu0 0.0
    %1480 = vmatpush1.msra.mxu0 %v1326
    %1481 = vmatprep.subr.mxu0 0.0
    %1482 = vmatpush1.msra.mxu0 %v1325
    %1483 = vmatprep.subr.mxu0 0.0
    %1484 = vmatpush1.msra.mxu0 %v1324
    %1485 = vmatprep.subr.mxu0 0.0
    %1486 = vmatpush1.msra.mxu0 %v1323
    %1487 = vmatprep.subr.mxu0 0.0
    %1488 = vmatpush1.msra.mxu0 %v1322
    %1489 = vmatprep.subr.mxu0 0.0
    %1490 = vmatpush1.msra.mxu0 %v1321
    %1491 = vmatprep.subr.mxu0 0.0
    %1492 = vmatpush1.msra.mxu0 %v1320
    %1493 = vmatprep.subr.mxu0 0.0
    %1494 = vmatpush1.msra.mxu0 %v1319
    %1495 = vmatprep.subr.mxu0 0.0
    %1496 = vmatpush1.msra.mxu0 %v1318
    %1497 = vmatprep.subr.mxu0 0.0
    %1498 = vmatpush1.msra.mxu0 %v1317
    %1499 = vmatprep.subr.mxu0 0.0
    %1500 = vmatpush2.msra.mxu0 %v1348
    %1501 = vmatprep.subr.mxu0 0.0
    %1502 = vmatpush2.msra.mxu0 %v1347
    %1503 = vmatprep.subr.mxu0 0.0
    %1504 = vmatpush2.msra.mxu0 %v1346
    %1505 = vmatprep.subr.mxu0 0.0
    %1506 = vmatpush2.msra.mxu0 %v1345
    %1507 = vmatprep.subr.mxu0 0.0
    %1508 = vmatpush2.msra.mxu0 %v1344
    %1509 = vmatprep.subr.mxu0 0.0
    %1510 = vmatpush2.msra.mxu0 %v1343
    %1511 = vmatprep.subr.mxu0 0.0
    %1512 = vmatpush2.msra.mxu0 %v1342
    %1513 = vmatprep.subr.mxu0 0.0
    %1514 = vmatpush2.msra.mxu0 %v1341
    %1515 = vmatprep.subr.mxu0 0.0
    %1516 = vmatpush2.msra.mxu0 %v1340
    %1517 = vmatprep.subr.mxu0 0.0
    %1518 = vmatpush2.msra.mxu0 %v1339
    %1519 = vmatprep.subr.mxu0 0.0
    %1520 = vmatpush2.msra.mxu0 %v1338
    %1521 = vmatprep.subr.mxu0 0.0
    %1522 = vmatpush2.msra.mxu0 %v1337
    %1523 = vmatprep.subr.mxu0 0.0
    %1524 = vmatpush2.msra.mxu0 %v1336
    %1525 = vmatprep.subr.mxu0 0.0
    %1526 = vmatpush2.msra.mxu0 %v1335
    %1527 = vmatprep.subr.mxu0 0.0
    %1528 = vmatpush2.msra.mxu0 %v1334
    %1529 = vmatprep.subr.mxu0 0.0
    %1530 = vmatpush2.msra.mxu0 %v1333
    %1531 = vmatprep.mubr.f32.mxu0 %v965
    %1532 = vmatmul.mubr.f32.gmra.mxu0 %v964
    %v1533 = vpop.f32.mrf.mxu0
    %v1534 = vadd.f32 %v1464, %v1533
    %v1535 = vpop.f32.mrf.mxu0
    %1536 = vdwg.mxu0
    %1537 = vmatprep.subr.mxu0 0.0
    %1538 = vmatpush1.msra.mxu0 %v1364
    %1539 = vmatprep.subr.mxu0 0.0
    %1540 = vmatpush1.msra.mxu0 %v1363
    %1541 = vmatprep.subr.mxu0 0.0
    %1542 = vmatpush1.msra.mxu0 %v1362
    %1543 = vmatprep.subr.mxu0 0.0
    %1544 = vmatpush1.msra.mxu0 %v1361
    %1545 = vmatprep.subr.mxu0 0.0
    %1546 = vmatpush1.msra.mxu0 %v1360
    %1547 = vmatprep.subr.mxu0 0.0
    %1548 = vmatpush1.msra.mxu0 %v1359
    %1549 = vmatprep.subr.mxu0 0.0
    %1550 = vmatpush1.msra.mxu0 %v1358
    %1551 = vmatprep.subr.mxu0 0.0
    %1552 = vmatpush1.msra.mxu0 %v1357
    %1553 = vmatprep.subr.mxu0 0.0
    %1554 = vmatpush1.msra.mxu0 %v1356
    %1555 = vmatprep.subr.mxu0 0.0
    %1556 = vmatpush1.msra.mxu0 %v1355
    %1557 = vmatprep.subr.mxu0 0.0
    %1558 = vmatpush1.msra.mxu0 %v1354
    %1559 = vmatprep.subr.mxu0 0.0
    %1560 = vmatpush1.msra.mxu0 %v1353
    %1561 = vmatprep.subr.mxu0 0.0
    %1562 = vmatpush1.msra.mxu0 %v1352
    %1563 = vmatprep.subr.mxu0 0.0
    %1564 = vmatpush1.msra.mxu0 %v1351
    %1565 = vmatprep.subr.mxu0 0.0
    %1566 = vmatpush1.msra.mxu0 %v1350
    %1567 = vmatprep.subr.mxu0 0.0
    %1568 = vmatpush1.msra.mxu0 %v1349
    %1569 = vmatprep.subr.mxu0 0.0
    %1570 = vmatpush2.msra.mxu0 %v1380
    %1571 = vmatprep.subr.mxu0 0.0
    %1572 = vmatpush2.msra.mxu0 %v1379
    %1573 = vmatprep.subr.mxu0 0.0
    %1574 = vmatpush2.msra.mxu0 %v1378
    %1575 = vmatprep.subr.mxu0 0.0
    %1576 = vmatpush2.msra.mxu0 %v1377
    %1577 = vmatprep.subr.mxu0 0.0
    %1578 = vmatpush2.msra.mxu0 %v1376
    %1579 = vmatprep.subr.mxu0 0.0
    %1580 = vmatpush2.msra.mxu0 %v1375
    %1581 = vmatprep.subr.mxu0 0.0
    %1582 = vmatpush2.msra.mxu0 %v1374
    %1583 = vmatprep.subr.mxu0 0.0
    %1584 = vmatpush2.msra.mxu0 %v1373
    %1585 = vmatprep.subr.mxu0 0.0
    %1586 = vmatpush2.msra.mxu0 %v1372
    %1587 = vmatprep.subr.mxu0 0.0
    %1588 = vmatpush2.msra.mxu0 %v1371
    %1589 = vmatprep.subr.mxu0 0.0
    %1590 = vmatpush2.msra.mxu0 %v1370
    %1591 = vmatprep.subr.mxu0 0.0
    %1592 = vmatpush2.msra.mxu0 %v1369
    %1593 = vmatprep.subr.mxu0 0.0
    %1594 = vmatpush2.msra.mxu0 %v1368
    %1595 = vmatprep.subr.mxu0 0.0
    %1596 = vmatpush2.msra.mxu0 %v1367
    %1597 = vmatprep.subr.mxu0 0.0
    %1598 = vmatpush2.msra.mxu0 %v1366
    %1599 = vmatprep.subr.mxu0 0.0
    %1600 = vmatpush2.msra.mxu0 %v1365
    %1601 = vmatprep.mubr.f32.mxu0 %v967
    %1602 = vmatmul.mubr.f32.gmra.mxu0 %v966
    %v1603 = vpop.f32.mrf.mxu0
    %v1604 = vadd.f32 %v1534, %v1603
    %v1605 = vpop.f32.mrf.mxu0
    %1606 = vdwg.mxu0
    %1607 = vmatprep.subr.mxu0 0.0
    %1608 = vmatpush1.msra.mxu0 %v1396
    %1609 = vmatprep.subr.mxu0 0.0
    %1610 = vmatpush1.msra.mxu0 %v1395
    %1611 = vmatprep.subr.mxu0 0.0
    %1612 = vmatpush1.msra.mxu0 %v1394
    %1613 = vmatprep.subr.mxu0 0.0
    %1614 = vmatpush1.msra.mxu0 %v1393
    %1615 = vmatprep.subr.mxu0 0.0
    %1616 = vmatpush1.msra.mxu0 %v1392
    %1617 = vmatprep.subr.mxu0 0.0
    %1618 = vmatpush1.msra.mxu0 %v1391
    %1619 = vmatprep.subr.mxu0 0.0
    %1620 = vmatpush1.msra.mxu0 %v1390
    %1621 = vmatprep.subr.mxu0 0.0
    %1622 = vmatpush1.msra.mxu0 %v1389
    %1623 = vmatprep.subr.mxu0 0.0
    %1624 = vmatpush1.msra.mxu0 %v1388
    %1625 = vmatprep.subr.mxu0 0.0
    %1626 = vmatpush1.msra.mxu0 %v1387
    %1627 = vmatprep.subr.mxu0 0.0
    %1628 = vmatpush1.msra.mxu0 %v1386
    %1629 = vmatprep.subr.mxu0 0.0
    %1630 = vmatpush1.msra.mxu0 %v1385
    %1631 = vmatprep.subr.mxu0 0.0
    %1632 = vmatpush1.msra.mxu0 %v1384
    %1633 = vmatprep.subr.mxu0 0.0
    %1634 = vmatpush1.msra.mxu0 %v1383
    %1635 = vmatprep.subr.mxu0 0.0
    %1636 = vmatpush1.msra.mxu0 %v1382
    %1637 = vmatprep.subr.mxu0 0.0
    %1638 = vmatpush1.msra.mxu0 %v1381
    %1639 = vmatprep.subr.mxu0 0.0
    %1640 = vmatpush2.msra.mxu0 0.0
    %1641 = vmatprep.subr.mxu0 0.0
    %1642 = vmatpush2.msra.mxu0 0.0
    %1643 = vmatprep.subr.mxu0 0.0
    %1644 = vmatpush2.msra.mxu0 0.0
    %1645 = vmatprep.subr.mxu0 0.0
    %1646 = vmatpush2.msra.mxu0 0.0
    %1647 = vmatprep.subr.mxu0 0.0
    %1648 = vmatpush2.msra.mxu0 0.0
    %1649 = vmatprep.subr.mxu0 0.0
    %1650 = vmatpush2.msra.mxu0 0.0
    %1651 = vmatprep.subr.mxu0 0.0
    %1652 = vmatpush2.msra.mxu0 0.0
    %1653 = vmatprep.subr.mxu0 0.0
    %1654 = vmatpush2.msra.mxu0 0.0
    %1655 = vmatprep.subr.mxu0 0.0
    %1656 = vmatpush2.msra.mxu0 0.0
    %1657 = vmatprep.subr.mxu0 0.0
    %1658 = vmatpush2.msra.mxu0 0.0
    %1659 = vmatprep.subr.mxu0 0.0
    %1660 = vmatpush2.msra.mxu0 0.0
    %1661 = vmatprep.subr.mxu0 0.0
    %1662 = vmatpush2.msra.mxu0 0.0
    %1663 = vmatprep.subr.mxu0 0.0
    %1664 = vmatpush2.msra.mxu0 0.0
    %1665 = vmatprep.subr.mxu0 0.0
    %1666 = vmatpush2.msra.mxu0 0.0
    %1667 = vmatprep.subr.mxu0 0.0
    %1668 = vmatpush2.msra.mxu0 0.0
    %1669 = vmatprep.subr.mxu0 0.0
    %1670 = vmatpush2.msra.mxu0 0.0
    %1671 = vmatprep.mubr.f32.mxu0 0.0
    %1672 = vmatmul.mubr.f32.gmra.mxu0 %v968
    %v1673 = vpop.f32.mrf.mxu0
    %v1674 = vadd.f32 %v1604, %v1673
    %v1675 = vpop.f32.mrf.mxu0
    %1676 = vdwg.mxu0
    %1677 = vmatprep.subr.mxu0 0.0
    %1678 = vmatpush1.msra.mxu0 %v1268
    %1679 = vmatprep.subr.mxu0 0.0
    %1680 = vmatpush1.msra.mxu0 %v1267
    %1681 = vmatprep.subr.mxu0 0.0
    %1682 = vmatpush1.msra.mxu0 %v1266
    %1683 = vmatprep.subr.mxu0 0.0
    %1684 = vmatpush1.msra.mxu0 %v1265
    %1685 = vmatprep.subr.mxu0 0.0
    %1686 = vmatpush1.msra.mxu0 %v1264
    %1687 = vmatprep.subr.mxu0 0.0
    %1688 = vmatpush1.msra.mxu0 %v1263
    %1689 = vmatprep.subr.mxu0 0.0
    %1690 = vmatpush1.msra.mxu0 %v1262
    %1691 = vmatprep.subr.mxu0 0.0
    %1692 = vmatpush1.msra.mxu0 %v1261
    %1693 = vmatprep.subr.mxu0 0.0
    %1694 = vmatpush1.msra.mxu0 %v1260
    %1695 = vmatprep.subr.mxu0 0.0
    %1696 = vmatpush1.msra.mxu0 %v1259
    %1697 = vmatprep.subr.mxu0 0.0
    %1698 = vmatpush1.msra.mxu0 %v1258
    %1699 = vmatprep.subr.mxu0 0.0
    %1700 = vmatpush1.msra.mxu0 %v1257
    %1701 = vmatprep.subr.mxu0 0.0
    %1702 = vmatpush1.msra.mxu0 %v1256
    %1703 = vmatprep.subr.mxu0 0.0
    %1704 = vmatpush1.msra.mxu0 %v1255
    %1705 = vmatprep.subr.mxu0 0.0
    %1706 = vmatpush1.msra.mxu0 %v1254
    %1707 = vmatprep.subr.mxu0 0.0
    %1708 = vmatpush1.msra.mxu0 %v1253
    %1709 = vmatprep.subr.mxu0 0.0
    %1710 = vmatpush2.msra.mxu0 %v1284
    %1711 = vmatprep.subr.mxu0 0.0
    %1712 = vmatpush2.msra.mxu0 %v1283
    %1713 = vmatprep.subr.mxu0 0.0
    %1714 = vmatpush2.msra.mxu0 %v1282
    %1715 = vmatprep.subr.mxu0 0.0
    %1716 = vmatpush2.msra.mxu0 %v1281
    %1717 = vmatprep.subr.mxu0 0.0
    %1718 = vmatpush2.msra.mxu0 %v1280
    %1719 = vmatprep.subr.mxu0 0.0
    %1720 = vmatpush2.msra.mxu0 %v1279
    %1721 = vmatprep.subr.mxu0 0.0
    %1722 = vmatpush2.msra.mxu0 %v1278
    %1723 = vmatprep.subr.mxu0 0.0
    %1724 = vmatpush2.msra.mxu0 %v1277
    %1725 = vmatprep.subr.mxu0 0.0
    %1726 = vmatpush2.msra.mxu0 %v1276
    %1727 = vmatprep.subr.mxu0 0.0
    %1728 = vmatpush2.msra.mxu0 %v1275
    %1729 = vmatprep.subr.mxu0 0.0
    %1730 = vmatpush2.msra.mxu0 %v1274
    %1731 = vmatprep.subr.mxu0 0.0
    %1732 = vmatpush2.msra.mxu0 %v1273
    %1733 = vmatprep.subr.mxu0 0.0
    %1734 = vmatpush2.msra.mxu0 %v1272
    %1735 = vmatprep.subr.mxu0 0.0
    %1736 = vmatpush2.msra.mxu0 %v1271
    %1737 = vmatprep.subr.mxu0 0.0
    %1738 = vmatpush2.msra.mxu0 %v1270
    %1739 = vmatprep.subr.mxu0 0.0
    %1740 = vmatpush2.msra.mxu0 %v1269
    %1741 = vmatprep.mubr.f32.mxu0 %v1252
    %1742 = vmatmul.mubr.f32.gmra.mxu0 %v1251
    %v1743 = vpop.f32.mrf.mxu0
    %v1744 = vadd.f32 %v1674, %v1743
    %v1745 = vpop.f32.mrf.mxu0
    %1746 = vdwg.mxu0
    %v1747 = vld [vmem:[%s7] sm:$0x1]
    %v1749 = vlaneseq
    %v1750 = vshrl.u32 %v1749, 7
    %v1751 = vsub.s32 0, %v1750
    %v1752 = vrot.slane %v1747, %v1751
    %v1754 = vadd.f32 %v1744, %v1752
    %v1755 = vxor.u32 %v1754, 2147483648
    %v1756 = vmul.f32 %v1755, 1.442695
    %v1757 = vpow.pop %v1756
    %v1758 = vadd.f32 %v1757, 1.0
    %v1759 = vrcp.pop %v1758
    %v1760 = vmul.f32 1.0, %v1759
    %1761 = vst [vmem:[#allocation13] sm:$0xff] %v1760
    // Predicated region
    $region58: #{tpu_custom_call.1} parent=1 // pred_check
      _
    $region59: #{tpu_custom_call.1} parent=1 // pred_check_branch
      %1763 = sbr.rel (0) target = $region61
    $region60: #{tpu_custom_call.1} parent=1 // pred_region
      %s1765 = ssub.s32 128, 128
      %1766 = vsyncadd [#allocation4], %s1765
      %s1768 = sshll.u32 [#allocation13], 4
      %s1769 = int_to_ptr.vmem [resolvable:$true] %s1768
      %1771 = dma.vmem_to_hbm [thread:$0]  %s1769, 128, %s8, [#allocation4]
    $region61: #{tpu_custom_call.1} parent=1 // pred_fallthru
      _
    // Predicated region
    $region62: #{tpu_custom_call.1} parent=1 // pred_check
      _
    $region63: #{tpu_custom_call.1} parent=1 // pred_check_branch
      %1773 = sbr.rel (0) target = $region65
    $region64: #{tpu_custom_call.1} parent=1 // pred_region
      %1774 = dma.done [#allocation4], 128
    $region65: #{tpu_custom_call.1} parent=1 // pred_fallthru
      _
    %1775 = vsyncpa [#allocation3], 1
    %1776 = vsyncpa [#allocation6], 1
    %1777 = vsyncpa [#allocation9], 1
    %1778 = vsyncpa [#allocation12], 1
    %1779 = vsyncpa [#allocation4], 1

// kernel: tpu_custom_call.1
$region0: #{tpu_custom_call.1}
  #allocation0 [shape = 'u32[]', space=smem, size = 0x4, offset = 0x4, fixed_abs, tag = 'smem constant byte address 0x4 - core index']
  #allocation1 [shape = 'u32[144,128]{1,0:T(1,128)}', space=vmem, size = 0x12000, scoped, tag = 'internal scratch']
  %s0 = inlined_call_operand.hbm [shape: bf16[8,128], index: 0, kind: input, shape index: {}]
  %s1 = inlined_call_operand.hbm [shape: bf16[128,1408], index: 1, kind: input, shape index: {}]
  %s2 = inlined_call_operand.hbm [shape: f32[1,1408], index: 2, kind: input, shape index: {}]
  %s3 = inlined_call_operand.hbm [shape: f32[512,256], index: 3, kind: input, shape index: {}]
  %s4 = inlined_call_operand.vmem [shape: f32[1,256], index: 4, kind: input, shape index: {}]
  %s5 = inlined_call_operand.hbm [shape: f32[256,128], index: 5, kind: input, shape index: {}]
  %s6 = inlined_call_operand.hbm [shape: f32[896,128], index: 6, kind: input, shape index: {}]
  %s7 = inlined_call_operand.vmem [shape: f32[1,128], index: 7, kind: input, shape index: {}]
  %s8 = inlined_call_operand.hbm [shape: f32[8,128], index: 8, kind: output, shape index: {}]
  %s9 = sld [smem:[#allocation0]]
  $region66: #{tpu_custom_call.1} parent=0
    _
  %s11 = ssub.s32 1, %s9
  %s12 = scalar_select 0, %s11, %s9
  $region1: #{tpu_custom_call.1} parent=0
    #allocation2 [shape = 'u8[2048]{0}', space=vmem, size = 0x800, scoped, tag = 'input window, operand 0, single buffered']
    #allocation3 [shape = 's32[1]{0}', space=sflag, size = 0x4, scoped, tag = 'scoped memory for tpu_custom_call.1']
    #allocation4 [shape = 's32[1]{0}', space=sflag, size = 0x4, scoped, tag = 'scoped memory for tpu_custom_call.1']
    #allocation5 [shape = 'u8[360448]{0}', space=vmem, size = 0x58000, scoped, tag = 'input window, operand 1, single buffered']
    #allocation6 [shape = 's32[1]{0}', space=sflag, size = 0x4, scoped, tag = 'scoped memory for tpu_custom_call.1']
    #allocation7 [shape = 'u8[5632]{0}', space=vmem, size = 0x1800, scoped, tag = 'input window, operand 2, single buffered']
    #allocation8 [shape = 'u8[524288]{0}', space=vmem, size = 0x80000, scoped, tag = 'input window, operand 3, single buffered']
    #allocation9 [shape = 's32[1]{0}', space=sflag, size = 0x4, scoped, tag = 'scoped memory for tpu_custom_call.1']
    #allocation10 [shape = 'u8[131072]{0}', space=vmem, size = 0x20000, scoped, tag = 'input window, operand 5, single buffered']
    #allocation11 [shape = 'u8[458752]{0}', space=vmem, size = 0x70000, scoped, tag = 'input window, operand 6, single buffered']
    #allocation12 [shape = 's32[1]{0}', space=sflag, size = 0x4, scoped, tag = 'scoped memory for tpu_custom_call.1']
    #allocation13 [shape = 'u8[4096]{0}', space=vmem, size = 0x1000, scoped, tag = 'output window, operand 0, single buffered']
    %13 = vsyncpa [#allocation3], 0
    %14 = vsyncpa [#allocation6], 0
    %15 = vsyncpa [#allocation9], 0
    %16 = vsyncpa [#allocation12], 0
    %17 = vsyncpa [#allocation4], 0
    // Predicated region
    $region2: #{tpu_custom_call.1} parent=1 // pred_check
      _
    $region3: #{tpu_custom_call.1} parent=1 // pred_check_branch
      %19 = sbr.rel (0) target = $region5
    $region4: #{tpu_custom_call.1} parent=1 // pred_region
      %s21 = ssub.s32 64, 64
      %22 = vsyncadd [#allocation3], %s21
      %s24 = sshll.u32 [#allocation2], 4
      %s25 = int_to_ptr.vmem [resolvable:$true] %s24
      %27 = dma.hbm_to_vmem [thread:$0]  %s0, 64, %s25, [#allocation3]
    $region5: #{tpu_custom_call.1} parent=1 // pred_fallthru
      _
    // Predicated region
    $region6: #{tpu_custom_call.1} parent=1 // pred_check
      _
    $region7: #{tpu_custom_call.1} parent=1 // pred_check_branch
      %29 = sbr.rel (0) target = $region9
    $region8: #{tpu_custom_call.1} parent=1 // pred_region
      %s31 = ssub.s32 11264, 11264
      %32 = vsyncadd [#allocation6], %s31
      %s33 = sshll.u32 [#allocation5], 4
      %s34 = int_to_ptr.vmem [resolvable:$true] %s33
      %39 = dma.hbm_to_vmem [thread:$0]  %s1, 11264, %s34, [#allocation6], 704, 704, 44
    $region9: #{tpu_custom_call.1} parent=1 // pred_fallthru
      _
    // Predicated region
    $region10: #{tpu_custom_call.1} parent=1 // pred_check
      _
    $region11: #{tpu_custom_call.1} parent=1 // pred_check_branch
      %41 = sbr.rel (0) target = $region13
    $region12: #{tpu_custom_call.1} parent=1 // pred_region
      %s43 = ssub.s32 176, 176
      %44 = vsyncadd [#allocation6], %s43
      %s46 = sshll.u32 [#allocation7], 4
      %s47 = int_to_ptr.vmem [resolvable:$true] %s46
      %49 = dma.hbm_to_vmem [thread:$0]  %s2, 176, %s47, [#allocation6]
    $region13: #{tpu_custom_call.1} parent=1 // pred_fallthru
      _
    // Predicated region
    $region14: #{tpu_custom_call.1} parent=1 // pred_check
      _
    $region15: #{tpu_custom_call.1} parent=1 // pred_check_branch
      %51 = sbr.rel (0) target = $region17
    $region16: #{tpu_custom_call.1} parent=1 // pred_region
      %s53 = ssub.s32 16384, 16384
      %54 = vsyncadd [#allocation9], %s53
      %s55 = sshll.u32 [#allocation8], 4
      %s56 = int_to_ptr.vmem [resolvable:$true] %s55
      %61 = dma.hbm_to_vmem [thread:$0]  %s3, 16384, %s56, [#allocation9], 256, 256, 16
    $region17: #{tpu_custom_call.1} parent=1 // pred_fallthru
      _
    // Predicated region
    $region18: #{tpu_custom_call.1} parent=1 // pred_check
      _
    $region19: #{tpu_custom_call.1} parent=1 // pred_check_branch
      %63 = sbr.rel (0) target = $region21
    $region20: #{tpu_custom_call.1} parent=1 // pred_region
      _
    $region21: #{tpu_custom_call.1} parent=1 // pred_fallthru
      _
    // Predicated region
    $region22: #{tpu_custom_call.1} parent=1 // pred_check
      _
    $region23: #{tpu_custom_call.1} parent=1 // pred_check_branch
      %65 = sbr.rel (0) target = $region25
    $region24: #{tpu_custom_call.1} parent=1 // pred_region
      %s67 = ssub.s32 4096, 4096
      %68 = vsyncadd [#allocation9], %s67
      %s69 = sshll.u32 [#allocation10], 4
      %s70 = int_to_ptr.vmem [resolvable:$true] %s69
      %75 = dma.hbm_to_vmem [thread:$0]  %s5, 4096, %s70, [#allocation9], 128, 128, 8
    $region25: #{tpu_custom_call.1} parent=1 // pred_fallthru
      _
    // Predicated region
    $region26: #{tpu_custom_call.1} parent=1 // pred_check
      _
    $region27: #{tpu_custom_call.1} parent=1 // pred_check_branch
      %77 = sbr.rel (0) target = $region29
    $region28: #{tpu_custom_call.1} parent=1 // pred_region
      %s79 = ssub.s32 14336, 14336
      %80 = vsyncadd [#allocation12], %s79
      %s81 = sshll.u32 [#allocation11], 4
      %s82 = int_to_ptr.vmem [resolvable:$true] %s81
      %87 = dma.hbm_to_vmem [thread:$0]  %s6, 14336, %s82, [#allocation12], 128, 128, 8
    $region29: #{tpu_custom_call.1} parent=1 // pred_fallthru
      _
    // Predicated region
    $region30: #{tpu_custom_call.1} parent=1 // pred_check
      _
    $region31: #{tpu_custom_call.1} parent=1 // pred_check_branch
      %89 = sbr.rel (0) target = $region33
    $region32: #{tpu_custom_call.1} parent=1 // pred_region
      _
    $region33: #{tpu_custom_call.1} parent=1 // pred_fallthru
      _
    // Predicated region
    $region34: #{tpu_custom_call.1} parent=1 // pred_check
      _
    $region35: #{tpu_custom_call.1} parent=1 // pred_check_branch
      %91 = sbr.rel (0) target = $region37
    $region36: #{tpu_custom_call.1} parent=1 // pred_region
      %92 = dma.done [#allocation3], 64
    $region37: #{tpu_custom_call.1} parent=1 // pred_fallthru
      _
    // Predicated region
    $region38: #{tpu_custom_call.1} parent=1 // pred_check
      _
    $region39: #{tpu_custom_call.1} parent=1 // pred_check_branch
      %94 = sbr.rel (0) target = $region41
    $region40: #{tpu_custom_call.1} parent=1 // pred_region
      %95 = dma.done [#allocation6], 11264
    $region41: #{tpu_custom_call.1} parent=1 // pred_fallthru
      _
    // Predicated region
    $region42: #{tpu_custom_call.1} parent=1 // pred_check
      _
    $region43: #{tpu_custom_call.1} parent=1 // pred_check_branch
      %97 = sbr.rel (0) target = $region45
    $region44: #{tpu_custom_call.1} parent=1 // pred_region
      %98 = dma.done [#allocation6], 176
    $region45: #{tpu_custom_call.1} parent=1 // pred_fallthru
      _
    // Predicated region
    $region46: #{tpu_custom_call.1} parent=1 // pred_check
      _
    $region47: #{tpu_custom_call.1} parent=1 // pred_check_branch
      %100 = sbr.rel (0) target = $region49
    $region48: #{tpu_custom_call.1} parent=1 // pred_region
      %101 = dma.done [#allocation9], 16384
    $region49: #{tpu_custom_call.1} parent=1 // pred_fallthru
      _
    // Predicated region
    $region50: #{tpu_custom_call.1} parent=1 // pred_check
      _
    $region51: #{tpu_custom_call.1} parent=1 // pred_check_branch
      %103 = sbr.rel (0) target = $region53
    $region52: #{tpu_custom_call.1} parent=1 // pred_region
      %104 = dma.done [#allocation9], 4096
    $region53: #{tpu_custom_call.1} parent=1 // pred_fallthru
      _
    // Predicated region
    $region54: #{tpu_custom_call.1} parent=1 // pred_check
      _
    $region55: #{tpu_custom_call.1} parent=1 // pred_check_branch
      %106 = sbr.rel (0) target = $region57
    $region56: #{tpu_custom_call.1} parent=1 // pred_region
      %107 = dma.done [#allocation12], 14336
    $region57: #{tpu_custom_call.1} parent=1 // pred_fallthru
      _
    %v109 = vld [vmem:[#allocation2] sm:$0xf]
    %v110 = vld [vmem:[#allocation5] sm:$0xff]
    %v111 = vld [vmem:[#allocation5 + $0x8] sm:$0xff]
    %v112 = vld [vmem:[#allocation5 + $0x10] sm:$0xff]
    %v113 = vld [vmem:[#allocation5 + $0x18] sm:$0xff]
    %v114 = vld [vmem:[#allocation5 + $0x20] sm:$0xff]
    %v115 = vld [vmem:[#allocation5 + $0x28] sm:$0xf]
    %v116 = vld [vmem:[#allocation5 + $0x2c] sm:$0xff]
    %v117 = vld [vmem:[#allocation5 + $0x34] sm:$0xff]
    %v118 = vld [vmem:[#allocation5 + $0x3c] sm:$0xff]
    %v119 = vld [vmem:[#allocation5 + $0x44] sm:$0xff]
    %v120 = vld [vmem:[#allocation5 + $0x4c] sm:$0xff]
    %v121 = vld [vmem:[#allocation5 + $0x54] sm:$0xf]
    %v122 = vld [vmem:[#allocation5 + $0x58] sm:$0xff]
    %v123 = vld [vmem:[#allocation5 + $0x60] sm:$0xff]
    %v124 = vld [vmem:[#allocation5 + $0x68] sm:$0xff]
    %v125 = vld [vmem:[#allocation5 + $0x70] sm:$0xff]
    %v126 = vld [vmem:[#allocation5 + $0x78] sm:$0xff]
    %v127 = vld [vmem:[#allocation5 + $0x80] sm:$0xf]
    %v128 = vld [vmem:[#allocation5 + $0x84] sm:$0xff]
    %v129 = vld [vmem:[#allocation5 + $0x8c] sm:$0xff]
    %v130 = vld [vmem:[#allocation5 + $0x94] sm:$0xff]
    %v131 = vld [vmem:[#allocation5 + $0x9c] sm:$0xff]
    %v132 = vld [vmem:[#allocation5 + $0xa4] sm:$0xff]
    %v133 = vld [vmem:[#allocation5 + $0xac] sm:$0xf]
    %v134 = vld [vmem:[#allocation5 + $0xb0] sm:$0xff]
    %v135 = vld [vmem:[#allocation5 + $0xb8] sm:$0xff]
    %v136 = vld [vmem:[#allocation5 + $0xc0] sm:$0xff]
    %v137 = vld [vmem:[#allocation5 + $0xc8] sm:$0xff]
    %v138 = vld [vmem:[#allocation5 + $0xd0] sm:$0xff]
    %v139 = vld [vmem:[#allocation5 + $0xd8] sm:$0xf]
    %v140 = vld [vmem:[#allocation5 + $0xdc] sm:$0xff]
    %v141 = vld [vmem:[#allocation5 + $0xe4] sm:$0xff]
    %v142 = vld [vmem:[#allocation5 + $0xec] sm:$0xff]
    %v143 = vld [vmem:[#allocation5 + $0xf4] sm:$0xff]
    %v144 = vld [vmem:[#allocation5 + $0xfc] sm:$0xff]
    %v145 = vld [vmem:[#allocation5 + $0x104] sm:$0xf]
    %v146 = vld [vmem:[#allocation5 + $0x108] sm:$0xff]
    %v147 = vld [vmem:[#allocation5 + $0x110] sm:$0xff]
    %v148 = vld [vmem:[#allocation5 + $0x118] sm:$0xff]
    %v149 = vld [vmem:[#allocation5 + $0x120] sm:$0xff]
    %v150 = vld [vmem:[#allocation5 + $0x128] sm:$0xff]
    %v151 = vld [vmem:[#allocation5 + $0x130] sm:$0xf]
    %v152 = vld [vmem:[#allocation5 + $0x134] sm:$0xff]
    %v153 = vld [vmem:[#allocation5 + $0x13c] sm:$0xff]
    %v154 = vld [vmem:[#allocation5 + $0x144] sm:$0xff]
    %v155 = vld [vmem:[#allocation5 + $0x14c] sm:$0xff]
    %v156 = vld [vmem:[#allocation5 + $0x154] sm:$0xff]
    %v157 = vld [vmem:[#allocation5 + $0x15c] sm:$0xf]
    %v158 = vld [vmem:[#allocation5 + $0x160] sm:$0xff]
    %v159 = vld [vmem:[#allocation5 + $0x168] sm:$0xff]
    %v160 = vld [vmem:[#allocation5 + $0x170] sm:$0xff]
    %v161 = vld [vmem:[#allocation5 + $0x178] sm:$0xff]
    %v162 = vld [vmem:[#allocation5 + $0x180] sm:$0xff]
    %v163 = vld [vmem:[#allocation5 + $0x188] sm:$0xf]
    %v164 = vld [vmem:[#allocation5 + $0x18c] sm:$0xff]
    %v165 = vld [vmem:[#allocation5 + $0x194] sm:$0xff]
    %v166 = vld [vmem:[#allocation5 + $0x19c] sm:$0xff]
    %v167 = vld [vmem:[#allocation5 + $0x1a4] sm:$0xff]
    %v168 = vld [vmem:[#allocation5 + $0x1ac] sm:$0xff]
    %v169 = vld [vmem:[#allocation5 + $0x1b4] sm:$0xf]
    %v170 = vld [vmem:[#allocation5 + $0x1b8] sm:$0xff]
    %v171 = vld [vmem:[#allocation5 + $0x1c0] sm:$0xff]
    %v172 = vld [vmem:[#allocation5 + $0x1c8] sm:$0xff]
    %v173 = vld [vmem:[#allocation5 + $0x1d0] sm:$0xff]
    %v174 = vld [vmem:[#allocation5 + $0x1d8] sm:$0xff]
    %v175 = vld [vmem:[#allocation5 + $0x1e0] sm:$0xf]
    %v176 = vld [vmem:[#allocation5 + $0x1e4] sm:$0xff]
    %v177 = vld [vmem:[#allocation5 + $0x1ec] sm:$0xff]
    %v178 = vld [vmem:[#allocation5 + $0x1f4] sm:$0xff]
    %v179 = vld [vmem:[#allocation5 + $0x1fc] sm:$0xff]
    %v180 = vld [vmem:[#allocation5 + $0x204] sm:$0xff]
    %v181 = vld [vmem:[#allocation5 + $0x20c] sm:$0xf]
    %v182 = vld [vmem:[#allocation5 + $0x210] sm:$0xff]
    %v183 = vld [vmem:[#allocation5 + $0x218] sm:$0xff]
    %v184 = vld [vmem:[#allocation5 + $0x220] sm:$0xff]
    %v185 = vld [vmem:[#allocation5 + $0x228] sm:$0xff]
    %v186 = vld [vmem:[#allocation5 + $0x230] sm:$0xff]
    %v187 = vld [vmem:[#allocation5 + $0x238] sm:$0xf]
    %v188 = vld [vmem:[#allocation5 + $0x23c] sm:$0xff]
    %v189 = vld [vmem:[#allocation5 + $0x244] sm:$0xff]
    %v190 = vld [vmem:[#allocation5 + $0x24c] sm:$0xff]
    %v191 = vld [vmem:[#allocation5 + $0x254] sm:$0xff]
    %v192 = vld [vmem:[#allocation5 + $0x25c] sm:$0xff]
    %v193 = vld [vmem:[#allocation5 + $0x264] sm:$0xf]
    %v194 = vld [vmem:[#allocation5 + $0x268] sm:$0xff]
    %v195 = vld [vmem:[#allocation5 + $0x270] sm:$0xff]
    %v196 = vld [vmem:[#allocation5 + $0x278] sm:$0xff]
    %v197 = vld [vmem:[#allocation5 + $0x280] sm:$0xff]
    %v198 = vld [vmem:[#allocation5 + $0x288] sm:$0xff]
    %v199 = vld [vmem:[#allocation5 + $0x290] sm:$0xf]
    %v200 = vld [vmem:[#allocation5 + $0x294] sm:$0xff]
    %v201 = vld [vmem:[#allocation5 + $0x29c] sm:$0xff]
    %v202 = vld [vmem:[#allocation5 + $0x2a4] sm:$0xff]
    %v203 = vld [vmem:[#allocation5 + $0x2ac] sm:$0xff]
    %v204 = vld [vmem:[#allocation5 + $0x2b4] sm:$0xff]
    %v205 = vld [vmem:[#allocation5 + $0x2bc] sm:$0xf]
    %v206 = vld [vmem:[#allocation7] sm:$0xff]
    %v207 = vld [vmem:[#allocation7 + $0x8] sm:$0x7]
    %v210 = vlaneseq
    %v211 = vshrl.u32 %v210, 7
    %v212 = vsub.s32 0, %v211
    %v213 = vrot.slane %v206, %v212
    %v214 = vlaneseq
    %v215 = vshrl.u32 %v214, 7
    %v216 = vsub.s32 1, %v215
    %v217 = vrot.slane %v206, %v216
    %v218 = vlaneseq
    %v219 = vshrl.u32 %v218, 7
    %v220 = vsub.s32 2, %v219
    %v221 = vrot.slane %v206, %v220
    %v222 = vlaneseq
    %v223 = vshrl.u32 %v222, 7
    %v224 = vsub.s32 3, %v223
    %v225 = vrot.slane %v206, %v224
    %v226 = vlaneseq
    %v227 = vshrl.u32 %v226, 7
    %v228 = vsub.s32 4, %v227
    %v229 = vrot.slane %v206, %v228
    %v230 = vlaneseq
    %v231 = vshrl.u32 %v230, 7
    %v232 = vsub.s32 5, %v231
    %v233 = vrot.slane %v206, %v232
    %v234 = vlaneseq
    %v235 = vshrl.u32 %v234, 7
    %v236 = vsub.s32 6, %v235
    %v237 = vrot.slane %v206, %v236
    %v238 = vlaneseq
    %v239 = vshrl.u32 %v238, 7
    %v240 = vsub.s32 7, %v239
    %v241 = vrot.slane %v206, %v240
    %v242 = vlaneseq
    %v243 = vshrl.u32 %v242, 7
    %v244 = vsub.s32 0, %v243
    %v245 = vrot.slane %v207, %v244
    %v246 = vlaneseq
    %v247 = vshrl.u32 %v246, 7
    %v248 = vsub.s32 1, %v247
    %v249 = vrot.slane %v207, %v248
    %v250 = vlaneseq
    %v251 = vshrl.u32 %v250, 7
    %v252 = vsub.s32 2, %v251
    %v253 = vrot.slane %v207, %v252
    %v361 = vunpack.c.l.b16 %v110
    %v362 = vunpack.c.h.b16 %v110
    %v363 = vunpack.c.l.b16 %v111
    %v364 = vunpack.c.h.b16 %v111
    %v365 = vunpack.c.l.b16 %v112
    %v366 = vunpack.c.h.b16 %v112
    %v367 = vunpack.c.l.b16 %v113
    %v368 = vunpack.c.h.b16 %v113
    %v369 = vunpack.c.l.b16 %v114
    %v370 = vunpack.c.h.b16 %v114
    %v371 = vunpack.c.l.b16 %v115
    %v372 = vunpack.c.l.b16 %v116
    %v373 = vunpack.c.h.b16 %v116
    %v374 = vunpack.c.l.b16 %v117
    %v375 = vunpack.c.h.b16 %v117
    %v376 = vunpack.c.l.b16 %v118
    %v377 = vunpack.c.h.b16 %v118
    %v378 = vunpack.c.l.b16 %v119
    %v379 = vunpack.c.h.b16 %v119
    %v380 = vunpack.c.l.b16 %v120
    %v381 = vunpack.c.h.b16 %v120
    %v382 = vunpack.c.l.b16 %v121
    %v383 = vunpack.c.l.b16 %v122
    %v384 = vunpack.c.h.b16 %v122
    %v385 = vunpack.c.l.b16 %v123
    %v386 = vunpack.c.h.b16 %v123
    %v387 = vunpack.c.l.b16 %v124
    %v388 = vunpack.c.h.b16 %v124
    %v389 = vunpack.c.l.b16 %v125
    %v390 = vunpack.c.h.b16 %v125
    %v391 = vunpack.c.l.b16 %v126
    %v392 = vunpack.c.h.b16 %v126
    %v393 = vunpack.c.l.b16 %v127
    %v394 = vunpack.c.l.b16 %v128
    %v395 = vunpack.c.h.b16 %v128
    %v396 = vunpack.c.l.b16 %v129
    %v397 = vunpack.c.h.b16 %v129
    %v398 = vunpack.c.l.b16 %v130
    %v399 = vunpack.c.h.b16 %v130
    %v400 = vunpack.c.l.b16 %v131
    %v401 = vunpack.c.h.b16 %v131
    %v402 = vunpack.c.l.b16 %v132
    %v403 = vunpack.c.h.b16 %v132
    %v404 = vunpack.c.l.b16 %v133
    %v405 = vunpack.c.l.b16 %v134
    %v406 = vunpack.c.h.b16 %v134
    %v407 = vunpack.c.l.b16 %v135
    %v408 = vunpack.c.h.b16 %v135
    %v409 = vunpack.c.l.b16 %v136
    %v410 = vunpack.c.h.b16 %v136
    %v411 = vunpack.c.l.b16 %v137
    %v412 = vunpack.c.h.b16 %v137
    %v413 = vunpack.c.l.b16 %v138
    %v414 = vunpack.c.h.b16 %v138
    %v415 = vunpack.c.l.b16 %v139
    %v416 = vunpack.c.l.b16 %v140
    %v417 = vunpack.c.h.b16 %v140
    %v418 = vunpack.c.l.b16 %v141
    %v419 = vunpack.c.h.b16 %v141
    %v420 = vunpack.c.l.b16 %v142
    %v421 = vunpack.c.h.b16 %v142
    %v422 = vunpack.c.l.b16 %v143
    %v423 = vunpack.c.h.b16 %v143
    %v424 = vunpack.c.l.b16 %v144
    %v425 = vunpack.c.h.b16 %v144
    %v426 = vunpack.c.l.b16 %v145
    %v427 = vunpack.c.l.b16 %v146
    %v428 = vunpack.c.h.b16 %v146
    %v429 = vunpack.c.l.b16 %v147
    %v430 = vunpack.c.h.b16 %v147
    %v431 = vunpack.c.l.b16 %v148
    %v432 = vunpack.c.h.b16 %v148
    %v433 = vunpack.c.l.b16 %v149
    %v434 = vunpack.c.h.b16 %v149
    %v435 = vunpack.c.l.b16 %v150
    %v436 = vunpack.c.h.b16 %v150
    %v437 = vunpack.c.l.b16 %v151
    %v438 = vunpack.c.l.b16 %v152
    %v439 = vunpack.c.h.b16 %v152
    %v440 = vunpack.c.l.b16 %v153
    %v441 = vunpack.c.h.b16 %v153
    %v442 = vunpack.c.l.b16 %v154
    %v443 = vunpack.c.h.b16 %v154
    %v444 = vunpack.c.l.b16 %v155
    %v445 = vunpack.c.h.b16 %v155
    %v446 = vunpack.c.l.b16 %v156
    %v447 = vunpack.c.h.b16 %v156
    %v448 = vunpack.c.l.b16 %v157
    %v449 = vunpack.c.l.b16 %v158
    %v450 = vunpack.c.h.b16 %v158
    %v451 = vunpack.c.l.b16 %v159
    %v452 = vunpack.c.h.b16 %v159
    %v453 = vunpack.c.l.b16 %v160
    %v454 = vunpack.c.h.b16 %v160
    %v455 = vunpack.c.l.b16 %v161
    %v456 = vunpack.c.h.b16 %v161
    %v457 = vunpack.c.l.b16 %v162
    %v458 = vunpack.c.h.b16 %v162
    %v459 = vunpack.c.l.b16 %v163
    %v460 = vunpack.c.l.b16 %v164
    %v461 = vunpack.c.h.b16 %v164
    %v462 = vunpack.c.l.b16 %v165
    %v463 = vunpack.c.h.b16 %v165
    %v464 = vunpack.c.l.b16 %v166
    %v465 = vunpack.c.h.b16 %v166
    %v466 = vunpack.c.l.b16 %v167
    %v467 = vunpack.c.h.b16 %v167
    %v468 = vunpack.c.l.b16 %v168
    %v469 = vunpack.c.h.b16 %v168
    %v470 = vunpack.c.l.b16 %v169
    %v471 = vunpack.c.l.b16 %v170
    %v472 = vunpack.c.h.b16 %v170
    %v473 = vunpack.c.l.b16 %v171
    %v474 = vunpack.c.h.b16 %v171
    %v475 = vunpack.c.l.b16 %v172
    %v476 = vunpack.c.h.b16 %v172
    %v477 = vunpack.c.l.b16 %v173
    %v478 = vunpack.c.h.b16 %v173
    %v479 = vunpack.c.l.b16 %v174
    %v480 = vunpack.c.h.b16 %v174
    %v481 = vunpack.c.l.b16 %v175
    %v482 = vunpack.c.l.b16 %v176
    %v483 = vunpack.c.h.b16 %v176
    %v484 = vunpack.c.l.b16 %v177
    %v485 = vunpack.c.h.b16 %v177
    %v486 = vunpack.c.l.b16 %v178
    %v487 = vunpack.c.h.b16 %v178
    %v488 = vunpack.c.l.b16 %v179
    %v489 = vunpack.c.h.b16 %v179
    %v490 = vunpack.c.l.b16 %v180
    %v491 = vunpack.c.h.b16 %v180
    %v492 = vunpack.c.l.b16 %v181
    %v493 = vunpack.c.l.b16 %v182
    %v494 = vunpack.c.h.b16 %v182
    %v495 = vunpack.c.l.b16 %v183
    %v496 = vunpack.c.h.b16 %v183
    %v497 = vunpack.c.l.b16 %v184
    %v498 = vunpack.c.h.b16 %v184
    %v499 = vunpack.c.l.b16 %v185
    %v500 = vunpack.c.h.b16 %v185
    %v501 = vunpack.c.l.b16 %v186
    %v502 = vunpack.c.h.b16 %v186
    %v503 = vunpack.c.l.b16 %v187
    %v504 = vunpack.c.l.b16 %v188
    %v505 = vunpack.c.h.b16 %v188
    %v506 = vunpack.c.l.b16 %v189
    %v507 = vunpack.c.h.b16 %v189
    %v508 = vunpack.c.l.b16 %v190
    %v509 = vunpack.c.h.b16 %v190
    %v510 = vunpack.c.l.b16 %v191
    %v511 = vunpack.c.h.b16 %v191
    %v512 = vunpack.c.l.b16 %v192
    %v513 = vunpack.c.h.b16 %v192
    %v514 = vunpack.c.l.b16 %v193
    %v515 = vunpack.c.l.b16 %v194
    %v516 = vunpack.c.h.b16 %v194
    %v517 = vunpack.c.l.b16 %v195
    %v518 = vunpack.c.h.b16 %v195
    %v519 = vunpack.c.l.b16 %v196
    %v520 = vunpack.c.h.b16 %v196
    %v521 = vunpack.c.l.b16 %v197
    %v522 = vunpack.c.h.b16 %v197
    %v523 = vunpack.c.l.b16 %v198
    %v524 = vunpack.c.h.b16 %v198
    %v525 = vunpack.c.l.b16 %v199
    %v526 = vunpack.c.l.b16 %v200
    %v527 = vunpack.c.h.b16 %v200
    %v528 = vunpack.c.l.b16 %v201
    %v529 = vunpack.c.h.b16 %v201
    %v530 = vunpack.c.l.b16 %v202
    %v531 = vunpack.c.h.b16 %v202
    %v532 = vunpack.c.l.b16 %v203
    %v533 = vunpack.c.h.b16 %v203
    %v534 = vunpack.c.l.b16 %v204
    %v535 = vunpack.c.h.b16 %v204
    %v536 = vunpack.c.l.b16 %v205
    %v537 = vpack.c.b16 %v372, %v361
    %v538 = vpack.c.b16 %v373, %v362
    %v539 = vpack.c.b16 %v374, %v363
    %v540 = vpack.c.b16 %v375, %v364
    %v541 = vpack.c.b16 %v376, %v365
    %v542 = vpack.c.b16 %v377, %v366
    %v543 = vpack.c.b16 %v378, %v367
    %v544 = vpack.c.b16 %v379, %v368
    %v545 = vpack.c.b16 %v380, %v369
    %v546 = vpack.c.b16 %v381, %v370
    %v547 = vpack.c.b16 %v382, %v371
    %v548 = vpack.c.b16 %v394, %v383
    %v549 = vpack.c.b16 %v395, %v384
    %v550 = vpack.c.b16 %v396, %v385
    %v551 = vpack.c.b16 %v397, %v386
    %v552 = vpack.c.b16 %v398, %v387
    %v553 = vpack.c.b16 %v399, %v388
    %v554 = vpack.c.b16 %v400, %v389
    %v555 = vpack.c.b16 %v401, %v390
    %v556 = vpack.c.b16 %v402, %v391
    %v557 = vpack.c.b16 %v403, %v392
    %v558 = vpack.c.b16 %v404, %v393
    %v559 = vpack.c.b16 %v416, %v405
    %v560 = vpack.c.b16 %v417, %v406
    %v561 = vpack.c.b16 %v418, %v407
    %v562 = vpack.c.b16 %v419, %v408
    %v563 = vpack.c.b16 %v420, %v409
    %v564 = vpack.c.b16 %v421, %v410
    %v565 = vpack.c.b16 %v422, %v411
    %v566 = vpack.c.b16 %v423, %v412
    %v567 = vpack.c.b16 %v424, %v413
    %v568 = vpack.c.b16 %v425, %v414
    %v569 = vpack.c.b16 %v426, %v415
    %v570 = vpack.c.b16 %v438, %v427
    %v571 = vpack.c.b16 %v439, %v428
    %v572 = vpack.c.b16 %v440, %v429
    %v573 = vpack.c.b16 %v441, %v430
    %v574 = vpack.c.b16 %v442, %v431
    %v575 = vpack.c.b16 %v443, %v432
    %v576 = vpack.c.b16 %v444, %v433
    %v577 = vpack.c.b16 %v445, %v434
    %v578 = vpack.c.b16 %v446, %v435
    %v579 = vpack.c.b16 %v447, %v436
    %v580 = vpack.c.b16 %v448, %v437
    %v581 = vpack.c.b16 %v460, %v449
    %v582 = vpack.c.b16 %v461, %v450
    %v583 = vpack.c.b16 %v462, %v451
    %v584 = vpack.c.b16 %v463, %v452
    %v585 = vpack.c.b16 %v464, %v453
    %v586 = vpack.c.b16 %v465, %v454
    %v587 = vpack.c.b16 %v466, %v455
    %v588 = vpack.c.b16 %v467, %v456
    %v589 = vpack.c.b16 %v468, %v457
    %v590 = vpack.c.b16 %v469, %v458
    %v591 = vpack.c.b16 %v470, %v459
    %v592 = vpack.c.b16 %v482, %v471
    %v593 = vpack.c.b16 %v483, %v472
    %v594 = vpack.c.b16 %v484, %v473
    %v595 = vpack.c.b16 %v485, %v474
    %v596 = vpack.c.b16 %v486, %v475
    %v597 = vpack.c.b16 %v487, %v476
    %v598 = vpack.c.b16 %v488, %v477
    %v599 = vpack.c.b16 %v489, %v478
    %v600 = vpack.c.b16 %v490, %v479
    %v601 = vpack.c.b16 %v491, %v480
    %v602 = vpack.c.b16 %v492, %v481
    %v603 = vpack.c.b16 %v504, %v493
    %v604 = vpack.c.b16 %v505, %v494
    %v605 = vpack.c.b16 %v506, %v495
    %v606 = vpack.c.b16 %v507, %v496
    %v607 = vpack.c.b16 %v508, %v497
    %v608 = vpack.c.b16 %v509, %v498
    %v609 = vpack.c.b16 %v510, %v499
    %v610 = vpack.c.b16 %v511, %v500
    %v611 = vpack.c.b16 %v512, %v501
    %v612 = vpack.c.b16 %v513, %v502
    %v613 = vpack.c.b16 %v514, %v503
    %v614 = vpack.c.b16 %v526, %v515
    %v615 = vpack.c.b16 %v527, %v516
    %v616 = vpack.c.b16 %v528, %v517
    %v617 = vpack.c.b16 %v529, %v518
    %v618 = vpack.c.b16 %v530, %v519
    %v619 = vpack.c.b16 %v531, %v520
    %v620 = vpack.c.b16 %v532, %v521
    %v621 = vpack.c.b16 %v533, %v522
    %v622 = vpack.c.b16 %v534, %v523
    %v623 = vpack.c.b16 %v535, %v524
    %v624 = vpack.c.b16 %v536, %v525
    %713 = vmatprep.subr.bf16.mxu0 %v615
    %714 = vmatpush1.bf16.msra.mxu0 %v614
    %715 = vmatprep.subr.bf16.mxu0 %v604
    %716 = vmatpush1.bf16.msra.mxu0 %v603
    %717 = vmatprep.subr.bf16.mxu0 %v593
    %718 = vmatpush1.bf16.msra.mxu0 %v592
    %719 = vmatprep.subr.bf16.mxu0 %v582
    %720 = vmatpush1.bf16.msra.mxu0 %v581
    %721 = vmatprep.subr.bf16.mxu0 %v571
    %722 = vmatpush1.bf16.msra.mxu0 %v570
    %723 = vmatprep.subr.bf16.mxu0 %v560
    %724 = vmatpush1.bf16.msra.mxu0 %v559
    %725 = vmatprep.subr.bf16.mxu0 %v549
    %726 = vmatpush1.bf16.msra.mxu0 %v548
    %727 = vmatprep.subr.bf16.mxu0 %v538
    %728 = vmatpush1.bf16.msra.mxu0 %v537
    %729 = vmatprep.subr.bf16.mxu0 0
    %730 = vmatpush2.bf16.msra.mxu0 0
    %731 = vmatprep.subr.bf16.mxu0 0
    %732 = vmatpush2.bf16.msra.mxu0 0
    %733 = vmatprep.subr.bf16.mxu0 0
    %734 = vmatpush2.bf16.msra.mxu0 0
    %735 = vmatprep.subr.bf16.mxu0 0
    %736 = vmatpush2.bf16.msra.mxu0 0
    %737 = vmatprep.subr.bf16.mxu0 0
    %738 = vmatpush2.bf16.msra.mxu0 0
    %739 = vmatprep.subr.bf16.mxu0 0
    %740 = vmatpush2.bf16.msra.mxu0 0
    %741 = vmatprep.subr.bf16.mxu0 0
    %742 = vmatpush2.bf16.msra.mxu0 0
    %743 = vmatprep.subr.bf16.mxu0 0
    %744 = vmatpush2.bf16.msra.mxu0 0
    %745 = vmatprep.mubr.bf16.mxu0 0
    %746 = vmatmul.mubr.bf16.gmra.mxu0 %v109
    %v747 = vpop.f32.mrf.mxu0
    %v748 = vadd.f32 %v213, %v747
    %v749 = vpop.f32.mrf.mxu0
    %v750 = vadd.f32 %v217, %v749
    %v751 = vpop.f32.mrf.mxu0
    %v752 = vpop.f32.mrf.mxu0
    %753 = vdwg.mxu0
    %754 = vmatprep.subr.bf16.mxu0 %v617
    %755 = vmatpush1.bf16.msra.mxu0 %v616
    %756 = vmatprep.subr.bf16.mxu0 %v606
    %757 = vmatpush1.bf16.msra.mxu0 %v605
    %758 = vmatprep.subr.bf16.mxu0 %v595
    %759 = vmatpush1.bf16.msra.mxu0 %v594
    %760 = vmatprep.subr.bf16.mxu0 %v584
    %761 = vmatpush1.bf16.msra.mxu0 %v583
    %762 = vmatprep.subr.bf16.mxu0 %v573
    %763 = vmatpush1.bf16.msra.mxu0 %v572
    %764 = vmatprep.subr.bf16.mxu0 %v562
    %765 = vmatpush1.bf16.msra.mxu0 %v561
    %766 = vmatprep.subr.bf16.mxu0 %v551
    %767 = vmatpush1.bf16.msra.mxu0 %v550
    %768 = vmatprep.subr.bf16.mxu0 %v540
    %769 = vmatpush1.bf16.msra.mxu0 %v539
    %770 = vmatprep.subr.bf16.mxu0 0
    %771 = vmatpush2.bf16.msra.mxu0 0
    %772 = vmatprep.subr.bf16.mxu0 0
    %773 = vmatpush2.bf16.msra.mxu0 0
    %774 = vmatprep.subr.bf16.mxu0 0
    %775 = vmatpush2.bf16.msra.mxu0 0
    %776 = vmatprep.subr.bf16.mxu0 0
    %777 = vmatpush2.bf16.msra.mxu0 0
    %778 = vmatprep.subr.bf16.mxu0 0
    %779 = vmatpush2.bf16.msra.mxu0 0
    %780 = vmatprep.subr.bf16.mxu0 0
    %781 = vmatpush2.bf16.msra.mxu0 0
    %782 = vmatprep.subr.bf16.mxu0 0
    %783 = vmatpush2.bf16.msra.mxu0 0
    %784 = vmatprep.subr.bf16.mxu0 0
    %785 = vmatpush2.bf16.msra.mxu0 0
    %786 = vmatprep.mubr.bf16.mxu0 0
    %787 = vmatmul.mubr.bf16.gmra.mxu0 %v109
    %v788 = vpop.f32.mrf.mxu0
    %v789 = vadd.f32 %v221, %v788
    %v790 = vpop.f32.mrf.mxu0
    %v791 = vadd.f32 %v225, %v790
    %v792 = vpop.f32.mrf.mxu0
    %v793 = vpop.f32.mrf.mxu0
    %794 = vdwg.mxu0
    %795 = vmatprep.subr.bf16.mxu0 %v619
    %796 = vmatpush1.bf16.msra.mxu0 %v618
    %797 = vmatprep.subr.bf16.mxu0 %v608
    %798 = vmatpush1.bf16.msra.mxu0 %v607
    %799 = vmatprep.subr.bf16.mxu0 %v597
    %800 = vmatpush1.bf16.msra.mxu0 %v596
    %801 = vmatprep.subr.bf16.mxu0 %v586
    %802 = vmatpush1.bf16.msra.mxu0 %v585
    %803 = vmatprep.subr.bf16.mxu0 %v575
    %804 = vmatpush1.bf16.msra.mxu0 %v574
    %805 = vmatprep.subr.bf16.mxu0 %v564
    %806 = vmatpush1.bf16.msra.mxu0 %v563
    %807 = vmatprep.subr.bf16.mxu0 %v553
    %808 = vmatpush1.bf16.msra.mxu0 %v552
    %809 = vmatprep.subr.bf16.mxu0 %v542
    %810 = vmatpush1.bf16.msra.mxu0 %v541
    %811 = vmatprep.subr.bf16.mxu0 0
    %812 = vmatpush2.bf16.msra.mxu0 0
    %813 = vmatprep.subr.bf16.mxu0 0
    %814 = vmatpush2.bf16.msra.mxu0 0
    %815 = vmatprep.subr.bf16.mxu0 0
    %816 = vmatpush2.bf16.msra.mxu0 0
    %817 = vmatprep.subr.bf16.mxu0 0
    %818 = vmatpush2.bf16.msra.mxu0 0
    %819 = vmatprep.subr.bf16.mxu0 0
    %820 = vmatpush2.bf16.msra.mxu0 0
    %821 = vmatprep.subr.bf16.mxu0 0
    %822 = vmatpush2.bf16.msra.mxu0 0
    %823 = vmatprep.subr.bf16.mxu0 0
    %824 = vmatpush2.bf16.msra.mxu0 0
    %825 = vmatprep.subr.bf16.mxu0 0
    %826 = vmatpush2.bf16.msra.mxu0 0
    %827 = vmatprep.mubr.bf16.mxu0 0
    %828 = vmatmul.mubr.bf16.gmra.mxu0 %v109
    %v829 = vpop.f32.mrf.mxu0
    %v830 = vadd.f32 %v229, %v829
    %v831 = vpop.f32.mrf.mxu0
    %v832 = vadd.f32 %v233, %v831
    %v833 = vpop.f32.mrf.mxu0
    %v834 = vpop.f32.mrf.mxu0
    %835 = vdwg.mxu0
    %836 = vmatprep.subr.bf16.mxu0 %v621
    %837 = vmatpush1.bf16.msra.mxu0 %v620
    %838 = vmatprep.subr.bf16.mxu0 %v610
    %839 = vmatpush1.bf16.msra.mxu0 %v609
    %840 = vmatprep.subr.bf16.mxu0 %v599
    %841 = vmatpush1.bf16.msra.mxu0 %v598
    %842 = vmatprep.subr.bf16.mxu0 %v588
    %843 = vmatpush1.bf16.msra.mxu0 %v587
    %844 = vmatprep.subr.bf16.mxu0 %v577
    %845 = vmatpush1.bf16.msra.mxu0 %v576
    %846 = vmatprep.subr.bf16.mxu0 %v566
    %847 = vmatpush1.bf16.msra.mxu0 %v565
    %848 = vmatprep.subr.bf16.mxu0 %v555
    %849 = vmatpush1.bf16.msra.mxu0 %v554
    %850 = vmatprep.subr.bf16.mxu0 %v544
    %851 = vmatpush1.bf16.msra.mxu0 %v543
    %852 = vmatprep.subr.bf16.mxu0 0
    %853 = vmatpush2.bf16.msra.mxu0 0
    %854 = vmatprep.subr.bf16.mxu0 0
    %855 = vmatpush2.bf16.msra.mxu0 0
    %856 = vmatprep.subr.bf16.mxu0 0
    %857 = vmatpush2.bf16.msra.mxu0 0
    %858 = vmatprep.subr.bf16.mxu0 0
    %859 = vmatpush2.bf16.msra.mxu0 0
    %860 = vmatprep.subr.bf16.mxu0 0
    %861 = vmatpush2.bf16.msra.mxu0 0
    %862 = vmatprep.subr.bf16.mxu0 0
    %863 = vmatpush2.bf16.msra.mxu0 0
    %864 = vmatprep.subr.bf16.mxu0 0
    %865 = vmatpush2.bf16.msra.mxu0 0
    %866 = vmatprep.subr.bf16.mxu0 0
    %867 = vmatpush2.bf16.msra.mxu0 0
    %868 = vmatprep.mubr.bf16.mxu0 0
    %869 = vmatmul.mubr.bf16.gmra.mxu0 %v109
    %v870 = vpop.f32.mrf.mxu0
    %v871 = vadd.f32 %v237, %v870
    %v872 = vpop.f32.mrf.mxu0
    %v873 = vadd.f32 %v241, %v872
    %v874 = vpop.f32.mrf.mxu0
    %v875 = vpop.f32.mrf.mxu0
    %876 = vdwg.mxu0
    %877 = vmatprep.subr.bf16.mxu0 %v623
    %878 = vmatpush1.bf16.msra.mxu0 %v622
    %879 = vmatprep.subr.bf16.mxu0 %v612
    %880 = vmatpush1.bf16.msra.mxu0 %v611
    %881 = vmatprep.subr.bf16.mxu0 %v601
    %882 = vmatpush1.bf16.msra.mxu0 %v600
    %883 = vmatprep.subr.bf16.mxu0 %v590
    %884 = vmatpush1.bf16.msra.mxu0 %v589
    %885 = vmatprep.subr.bf16.mxu0 %v579
    %886 = vmatpush1.bf16.msra.mxu0 %v578
    %887 = vmatprep.subr.bf16.mxu0 %v568
    %888 = vmatpush1.bf16.msra.mxu0 %v567
    %889 = vmatprep.subr.bf16.mxu0 %v557
    %890 = vmatpush1.bf16.msra.mxu0 %v556
    %891 = vmatprep.subr.bf16.mxu0 %v546
    %892 = vmatpush1.bf16.msra.mxu0 %v545
    %893 = vmatprep.subr.bf16.mxu0 0
    %894 = vmatpush2.bf16.msra.mxu0 0
    %895 = vmatprep.subr.bf16.mxu0 0
    %896 = vmatpush2.bf16.msra.mxu0 0
    %897 = vmatprep.subr.bf16.mxu0 0
    %898 = vmatpush2.bf16.msra.mxu0 0
    %899 = vmatprep.subr.bf16.mxu0 0
    %900 = vmatpush2.bf16.msra.mxu0 0
    %901 = vmatprep.subr.bf16.mxu0 0
    %902 = vmatpush2.bf16.msra.mxu0 0
    %903 = vmatprep.subr.bf16.mxu0 0
    %904 = vmatpush2.bf16.msra.mxu0 0
    %905 = vmatprep.subr.bf16.mxu0 0
    %906 = vmatpush2.bf16.msra.mxu0 0
    %907 = vmatprep.subr.bf16.mxu0 0
    %908 = vmatpush2.bf16.msra.mxu0 0
    %909 = vmatprep.mubr.bf16.mxu0 0
    %910 = vmatmul.mubr.bf16.gmra.mxu0 %v109
    %v911 = vpop.f32.mrf.mxu0
    %v912 = vadd.f32 %v245, %v911
    %v913 = vpop.f32.mrf.mxu0
    %v914 = vadd.f32 %v249, %v913
    %v915 = vpop.f32.mrf.mxu0
    %v916 = vpop.f32.mrf.mxu0
    %917 = vdwg.mxu0
    %918 = vmatprep.subr.bf16.mxu0 0
    %919 = vmatpush1.bf16.msra.mxu0 %v624
    %920 = vmatprep.subr.bf16.mxu0 0
    %921 = vmatpush1.bf16.msra.mxu0 %v613
    %922 = vmatprep.subr.bf16.mxu0 0
    %923 = vmatpush1.bf16.msra.mxu0 %v602
    %924 = vmatprep.subr.bf16.mxu0 0
    %925 = vmatpush1.bf16.msra.mxu0 %v591
    %926 = vmatprep.subr.bf16.mxu0 0
    %927 = vmatpush1.bf16.msra.mxu0 %v580
    %928 = vmatprep.subr.bf16.mxu0 0
    %929 = vmatpush1.bf16.msra.mxu0 %v569
    %930 = vmatprep.subr.bf16.mxu0 0
    %931 = vmatpush1.bf16.msra.mxu0 %v558
    %932 = vmatprep.subr.bf16.mxu0 0
    %933 = vmatpush1.bf16.msra.mxu0 %v547
    %934 = vmatprep.subr.bf16.mxu0 0
    %935 = vmatpush2.bf16.msra.mxu0 0
    %936 = vmatprep.subr.bf16.mxu0 0
    %937 = vmatpush2.bf16.msra.mxu0 0
    %938 = vmatprep.subr.bf16.mxu0 0
    %939 = vmatpush2.bf16.msra.mxu0 0
    %940 = vmatprep.subr.bf16.mxu0 0
    %941 = vmatpush2.bf16.msra.mxu0 0
    %942 = vmatprep.subr.bf16.mxu0 0
    %943 = vmatpush2.bf16.msra.mxu0 0
    %944 = vmatprep.subr.bf16.mxu0 0
    %945 = vmatpush2.bf16.msra.mxu0 0
    %946 = vmatprep.subr.bf16.mxu0 0
    %947 = vmatpush2.bf16.msra.mxu0 0
    %948 = vmatprep.subr.bf16.mxu0 0
    %949 = vmatpush2.bf16.msra.mxu0 0
    %950 = vmatprep.mubr.bf16.mxu0 0
    %951 = vmatmul.mubr.bf16.gmra.mxu0 %v109
    %v952 = vpop.f32.mrf.mxu0
    %v953 = vadd.f32 %v253, %v952
    %v954 = vpop.f32.mrf.mxu0
    %v955 = vpop.f32.mrf.mxu0
    %v956 = vpop.f32.mrf.mxu0
    %957 = vdwg.mxu0
    %v958 = vmax.f32 %v748, 0.0
    %v959 = vmax.f32 %v750, 0.0
    %v960 = vmax.f32 %v789, 0.0
    %v961 = vmax.f32 %v791, 0.0
    %v962 = vmax.f32 %v830, 0.0
    %v963 = vmax.f32 %v832, 0.0
    %v964 = vmax.f32 %v871, 0.0
    %v965 = vmax.f32 %v873, 0.0
    %v966 = vmax.f32 %v912, 0.0
    %v967 = vmax.f32 %v914, 0.0
    %v968 = vmax.f32 %v953, 0.0
    %v969 = vld [vmem:[#allocation8] sm:$0xff]
    %v970 = vld [vmem:[#allocation8 + $0x8] sm:$0xff]
    %v971 = vld [vmem:[#allocation8 + $0x10] sm:$0xff]
    %v972 = vld [vmem:[#allocation8 + $0x18] sm:$0xff]
    %v973 = vld [vmem:[#allocation8 + $0x20] sm:$0xff]
    %v974 = vld [vmem:[#allocation8 + $0x28] sm:$0xff]
    %v975 = vld [vmem:[#allocation8 + $0x30] sm:$0xff]
    %v976 = vld [vmem:[#allocation8 + $0x38] sm:$0xff]
    %v977 = vld [vmem:[#allocation8 + $0x40] sm:$0xff]
    %v978 = vld [vmem:[#allocation8 + $0x48] sm:$0xff]
    %v979 = vld [vmem:[#allocation8 + $0x50] sm:$0xff]
    %v980 = vld [vmem:[#allocation8 + $0x58] sm:$0xff]
    %v981 = vld [vmem:[#allocation8 + $0x60] sm:$0xff]
    %v982 = vld [vmem:[#allocation8 + $0x68] sm:$0xff]
    %v983 = vld [vmem:[#allocation8 + $0x70] sm:$0xff]
    %v984 = vld [vmem:[#allocation8 + $0x78] sm:$0xff]
    %v985 = vld [vmem:[#allocation8 + $0x80] sm:$0xff]
    %v986 = vld [vmem:[#allocation8 + $0x88] sm:$0xff]
    %v987 = vld [vmem:[#allocation8 + $0x90] sm:$0xff]
    %v988 = vld [vmem:[#allocation8 + $0x98] sm:$0xff]
    %v989 = vld [vmem:[#allocation8 + $0xa0] sm:$0xff]
    %v990 = vld [vmem:[#allocation8 + $0xa8] sm:$0xff]
    %v991 = vld [vmem:[#allocation8 + $0xb0] sm:$0xff]
    %v992 = vld [vmem:[#allocation8 + $0xb8] sm:$0xff]
    %v993 = vld [vmem:[#allocation8 + $0xc0] sm:$0xff]
    %v994 = vld [vmem:[#allocation8 + $0xc8] sm:$0xff]
    %v995 = vld [vmem:[#allocation8 + $0xd0] sm:$0xff]
    %v996 = vld [vmem:[#allocation8 + $0xd8] sm:$0xff]
    %v997 = vld [vmem:[#allocation8 + $0xe0] sm:$0xff]
    %v998 = vld [vmem:[#allocation8 + $0xe8] sm:$0xff]
    %v999 = vld [vmem:[#allocation8 + $0xf0] sm:$0xff]
    %v1000 = vld [vmem:[#allocation8 + $0xf8] sm:$0xff]
    %v1001 = vld [vmem:[#allocation8 + $0x100] sm:$0xff]
    %v1002 = vld [vmem:[#allocation8 + $0x108] sm:$0xff]
    %v1003 = vld [vmem:[#allocation8 + $0x110] sm:$0xff]
    %v1004 = vld [vmem:[#allocation8 + $0x118] sm:$0xff]
    %v1005 = vld [vmem:[#allocation8 + $0x120] sm:$0xff]
    %v1006 = vld [vmem:[#allocation8 + $0x128] sm:$0xff]
    %v1007 = vld [vmem:[#allocation8 + $0x130] sm:$0xff]
    %v1008 = vld [vmem:[#allocation8 + $0x138] sm:$0xff]
    %v1009 = vld [vmem:[#allocation8 + $0x140] sm:$0xff]
    %v1010 = vld [vmem:[#allocation8 + $0x148] sm:$0xff]
    %v1011 = vld [vmem:[#allocation8 + $0x150] sm:$0xff]
    %v1012 = vld [vmem:[#allocation8 + $0x158] sm:$0xff]
    %v1013 = vld [vmem:[#allocation8 + $0x160] sm:$0xff]
    %v1014 = vld [vmem:[#allocation8 + $0x168] sm:$0xff]
    %v1015 = vld [vmem:[#allocation8 + $0x170] sm:$0xff]
    %v1016 = vld [vmem:[#allocation8 + $0x178] sm:$0xff]
    %v1017 = vld [vmem:[#allocation8 + $0x180] sm:$0xff]
    %v1018 = vld [vmem:[#allocation8 + $0x188] sm:$0xff]
    %v1019 = vld [vmem:[#allocation8 + $0x190] sm:$0xff]
    %v1020 = vld [vmem:[#allocation8 + $0x198] sm:$0xff]
    %v1021 = vld [vmem:[#allocation8 + $0x1a0] sm:$0xff]
    %v1022 = vld [vmem:[#allocation8 + $0x1a8] sm:$0xff]
    %v1023 = vld [vmem:[#allocation8 + $0x1b0] sm:$0xff]
    %v1024 = vld [vmem:[#allocation8 + $0x1b8] sm:$0xff]
    %v1025 = vld [vmem:[#allocation8 + $0x1c0] sm:$0xff]
    %v1026 = vld [vmem:[#allocation8 + $0x1c8] sm:$0xff]
    %v1027 = vld [vmem:[#allocation8 + $0x1d0] sm:$0xff]
    %v1028 = vld [vmem:[#allocation8 + $0x1d8] sm:$0xff]
    %v1029 = vld [vmem:[#allocation8 + $0x1e0] sm:$0xff]
    %v1030 = vld [vmem:[#allocation8 + $0x1e8] sm:$0xff]
    %v1031 = vld [vmem:[#allocation8 + $0x1f0] sm:$0xff]
    %v1032 = vld [vmem:[#allocation8 + $0x1f8] sm:$0xff]
    %v1033 = vld [vmem:[#allocation8 + $0x200] sm:$0xff]
    %v1034 = vld [vmem:[#allocation8 + $0x208] sm:$0xff]
    %v1035 = vld [vmem:[#allocation8 + $0x210] sm:$0xff]
    %v1036 = vld [vmem:[#allocation8 + $0x218] sm:$0xff]
    %v1037 = vld [vmem:[#allocation8 + $0x220] sm:$0xff]
    %v1038 = vld [vmem:[#allocation8 + $0x228] sm:$0xff]
    %v1039 = vld [vmem:[#allocation8 + $0x230] sm:$0xff]
    %v1040 = vld [vmem:[#allocation8 + $0x238] sm:$0xff]
    %v1041 = vld [vmem:[#allocation8 + $0x240] sm:$0xff]
    %v1042 = vld [vmem:[#allocation8 + $0x248] sm:$0xff]
    %v1043 = vld [vmem:[#allocation8 + $0x250] sm:$0xff]
    %v1044 = vld [vmem:[#allocation8 + $0x258] sm:$0xff]
    %v1045 = vld [vmem:[#allocation8 + $0x260] sm:$0xff]
    %v1046 = vld [vmem:[#allocation8 + $0x268] sm:$0xff]
    %v1047 = vld [vmem:[#allocation8 + $0x270] sm:$0xff]
    %v1048 = vld [vmem:[#allocation8 + $0x278] sm:$0xff]
    %v1049 = vld [vmem:[#allocation8 + $0x280] sm:$0xff]
    %v1050 = vld [vmem:[#allocation8 + $0x288] sm:$0xff]
    %v1051 = vld [vmem:[#allocation8 + $0x290] sm:$0xff]
    %v1052 = vld [vmem:[#allocation8 + $0x298] sm:$0xff]
    %v1053 = vld [vmem:[#allocation8 + $0x2a0] sm:$0xff]
    %v1054 = vld [vmem:[#allocation8 + $0x2a8] sm:$0xff]
    %v1055 = vld [vmem:[#allocation8 + $0x2b0] sm:$0xff]
    %v1056 = vld [vmem:[#allocation8 + $0x2b8] sm:$0xff]
    %v1057 = vld [vmem:[#allocation8 + $0x2c0] sm:$0xff]
    %v1058 = vld [vmem:[#allocation8 + $0x2c8] sm:$0xff]
    %v1059 = vld [vmem:[#allocation8 + $0x2d0] sm:$0xff]
    %v1060 = vld [vmem:[#allocation8 + $0x2d8] sm:$0xff]
    %v1061 = vld [vmem:[#allocation8 + $0x2e0] sm:$0xff]
    %v1062 = vld [vmem:[#allocation8 + $0x2e8] sm:$0xff]
    %v1063 = vld [vmem:[#allocation8 + $0x2f0] sm:$0xff]
    %v1064 = vld [vmem:[#allocation8 + $0x2f8] sm:$0xff]
    %v1065 = vld [vmem:[#allocation8 + $0x300] sm:$0xff]
    %v1066 = vld [vmem:[#allocation8 + $0x308] sm:$0xff]
    %v1067 = vld [vmem:[#allocation8 + $0x310] sm:$0xff]
    %v1068 = vld [vmem:[#allocation8 + $0x318] sm:$0xff]
    %v1069 = vld [vmem:[#allocation8 + $0x320] sm:$0xff]
    %v1070 = vld [vmem:[#allocation8 + $0x328] sm:$0xff]
    %v1071 = vld [vmem:[#allocation8 + $0x330] sm:$0xff]
    %v1072 = vld [vmem:[#allocation8 + $0x338] sm:$0xff]
    %v1073 = vld [vmem:[#allocation8 + $0x340] sm:$0xff]
    %v1074 = vld [vmem:[#allocation8 + $0x348] sm:$0xff]
    %v1075 = vld [vmem:[#allocation8 + $0x350] sm:$0xff]
    %v1076 = vld [vmem:[#allocation8 + $0x358] sm:$0xff]
    %v1077 = vld [vmem:[#allocation8 + $0x360] sm:$0xff]
    %v1078 = vld [vmem:[#allocation8 + $0x368] sm:$0xff]
    %v1079 = vld [vmem:[#allocation8 + $0x370] sm:$0xff]
    %v1080 = vld [vmem:[#allocation8 + $0x378] sm:$0xff]
    %v1081 = vld [vmem:[#allocation8 + $0x380] sm:$0xff]
    %v1082 = vld [vmem:[#allocation8 + $0x388] sm:$0xff]
    %v1083 = vld [vmem:[#allocation8 + $0x390] sm:$0xff]
    %v1084 = vld [vmem:[#allocation8 + $0x398] sm:$0xff]
    %v1085 = vld [vmem:[#allocation8 + $0x3a0] sm:$0xff]
    %v1086 = vld [vmem:[#allocation8 + $0x3a8] sm:$0xff]
    %v1087 = vld [vmem:[#allocation8 + $0x3b0] sm:$0xff]
    %v1088 = vld [vmem:[#allocation8 + $0x3b8] sm:$0xff]
    %v1089 = vld [vmem:[#allocation8 + $0x3c0] sm:$0xff]
    %v1090 = vld [vmem:[#allocation8 + $0x3c8] sm:$0xff]
    %v1091 = vld [vmem:[#allocation8 + $0x3d0] sm:$0xff]
    %v1092 = vld [vmem:[#allocation8 + $0x3d8] sm:$0xff]
    %v1093 = vld [vmem:[#allocation8 + $0x3e0] sm:$0xff]
    %v1094 = vld [vmem:[#allocation8 + $0x3e8] sm:$0xff]
    %v1095 = vld [vmem:[#allocation8 + $0x3f0] sm:$0xff]
    %v1096 = vld [vmem:[#allocation8 + $0x3f8] sm:$0xff]
    %v1097 = vld [vmem:[%s4] sm:$0x3]
    %v1099 = vlaneseq
    %v1100 = vshrl.u32 %v1099, 7
    %v1101 = vsub.s32 0, %v1100
    %v1102 = vrot.slane %v1097, %v1101
    %v1103 = vlaneseq
    %v1104 = vshrl.u32 %v1103, 7
    %v1105 = vsub.s32 1, %v1104
    %v1106 = vrot.slane %v1097, %v1105
    %1109 = vmatprep.subr.mxu0 %v1000
    %1110 = vmatpush1.msra.mxu0 %v999
    %1111 = vmatprep.subr.mxu0 %v998
    %1112 = vmatpush1.msra.mxu0 %v997
    %1113 = vmatprep.subr.mxu0 %v996
    %1114 = vmatpush1.msra.mxu0 %v995
    %1115 = vmatprep.subr.mxu0 %v994
    %1116 = vmatpush1.msra.mxu0 %v993
    %1117 = vmatprep.subr.mxu0 %v992
    %1118 = vmatpush1.msra.mxu0 %v991
    %1119 = vmatprep.subr.mxu0 %v990
    %1120 = vmatpush1.msra.mxu0 %v989
    %1121 = vmatprep.subr.mxu0 %v988
    %1122 = vmatpush1.msra.mxu0 %v987
    %1123 = vmatprep.subr.mxu0 %v986
    %1124 = vmatpush1.msra.mxu0 %v985
    %1125 = vmatprep.subr.mxu0 %v984
    %1126 = vmatpush1.msra.mxu0 %v983
    %1127 = vmatprep.subr.mxu0 %v982
    %1128 = vmatpush1.msra.mxu0 %v981
    %1129 = vmatprep.subr.mxu0 %v980
    %1130 = vmatpush1.msra.mxu0 %v979
    %1131 = vmatprep.subr.mxu0 %v978
    %1132 = vmatpush1.msra.mxu0 %v977
    %1133 = vmatprep.subr.mxu0 %v976
    %1134 = vmatpush1.msra.mxu0 %v975
    %1135 = vmatprep.subr.mxu0 %v974
    %1136 = vmatpush1.msra.mxu0 %v973
    %1137 = vmatprep.subr.mxu0 %v972
    %1138 = vmatpush1.msra.mxu0 %v971
    %1139 = vmatprep.subr.mxu0 %v970
    %1140 = vmatpush1.msra.mxu0 %v969
    %1141 = vmatprep.subr.mxu0 %v1032
    %1142 = vmatpush2.msra.mxu0 %v1031
    %1143 = vmatprep.subr.mxu0 %v1030
    %1144 = vmatpush2.msra.mxu0 %v1029
    %1145 = vmatprep.subr.mxu0 %v1028
    %1146 = vmatpush2.msra.mxu0 %v1027
    %1147 = vmatprep.subr.mxu0 %v1026
    %1148 = vmatpush2.msra.mxu0 %v1025
    %1149 = vmatprep.subr.mxu0 %v1024
    %1150 = vmatpush2.msra.mxu0 %v1023
    %1151 = vmatprep.subr.mxu0 %v1022
    %1152 = vmatpush2.msra.mxu0 %v1021
    %1153 = vmatprep.subr.mxu0 %v1020
    %1154 = vmatpush2.msra.mxu0 %v1019
    %1155 = vmatprep.subr.mxu0 %v1018
    %1156 = vmatpush2.msra.mxu0 %v1017
    %1157 = vmatprep.subr.mxu0 %v1016
    %1158 = vmatpush2.msra.mxu0 %v1015
    %1159 = vmatprep.subr.mxu0 %v1014
    %1160 = vmatpush2.msra.mxu0 %v1013
    %1161 = vmatprep.subr.mxu0 %v1012
    %1162 = vmatpush2.msra.mxu0 %v1011
    %1163 = vmatprep.subr.mxu0 %v1010
    %1164 = vmatpush2.msra.mxu0 %v1009
    %1165 = vmatprep.subr.mxu0 %v1008
    %1166 = vmatpush2.msra.mxu0 %v1007
    %1167 = vmatprep.subr.mxu0 %v1006
    %1168 = vmatpush2.msra.mxu0 %v1005
    %1169 = vmatprep.subr.mxu0 %v1004
    %1170 = vmatpush2.msra.mxu0 %v1003
    %1171 = vmatprep.subr.mxu0 %v1002
    %1172 = vmatpush2.msra.mxu0 %v1001
    %1173 = vmatprep.mubr.f32.mxu0 %v959
    %1174 = vmatmul.mubr.f32.gmra.mxu0 %v958
    %v1175 = vpop.f32.mrf.mxu0
    %v1176 = vadd.f32 %v1102, %v1175
    %v1177 = vpop.f32.mrf.mxu0
    %v1178 = vadd.f32 %v1106, %v1177
    %1179 = vdwg.mxu0
    %1180 = vmatprep.subr.mxu0 %v1064
    %1181 = vmatpush1.msra.mxu0 %v1063
    %1182 = vmatprep.subr.mxu0 %v1062
    %1183 = vmatpush1.msra.mxu0 %v1061
    %1184 = vmatprep.subr.mxu0 %v1060
    %1185 = vmatpush1.msra.mxu0 %v1059
    %1186 = vmatprep.subr.mxu0 %v1058
    %1187 = vmatpush1.msra.mxu0 %v1057
    %1188 = vmatprep.subr.mxu0 %v1056
    %1189 = vmatpush1.msra.mxu0 %v1055
    %1190 = vmatprep.subr.mxu0 %v1054
    %1191 = vmatpush1.msra.mxu0 %v1053
    %1192 = vmatprep.subr.mxu0 %v1052
    %1193 = vmatpush1.msra.mxu0 %v1051
    %1194 = vmatprep.subr.mxu0 %v1050
    %1195 = vmatpush1.msra.mxu0 %v1049
    %1196 = vmatprep.subr.mxu0 %v1048
    %1197 = vmatpush1.msra.mxu0 %v1047
    %1198 = vmatprep.subr.mxu0 %v1046
    %1199 = vmatpush1.msra.mxu0 %v1045
    %1200 = vmatprep.subr.mxu0 %v1044
    %1201 = vmatpush1.msra.mxu0 %v1043
    %1202 = vmatprep.subr.mxu0 %v1042
    %1203 = vmatpush1.msra.mxu0 %v1041
    %1204 = vmatprep.subr.mxu0 %v1040
    %1205 = vmatpush1.msra.mxu0 %v1039
    %1206 = vmatprep.subr.mxu0 %v1038
    %1207 = vmatpush1.msra.mxu0 %v1037
    %1208 = vmatprep.subr.mxu0 %v1036
    %1209 = vmatpush1.msra.mxu0 %v1035
    %1210 = vmatprep.subr.mxu0 %v1034
    %1211 = vmatpush1.msra.mxu0 %v1033
    %1212 = vmatprep.subr.mxu0 %v1096
    %1213 = vmatpush2.msra.mxu0 %v1095
    %1214 = vmatprep.subr.mxu0 %v1094
    %1215 = vmatpush2.msra.mxu0 %v1093
    %1216 = vmatprep.subr.mxu0 %v1092
    %1217 = vmatpush2.msra.mxu0 %v1091
    %1218 = vmatprep.subr.mxu0 %v1090
    %1219 = vmatpush2.msra.mxu0 %v1089
    %1220 = vmatprep.subr.mxu0 %v1088
    %1221 = vmatpush2.msra.mxu0 %v1087
    %1222 = vmatprep.subr.mxu0 %v1086
    %1223 = vmatpush2.msra.mxu0 %v1085
    %1224 = vmatprep.subr.mxu0 %v1084
    %1225 = vmatpush2.msra.mxu0 %v1083
    %1226 = vmatprep.subr.mxu0 %v1082
    %1227 = vmatpush2.msra.mxu0 %v1081
    %1228 = vmatprep.subr.mxu0 %v1080
    %1229 = vmatpush2.msra.mxu0 %v1079
    %1230 = vmatprep.subr.mxu0 %v1078
    %1231 = vmatpush2.msra.mxu0 %v1077
    %1232 = vmatprep.subr.mxu0 %v1076
    %1233 = vmatpush2.msra.mxu0 %v1075
    %1234 = vmatprep.subr.mxu0 %v1074
    %1235 = vmatpush2.msra.mxu0 %v1073
    %1236 = vmatprep.subr.mxu0 %v1072
    %1237 = vmatpush2.msra.mxu0 %v1071
    %1238 = vmatprep.subr.mxu0 %v1070
    %1239 = vmatpush2.msra.mxu0 %v1069
    %1240 = vmatprep.subr.mxu0 %v1068
    %1241 = vmatpush2.msra.mxu0 %v1067
    %1242 = vmatprep.subr.mxu0 %v1066
    %1243 = vmatpush2.msra.mxu0 %v1065
    %1244 = vmatprep.mubr.f32.mxu0 %v961
    %1245 = vmatmul.mubr.f32.gmra.mxu0 %v960
    %v1246 = vpop.f32.mrf.mxu0
    %v1247 = vadd.f32 %v1176, %v1246
    %v1248 = vpop.f32.mrf.mxu0
    %v1249 = vadd.f32 %v1178, %v1248
    %1250 = vdwg.mxu0
    %v1251 = vmax.f32 %v1247, 0.0
    %v1252 = vmax.f32 %v1249, 0.0
    %v1253 = vld [vmem:[#allocation10] sm:$0xff]
    %v1254 = vld [vmem:[#allocation10 + $0x8] sm:$0xff]
    %v1255 = vld [vmem:[#allocation10 + $0x10] sm:$0xff]
    %v1256 = vld [vmem:[#allocation10 + $0x18] sm:$0xff]
    %v1257 = vld [vmem:[#allocation10 + $0x20] sm:$0xff]
    %v1258 = vld [vmem:[#allocation10 + $0x28] sm:$0xff]
    %v1259 = vld [vmem:[#allocation10 + $0x30] sm:$0xff]
    %v1260 = vld [vmem:[#allocation10 + $0x38] sm:$0xff]
    %v1261 = vld [vmem:[#allocation10 + $0x40] sm:$0xff]
    %v1262 = vld [vmem:[#allocation10 + $0x48] sm:$0xff]
    %v1263 = vld [vmem:[#allocation10 + $0x50] sm:$0xff]
    %v1264 = vld [vmem:[#allocation10 + $0x58] sm:$0xff]
    %v1265 = vld [vmem:[#allocation10 + $0x60] sm:$0xff]
    %v1266 = vld [vmem:[#allocation10 + $0x68] sm:$0xff]
    %v1267 = vld [vmem:[#allocation10 + $0x70] sm:$0xff]
    %v1268 = vld [vmem:[#allocation10 + $0x78] sm:$0xff]
    %v1269 = vld [vmem:[#allocation10 + $0x80] sm:$0xff]
    %v1270 = vld [vmem:[#allocation10 + $0x88] sm:$0xff]
    %v1271 = vld [vmem:[#allocation10 + $0x90] sm:$0xff]
    %v1272 = vld [vmem:[#allocation10 + $0x98] sm:$0xff]
    %v1273 = vld [vmem:[#allocation10 + $0xa0] sm:$0xff]
    %v1274 = vld [vmem:[#allocation10 + $0xa8] sm:$0xff]
    %v1275 = vld [vmem:[#allocation10 + $0xb0] sm:$0xff]
    %v1276 = vld [vmem:[#allocation10 + $0xb8] sm:$0xff]
    %v1277 = vld [vmem:[#allocation10 + $0xc0] sm:$0xff]
    %v1278 = vld [vmem:[#allocation10 + $0xc8] sm:$0xff]
    %v1279 = vld [vmem:[#allocation10 + $0xd0] sm:$0xff]
    %v1280 = vld [vmem:[#allocation10 + $0xd8] sm:$0xff]
    %v1281 = vld [vmem:[#allocation10 + $0xe0] sm:$0xff]
    %v1282 = vld [vmem:[#allocation10 + $0xe8] sm:$0xff]
    %v1283 = vld [vmem:[#allocation10 + $0xf0] sm:$0xff]
    %v1284 = vld [vmem:[#allocation10 + $0xf8] sm:$0xff]
    %v1285 = vld [vmem:[#allocation11] sm:$0xff]
    %v1286 = vld [vmem:[#allocation11 + $0x8] sm:$0xff]
    %v1287 = vld [vmem:[#allocation11 + $0x10] sm:$0xff]
    %v1288 = vld [vmem:[#allocation11 + $0x18] sm:$0xff]
    %v1289 = vld [vmem:[#allocation11 + $0x20] sm:$0xff]
    %v1290 = vld [vmem:[#allocation11 + $0x28] sm:$0xff]
    %v1291 = vld [vmem:[#allocation11 + $0x30] sm:$0xff]
    %v1292 = vld [vmem:[#allocation11 + $0x38] sm:$0xff]
    %v1293 = vld [vmem:[#allocation11 + $0x40] sm:$0xff]
    %v1294 = vld [vmem:[#allocation11 + $0x48] sm:$0xff]
    %v1295 = vld [vmem:[#allocation11 + $0x50] sm:$0xff]
    %v1296 = vld [vmem:[#allocation11 + $0x58] sm:$0xff]
    %v1297 = vld [vmem:[#allocation11 + $0x60] sm:$0xff]
    %v1298 = vld [vmem:[#allocation11 + $0x68] sm:$0xff]
    %v1299 = vld [vmem:[#allocation11 + $0x70] sm:$0xff]
    %v1300 = vld [vmem:[#allocation11 + $0x78] sm:$0xff]
    %v1301 = vld [vmem:[#allocation11 + $0x80] sm:$0xff]
    %v1302 = vld [vmem:[#allocation11 + $0x88] sm:$0xff]
    %v1303 = vld [vmem:[#allocation11 + $0x90] sm:$0xff]
    %v1304 = vld [vmem:[#allocation11 + $0x98] sm:$0xff]
    %v1305 = vld [vmem:[#allocation11 + $0xa0] sm:$0xff]
    %v1306 = vld [vmem:[#allocation11 + $0xa8] sm:$0xff]
    %v1307 = vld [vmem:[#allocation11 + $0xb0] sm:$0xff]
    %v1308 = vld [vmem:[#allocation11 + $0xb8] sm:$0xff]
    %v1309 = vld [vmem:[#allocation11 + $0xc0] sm:$0xff]
    %v1310 = vld [vmem:[#allocation11 + $0xc8] sm:$0xff]
    %v1311 = vld [vmem:[#allocation11 + $0xd0] sm:$0xff]
    %v1312 = vld [vmem:[#allocation11 + $0xd8] sm:$0xff]
    %v1313 = vld [vmem:[#allocation11 + $0xe0] sm:$0xff]
    %v1314 = vld [vmem:[#allocation11 + $0xe8] sm:$0xff]
    %v1315 = vld [vmem:[#allocation11 + $0xf0] sm:$0xff]
    %v1316 = vld [vmem:[#allocation11 + $0xf8] sm:$0xff]
    %v1317 = vld [vmem:[#allocation11 + $0x100] sm:$0xff]
    %v1318 = vld [vmem:[#allocation11 + $0x108] sm:$0xff]
    %v1319 = vld [vmem:[#allocation11 + $0x110] sm:$0xff]
    %v1320 = vld [vmem:[#allocation11 + $0x118] sm:$0xff]
    %v1321 = vld [vmem:[#allocation11 + $0x120] sm:$0xff]
    %v1322 = vld [vmem:[#allocation11 + $0x128] sm:$0xff]
    %v1323 = vld [vmem:[#allocation11 + $0x130] sm:$0xff]
    %v1324 = vld [vmem:[#allocation11 + $0x138] sm:$0xff]
    %v1325 = vld [vmem:[#allocation11 + $0x140] sm:$0xff]
    %v1326 = vld [vmem:[#allocation11 + $0x148] sm:$0xff]
    %v1327 = vld [vmem:[#allocation11 + $0x150] sm:$0xff]
    %v1328 = vld [vmem:[#allocation11 + $0x158] sm:$0xff]
    %v1329 = vld [vmem:[#allocation11 + $0x160] sm:$0xff]
    %v1330 = vld [vmem:[#allocation11 + $0x168] sm:$0xff]
    %v1331 = vld [vmem:[#allocation11 + $0x170] sm:$0xff]
    %v1332 = vld [vmem:[#allocation11 + $0x178] sm:$0xff]
    %v1333 = vld [vmem:[#allocation11 + $0x180] sm:$0xff]
    %v1334 = vld [vmem:[#allocation11 + $0x188] sm:$0xff]
    %v1335 = vld [vmem:[#allocation11 + $0x190] sm:$0xff]
    %v1336 = vld [vmem:[#allocation11 + $0x198] sm:$0xff]
    %v1337 = vld [vmem:[#allocation11 + $0x1a0] sm:$0xff]
    %v1338 = vld [vmem:[#allocation11 + $0x1a8] sm:$0xff]
    %v1339 = vld [vmem:[#allocation11 + $0x1b0] sm:$0xff]
    %v1340 = vld [vmem:[#allocation11 + $0x1b8] sm:$0xff]
    %v1341 = vld [vmem:[#allocation11 + $0x1c0] sm:$0xff]
    %v1342 = vld [vmem:[#allocation11 + $0x1c8] sm:$0xff]
    %v1343 = vld [vmem:[#allocation11 + $0x1d0] sm:$0xff]
    %v1344 = vld [vmem:[#allocation11 + $0x1d8] sm:$0xff]
    %v1345 = vld [vmem:[#allocation11 + $0x1e0] sm:$0xff]
    %v1346 = vld [vmem:[#allocation11 + $0x1e8] sm:$0xff]
    %v1347 = vld [vmem:[#allocation11 + $0x1f0] sm:$0xff]
    %v1348 = vld [vmem:[#allocation11 + $0x1f8] sm:$0xff]
    %v1349 = vld [vmem:[#allocation11 + $0x200] sm:$0xff]
    %v1350 = vld [vmem:[#allocation11 + $0x208] sm:$0xff]
    %v1351 = vld [vmem:[#allocation11 + $0x210] sm:$0xff]
    %v1352 = vld [vmem:[#allocation11 + $0x218] sm:$0xff]
    %v1353 = vld [vmem:[#allocation11 + $0x220] sm:$0xff]
    %v1354 = vld [vmem:[#allocation11 + $0x228] sm:$0xff]
    %v1355 = vld [vmem:[#allocation11 + $0x230] sm:$0xff]
    %v1356 = vld [vmem:[#allocation11 + $0x238] sm:$0xff]
    %v1357 = vld [vmem:[#allocation11 + $0x240] sm:$0xff]
    %v1358 = vld [vmem:[#allocation11 + $0x248] sm:$0xff]
    %v1359 = vld [vmem:[#allocation11 + $0x250] sm:$0xff]
    %v1360 = vld [vmem:[#allocation11 + $0x258] sm:$0xff]
    %v1361 = vld [vmem:[#allocation11 + $0x260] sm:$0xff]
    %v1362 = vld [vmem:[#allocation11 + $0x268] sm:$0xff]
    %v1363 = vld [vmem:[#allocation11 + $0x270] sm:$0xff]
    %v1364 = vld [vmem:[#allocation11 + $0x278] sm:$0xff]
    %v1365 = vld [vmem:[#allocation11 + $0x280] sm:$0xff]
    %v1366 = vld [vmem:[#allocation11 + $0x288] sm:$0xff]
    %v1367 = vld [vmem:[#allocation11 + $0x290] sm:$0xff]
    %v1368 = vld [vmem:[#allocation11 + $0x298] sm:$0xff]
    %v1369 = vld [vmem:[#allocation11 + $0x2a0] sm:$0xff]
    %v1370 = vld [vmem:[#allocation11 + $0x2a8] sm:$0xff]
    %v1371 = vld [vmem:[#allocation11 + $0x2b0] sm:$0xff]
    %v1372 = vld [vmem:[#allocation11 + $0x2b8] sm:$0xff]
    %v1373 = vld [vmem:[#allocation11 + $0x2c0] sm:$0xff]
    %v1374 = vld [vmem:[#allocation11 + $0x2c8] sm:$0xff]
    %v1375 = vld [vmem:[#allocation11 + $0x2d0] sm:$0xff]
    %v1376 = vld [vmem:[#allocation11 + $0x2d8] sm:$0xff]
    %v1377 = vld [vmem:[#allocation11 + $0x2e0] sm:$0xff]
    %v1378 = vld [vmem:[#allocation11 + $0x2e8] sm:$0xff]
    %v1379 = vld [vmem:[#allocation11 + $0x2f0] sm:$0xff]
    %v1380 = vld [vmem:[#allocation11 + $0x2f8] sm:$0xff]
    %v1381 = vld [vmem:[#allocation11 + $0x300] sm:$0xff]
    %v1382 = vld [vmem:[#allocation11 + $0x308] sm:$0xff]
    %v1383 = vld [vmem:[#allocation11 + $0x310] sm:$0xff]
    %v1384 = vld [vmem:[#allocation11 + $0x318] sm:$0xff]
    %v1385 = vld [vmem:[#allocation11 + $0x320] sm:$0xff]
    %v1386 = vld [vmem:[#allocation11 + $0x328] sm:$0xff]
    %v1387 = vld [vmem:[#allocation11 + $0x330] sm:$0xff]
    %v1388 = vld [vmem:[#allocation11 + $0x338] sm:$0xff]
    %v1389 = vld [vmem:[#allocation11 + $0x340] sm:$0xff]
    %v1390 = vld [vmem:[#allocation11 + $0x348] sm:$0xff]
    %v1391 = vld [vmem:[#allocation11 + $0x350] sm:$0xff]
    %v1392 = vld [vmem:[#allocation11 + $0x358] sm:$0xff]
    %v1393 = vld [vmem:[#allocation11 + $0x360] sm:$0xff]
    %v1394 = vld [vmem:[#allocation11 + $0x368] sm:$0xff]
    %v1395 = vld [vmem:[#allocation11 + $0x370] sm:$0xff]
    %v1396 = vld [vmem:[#allocation11 + $0x378] sm:$0xff]
    %1397 = vmatprep.subr.mxu0 0.0
    %1398 = vmatpush1.msra.mxu0 %v1300
    %1399 = vmatprep.subr.mxu0 0.0
    %1400 = vmatpush1.msra.mxu0 %v1299
    %1401 = vmatprep.subr.mxu0 0.0
    %1402 = vmatpush1.msra.mxu0 %v1298
    %1403 = vmatprep.subr.mxu0 0.0
    %1404 = vmatpush1.msra.mxu0 %v1297
    %1405 = vmatprep.subr.mxu0 0.0
    %1406 = vmatpush1.msra.mxu0 %v1296
    %1407 = vmatprep.subr.mxu0 0.0
    %1408 = vmatpush1.msra.mxu0 %v1295
    %1409 = vmatprep.subr.mxu0 0.0
    %1410 = vmatpush1.msra.mxu0 %v1294
    %1411 = vmatprep.subr.mxu0 0.0
    %1412 = vmatpush1.msra.mxu0 %v1293
    %1413 = vmatprep.subr.mxu0 0.0
    %1414 = vmatpush1.msra.mxu0 %v1292
    %1415 = vmatprep.subr.mxu0 0.0
    %1416 = vmatpush1.msra.mxu0 %v1291
    %1417 = vmatprep.subr.mxu0 0.0
    %1418 = vmatpush1.msra.mxu0 %v1290
    %1419 = vmatprep.subr.mxu0 0.0
    %1420 = vmatpush1.msra.mxu0 %v1289
    %1421 = vmatprep.subr.mxu0 0.0
    %1422 = vmatpush1.msra.mxu0 %v1288
    %1423 = vmatprep.subr.mxu0 0.0
    %1424 = vmatpush1.msra.mxu0 %v1287
    %1425 = vmatprep.subr.mxu0 0.0
    %1426 = vmatpush1.msra.mxu0 %v1286
    %1427 = vmatprep.subr.mxu0 0.0
    %1428 = vmatpush1.msra.mxu0 %v1285
    %1429 = vmatprep.subr.mxu0 0.0
    %1430 = vmatpush2.msra.mxu0 %v1316
    %1431 = vmatprep.subr.mxu0 0.0
    %1432 = vmatpush2.msra.mxu0 %v1315
    %1433 = vmatprep.subr.mxu0 0.0
    %1434 = vmatpush2.msra.mxu0 %v1314
    %1435 = vmatprep.subr.mxu0 0.0
    %1436 = vmatpush2.msra.mxu0 %v1313
    %1437 = vmatprep.subr.mxu0 0.0
    %1438 = vmatpush2.msra.mxu0 %v1312
    %1439 = vmatprep.subr.mxu0 0.0
    %1440 = vmatpush2.msra.mxu0 %v1311
    %1441 = vmatprep.subr.mxu0 0.0
    %1442 = vmatpush2.msra.mxu0 %v1310
    %1443 = vmatprep.subr.mxu0 0.0
    %1444 = vmatpush2.msra.mxu0 %v1309
    %1445 = vmatprep.subr.mxu0 0.0
    %1446 = vmatpush2.msra.mxu0 %v1308
    %1447 = vmatprep.subr.mxu0 0.0
    %1448 = vmatpush2.msra.mxu0 %v1307
    %1449 = vmatprep.subr.mxu0 0.0
    %1450 = vmatpush2.msra.mxu0 %v1306
    %1451 = vmatprep.subr.mxu0 0.0
    %1452 = vmatpush2.msra.mxu0 %v1305
    %1453 = vmatprep.subr.mxu0 0.0
    %1454 = vmatpush2.msra.mxu0 %v1304
    %1455 = vmatprep.subr.mxu0 0.0
    %1456 = vmatpush2.msra.mxu0 %v1303
    %1457 = vmatprep.subr.mxu0 0.0
    %1458 = vmatpush2.msra.mxu0 %v1302
    %1459 = vmatprep.subr.mxu0 0.0
    %1460 = vmatpush2.msra.mxu0 %v1301
    %1461 = vmatprep.mubr.f32.mxu0 %v963
    %1462 = vmatmul.mubr.f32.gmra.mxu0 %v962
    %v1463 = vpop.f32.mrf.mxu0
    %v1464 = vadd.f32 0.0, %v1463
    %v1465 = vpop.f32.mrf.mxu0
    %1466 = vdwg.mxu0
    %1467 = vmatprep.subr.mxu0 0.0
    %1468 = vmatpush1.msra.mxu0 %v1332
    %1469 = vmatprep.subr.mxu0 0.0
    %1470 = vmatpush1.msra.mxu0 %v1331
    %1471 = vmatprep.subr.mxu0 0.0
    %1472 = vmatpush1.msra.mxu0 %v1330
    %1473 = vmatprep.subr.mxu0 0.0
    %1474 = vmatpush1.msra.mxu0 %v1329
    %1475 = vmatprep.subr.mxu0 0.0
    %1476 = vmatpush1.msra.mxu0 %v1328
    %1477 = vmatprep.subr.mxu0 0.0
    %1478 = vmatpush1.msra.mxu0 %v1327
    %1479 = vmatprep.subr.mxu0 0.0
    %1480 = vmatpush1.msra.mxu0 %v1326
    %1481 = vmatprep.subr.mxu0 0.0
    %1482 = vmatpush1.msra.mxu0 %v1325
    %1483 = vmatprep.subr.mxu0 0.0
    %1484 = vmatpush1.msra.mxu0 %v1324
    %1485 = vmatprep.subr.mxu0 0.0
    %1486 = vmatpush1.msra.mxu0 %v1323
    %1487 = vmatprep.subr.mxu0 0.0
    %1488 = vmatpush1.msra.mxu0 %v1322
    %1489 = vmatprep.subr.mxu0 0.0
    %1490 = vmatpush1.msra.mxu0 %v1321
    %1491 = vmatprep.subr.mxu0 0.0
    %1492 = vmatpush1.msra.mxu0 %v1320
    %1493 = vmatprep.subr.mxu0 0.0
    %1494 = vmatpush1.msra.mxu0 %v1319
    %1495 = vmatprep.subr.mxu0 0.0
    %1496 = vmatpush1.msra.mxu0 %v1318
    %1497 = vmatprep.subr.mxu0 0.0
    %1498 = vmatpush1.msra.mxu0 %v1317
    %1499 = vmatprep.subr.mxu0 0.0
    %1500 = vmatpush2.msra.mxu0 %v1348
    %1501 = vmatprep.subr.mxu0 0.0
    %1502 = vmatpush2.msra.mxu0 %v1347
    %1503 = vmatprep.subr.mxu0 0.0
    %1504 = vmatpush2.msra.mxu0 %v1346
    %1505 = vmatprep.subr.mxu0 0.0
    %1506 = vmatpush2.msra.mxu0 %v1345
    %1507 = vmatprep.subr.mxu0 0.0
    %1508 = vmatpush2.msra.mxu0 %v1344
    %1509 = vmatprep.subr.mxu0 0.0
    %1510 = vmatpush2.msra.mxu0 %v1343
    %1511 = vmatprep.subr.mxu0 0.0
    %1512 = vmatpush2.msra.mxu0 %v1342
    %1513 = vmatprep.subr.mxu0 0.0
    %1514 = vmatpush2.msra.mxu0 %v1341
    %1515 = vmatprep.subr.mxu0 0.0
    %1516 = vmatpush2.msra.mxu0 %v1340
    %1517 = vmatprep.subr.mxu0 0.0
    %1518 = vmatpush2.msra.mxu0 %v1339
    %1519 = vmatprep.subr.mxu0 0.0
    %1520 = vmatpush2.msra.mxu0 %v1338
    %1521 = vmatprep.subr.mxu0 0.0
    %1522 = vmatpush2.msra.mxu0 %v1337
    %1523 = vmatprep.subr.mxu0 0.0
    %1524 = vmatpush2.msra.mxu0 %v1336
    %1525 = vmatprep.subr.mxu0 0.0
    %1526 = vmatpush2.msra.mxu0 %v1335
    %1527 = vmatprep.subr.mxu0 0.0
    %1528 = vmatpush2.msra.mxu0 %v1334
    %1529 = vmatprep.subr.mxu0 0.0
    %1530 = vmatpush2.msra.mxu0 %v1333
    %1531 = vmatprep.mubr.f32.mxu0 %v965
    %1532 = vmatmul.mubr.f32.gmra.mxu0 %v964
    %v1533 = vpop.f32.mrf.mxu0
    %v1534 = vadd.f32 %v1464, %v1533
    %v1535 = vpop.f32.mrf.mxu0
    %1536 = vdwg.mxu0
    %1537 = vmatprep.subr.mxu0 0.0
    %1538 = vmatpush1.msra.mxu0 %v1364
    %1539 = vmatprep.subr.mxu0 0.0
    %1540 = vmatpush1.msra.mxu0 %v1363
    %1541 = vmatprep.subr.mxu0 0.0
    %1542 = vmatpush1.msra.mxu0 %v1362
    %1543 = vmatprep.subr.mxu0 0.0
    %1544 = vmatpush1.msra.mxu0 %v1361
    %1545 = vmatprep.subr.mxu0 0.0
    %1546 = vmatpush1.msra.mxu0 %v1360
    %1547 = vmatprep.subr.mxu0 0.0
    %1548 = vmatpush1.msra.mxu0 %v1359
    %1549 = vmatprep.subr.mxu0 0.0
    %1550 = vmatpush1.msra.mxu0 %v1358
    %1551 = vmatprep.subr.mxu0 0.0
    %1552 = vmatpush1.msra.mxu0 %v1357
    %1553 = vmatprep.subr.mxu0 0.0
    %1554 = vmatpush1.msra.mxu0 %v1356
    %1555 = vmatprep.subr.mxu0 0.0
    %1556 = vmatpush1.msra.mxu0 %v1355
    %1557 = vmatprep.subr.mxu0 0.0
    %1558 = vmatpush1.msra.mxu0 %v1354
    %1559 = vmatprep.subr.mxu0 0.0
    %1560 = vmatpush1.msra.mxu0 %v1353
    %1561 = vmatprep.subr.mxu0 0.0
    %1562 = vmatpush1.msra.mxu0 %v1352
    %1563 = vmatprep.subr.mxu0 0.0
    %1564 = vmatpush1.msra.mxu0 %v1351
    %1565 = vmatprep.subr.mxu0 0.0
    %1566 = vmatpush1.msra.mxu0 %v1350
    %1567 = vmatprep.subr.mxu0 0.0
    %1568 = vmatpush1.msra.mxu0 %v1349
    %1569 = vmatprep.subr.mxu0 0.0
    %1570 = vmatpush2.msra.mxu0 %v1380
    %1571 = vmatprep.subr.mxu0 0.0
    %1572 = vmatpush2.msra.mxu0 %v1379
    %1573 = vmatprep.subr.mxu0 0.0
    %1574 = vmatpush2.msra.mxu0 %v1378
    %1575 = vmatprep.subr.mxu0 0.0
    %1576 = vmatpush2.msra.mxu0 %v1377
    %1577 = vmatprep.subr.mxu0 0.0
    %1578 = vmatpush2.msra.mxu0 %v1376
    %1579 = vmatprep.subr.mxu0 0.0
    %1580 = vmatpush2.msra.mxu0 %v1375
    %1581 = vmatprep.subr.mxu0 0.0
    %1582 = vmatpush2.msra.mxu0 %v1374
    %1583 = vmatprep.subr.mxu0 0.0
    %1584 = vmatpush2.msra.mxu0 %v1373
    %1585 = vmatprep.subr.mxu0 0.0
    %1586 = vmatpush2.msra.mxu0 %v1372
    %1587 = vmatprep.subr.mxu0 0.0
    %1588 = vmatpush2.msra.mxu0 %v1371
    %1589 = vmatprep.subr.mxu0 0.0
    %1590 = vmatpush2.msra.mxu0 %v1370
    %1591 = vmatprep.subr.mxu0 0.0
    %1592 = vmatpush2.msra.mxu0 %v1369
    %1593 = vmatprep.subr.mxu0 0.0
    %1594 = vmatpush2.msra.mxu0 %v1368
    %1595 = vmatprep.subr.mxu0 0.0
    %1596 = vmatpush2.msra.mxu0 %v1367
    %1597 = vmatprep.subr.mxu0 0.0
    %1598 = vmatpush2.msra.mxu0 %v1366
    %1599 = vmatprep.subr.mxu0 0.0
    %1600 = vmatpush2.msra.mxu0 %v1365
    %1601 = vmatprep.mubr.f32.mxu0 %v967
    %1602 = vmatmul.mubr.f32.gmra.mxu0 %v966
    %v1603 = vpop.f32.mrf.mxu0
    %v1604 = vadd.f32 %v1534, %v1603
    %v1605 = vpop.f32.mrf.mxu0
    %1606 = vdwg.mxu0
    %1607 = vmatprep.subr.mxu0 0.0
    %1608 = vmatpush1.msra.mxu0 %v1396
    %1609 = vmatprep.subr.mxu0 0.0
    %1610 = vmatpush1.msra.mxu0 %v1395
    %1611 = vmatprep.subr.mxu0 0.0
    %1612 = vmatpush1.msra.mxu0 %v1394
    %1613 = vmatprep.subr.mxu0 0.0
    %1614 = vmatpush1.msra.mxu0 %v1393
    %1615 = vmatprep.subr.mxu0 0.0
    %1616 = vmatpush1.msra.mxu0 %v1392
    %1617 = vmatprep.subr.mxu0 0.0
    %1618 = vmatpush1.msra.mxu0 %v1391
    %1619 = vmatprep.subr.mxu0 0.0
    %1620 = vmatpush1.msra.mxu0 %v1390
    %1621 = vmatprep.subr.mxu0 0.0
    %1622 = vmatpush1.msra.mxu0 %v1389
    %1623 = vmatprep.subr.mxu0 0.0
    %1624 = vmatpush1.msra.mxu0 %v1388
    %1625 = vmatprep.subr.mxu0 0.0
    %1626 = vmatpush1.msra.mxu0 %v1387
    %1627 = vmatprep.subr.mxu0 0.0
    %1628 = vmatpush1.msra.mxu0 %v1386
    %1629 = vmatprep.subr.mxu0 0.0
    %1630 = vmatpush1.msra.mxu0 %v1385
    %1631 = vmatprep.subr.mxu0 0.0
    %1632 = vmatpush1.msra.mxu0 %v1384
    %1633 = vmatprep.subr.mxu0 0.0
    %1634 = vmatpush1.msra.mxu0 %v1383
    %1635 = vmatprep.subr.mxu0 0.0
    %1636 = vmatpush1.msra.mxu0 %v1382
    %1637 = vmatprep.subr.mxu0 0.0
    %1638 = vmatpush1.msra.mxu0 %v1381
    %1639 = vmatprep.subr.mxu0 0.0
    %1640 = vmatpush2.msra.mxu0 0.0
    %1641 = vmatprep.subr.mxu0 0.0
    %1642 = vmatpush2.msra.mxu0 0.0
    %1643 = vmatprep.subr.mxu0 0.0
    %1644 = vmatpush2.msra.mxu0 0.0
    %1645 = vmatprep.subr.mxu0 0.0
    %1646 = vmatpush2.msra.mxu0 0.0
    %1647 = vmatprep.subr.mxu0 0.0
    %1648 = vmatpush2.msra.mxu0 0.0
    %1649 = vmatprep.subr.mxu0 0.0
    %1650 = vmatpush2.msra.mxu0 0.0
    %1651 = vmatprep.subr.mxu0 0.0
    %1652 = vmatpush2.msra.mxu0 0.0
    %1653 = vmatprep.subr.mxu0 0.0
    %1654 = vmatpush2.msra.mxu0 0.0
    %1655 = vmatprep.subr.mxu0 0.0
    %1656 = vmatpush2.msra.mxu0 0.0
    %1657 = vmatprep.subr.mxu0 0.0
    %1658 = vmatpush2.msra.mxu0 0.0
    %1659 = vmatprep.subr.mxu0 0.0
    %1660 = vmatpush2.msra.mxu0 0.0
    %1661 = vmatprep.subr.mxu0 0.0
    %1662 = vmatpush2.msra.mxu0 0.0
    %1663 = vmatprep.subr.mxu0 0.0
    %1664 = vmatpush2.msra.mxu0 0.0
    %1665 = vmatprep.subr.mxu0 0.0
    %1666 = vmatpush2.msra.mxu0 0.0
    %1667 = vmatprep.subr.mxu0 0.0
    %1668 = vmatpush2.msra.mxu0 0.0
    %1669 = vmatprep.subr.mxu0 0.0
    %1670 = vmatpush2.msra.mxu0 0.0
    %1671 = vmatprep.mubr.f32.mxu0 0.0
    %1672 = vmatmul.mubr.f32.gmra.mxu0 %v968
    %v1673 = vpop.f32.mrf.mxu0
    %v1674 = vadd.f32 %v1604, %v1673
    %v1675 = vpop.f32.mrf.mxu0
    %1676 = vdwg.mxu0
    %1677 = vmatprep.subr.mxu0 0.0
    %1678 = vmatpush1.msra.mxu0 %v1268
    %1679 = vmatprep.subr.mxu0 0.0
    %1680 = vmatpush1.msra.mxu0 %v1267
    %1681 = vmatprep.subr.mxu0 0.0
    %1682 = vmatpush1.msra.mxu0 %v1266
    %1683 = vmatprep.subr.mxu0 0.0
    %1684 = vmatpush1.msra.mxu0 %v1265
    %1685 = vmatprep.subr.mxu0 0.0
    %1686 = vmatpush1.msra.mxu0 %v1264
    %1687 = vmatprep.subr.mxu0 0.0
    %1688 = vmatpush1.msra.mxu0 %v1263
    %1689 = vmatprep.subr.mxu0 0.0
    %1690 = vmatpush1.msra.mxu0 %v1262
    %1691 = vmatprep.subr.mxu0 0.0
    %1692 = vmatpush1.msra.mxu0 %v1261
    %1693 = vmatprep.subr.mxu0 0.0
    %1694 = vmatpush1.msra.mxu0 %v1260
    %1695 = vmatprep.subr.mxu0 0.0
    %1696 = vmatpush1.msra.mxu0 %v1259
    %1697 = vmatprep.subr.mxu0 0.0
    %1698 = vmatpush1.msra.mxu0 %v1258
    %1699 = vmatprep.subr.mxu0 0.0
    %1700 = vmatpush1.msra.mxu0 %v1257
    %1701 = vmatprep.subr.mxu0 0.0
    %1702 = vmatpush1.msra.mxu0 %v1256
    %1703 = vmatprep.subr.mxu0 0.0
    %1704 = vmatpush1.msra.mxu0 %v1255
    %1705 = vmatprep.subr.mxu0 0.0
    %1706 = vmatpush1.msra.mxu0 %v1254
    %1707 = vmatprep.subr.mxu0 0.0
    %1708 = vmatpush1.msra.mxu0 %v1253
    %1709 = vmatprep.subr.mxu0 0.0
    %1710 = vmatpush2.msra.mxu0 %v1284
    %1711 = vmatprep.subr.mxu0 0.0
    %1712 = vmatpush2.msra.mxu0 %v1283
    %1713 = vmatprep.subr.mxu0 0.0
    %1714 = vmatpush2.msra.mxu0 %v1282
    %1715 = vmatprep.subr.mxu0 0.0
    %1716 = vmatpush2.msra.mxu0 %v1281
    %1717 = vmatprep.subr.mxu0 0.0
    %1718 = vmatpush2.msra.mxu0 %v1280
    %1719 = vmatprep.subr.mxu0 0.0
    %1720 = vmatpush2.msra.mxu0 %v1279
    %1721 = vmatprep.subr.mxu0 0.0
    %1722 = vmatpush2.msra.mxu0 %v1278
    %1723 = vmatprep.subr.mxu0 0.0
    %1724 = vmatpush2.msra.mxu0 %v1277
    %1725 = vmatprep.subr.mxu0 0.0
    %1726 = vmatpush2.msra.mxu0 %v1276
    %1727 = vmatprep.subr.mxu0 0.0
    %1728 = vmatpush2.msra.mxu0 %v1275
    %1729 = vmatprep.subr.mxu0 0.0
    %1730 = vmatpush2.msra.mxu0 %v1274
    %1731 = vmatprep.subr.mxu0 0.0
    %1732 = vmatpush2.msra.mxu0 %v1273
    %1733 = vmatprep.subr.mxu0 0.0
    %1734 = vmatpush2.msra.mxu0 %v1272
    %1735 = vmatprep.subr.mxu0 0.0
    %1736 = vmatpush2.msra.mxu0 %v1271
    %1737 = vmatprep.subr.mxu0 0.0
    %1738 = vmatpush2.msra.mxu0 %v1270
    %1739 = vmatprep.subr.mxu0 0.0
    %1740 = vmatpush2.msra.mxu0 %v1269
    %1741 = vmatprep.mubr.f32.mxu0 %v1252
    %1742 = vmatmul.mubr.f32.gmra.mxu0 %v1251
    %v1743 = vpop.f32.mrf.mxu0
    %v1744 = vadd.f32 %v1674, %v1743
    %v1745 = vpop.f32.mrf.mxu0
    %1746 = vdwg.mxu0
    %v1747 = vld [vmem:[%s7] sm:$0x1]
    %v1749 = vlaneseq
    %v1750 = vshrl.u32 %v1749, 7
    %v1751 = vsub.s32 0, %v1750
    %v1752 = vrot.slane %v1747, %v1751
    %v1754 = vadd.f32 %v1744, %v1752
    %v1755 = vxor.u32 %v1754, 2147483648
    %v1756 = vmul.f32 %v1755, 1.442695
    %v1757 = vpow.pop %v1756
    %v1758 = vadd.f32 %v1757, 1.0
    %v1759 = vrcp.pop %v1758
    %v1760 = vmul.f32 1.0, %v1759
    %1761 = vst [vmem:[#allocation13] sm:$0xff] %v1760
    // Predicated region
    $region58: #{tpu_custom_call.1} parent=1 // pred_check
      _
    $region59: #{tpu_custom_call.1} parent=1 // pred_check_branch
      %1763 = sbr.rel (0) target = $region61
    $region60: #{tpu_custom_call.1} parent=1 // pred_region
      %s1765 = ssub.s32 128, 128
      %1766 = vsyncadd [#allocation4], %s1765
      %s1768 = sshll.u32 [#allocation13], 4
      %s1769 = int_to_ptr.vmem [resolvable:$true] %s1768
      %1771 = dma.vmem_to_hbm [thread:$0]  %s1769, 128, %s8, [#allocation4]
    $region61: #{tpu_custom_call.1} parent=1 // pred_fallthru
      _
    // Predicated region
    $region62: #{tpu_custom_call.1} parent=1 // pred_check
      _
    $region63: #{tpu_custom_call.1} parent=1 // pred_check_branch
      %1773 = sbr.rel (0) target = $region65
    $region64: #{tpu_custom_call.1} parent=1 // pred_region
      %1774 = dma.done [#allocation4], 128
    $region65: #{tpu_custom_call.1} parent=1 // pred_fallthru
      _
    %1775 = vsyncpa [#allocation3], 1
    %1776 = vsyncpa [#allocation6], 1
    %1777 = vsyncpa [#allocation9], 1
    %1778 = vsyncpa [#allocation12], 1
    %1779 = vsyncpa [#allocation4], 1

</llo_original>
